<compile_context>
chip_gen: v7x
topology: tpu7x:2x2x1
jax: 0.10.0
libtpu: 0.0.40
codegen_flags: <defaults>
</compile_context>

<pallas_src>
import jax
import jax.numpy as jnp
from jax.experimental import pallas as pl
from jax.experimental.pallas import tpu as pltpu


def _round_up(x, m):
    return (x + m - 1) // m * m


_VMEM_LIMIT = 32 * 1024 * 1024  # explicit scoped-VMEM budget (safe on v5e/v6e/v7x)


# ---------------------------------------------------------------------------
# Pallas kernels
# ---------------------------------------------------------------------------
def _conv_bn_relu_pool_kernel(p0_ref, p1_ref, p2_ref, p3_ref,
                              w_ref, s_ref, b_ref, o_ref):
    """Fused conv(as matmul) + BN(eval) + ReLU + 2x2 max-pool.

    p{k}: (TM, K) bf16 im2col patches of the k-th pooling sub-grid.
    w:    (K, N)  bf16 conv weight matrix.
    s, b: (1, N)  f32 folded BatchNorm scale / shift.
    out:  (TM, N) f32 pooled feature map rows.
    """
    w = w_ref[...]
    s = s_ref[...]
    b = b_ref[...]

    def branch(p_ref):
        acc = jnp.dot(p_ref[...], w, preferred_element_type=jnp.float32)
        return jnp.maximum(acc * s + b, 0.0)

    out = jnp.maximum(jnp.maximum(branch(p0_ref), branch(p1_ref)),
                      jnp.maximum(branch(p2_ref), branch(p3_ref)))
    o_ref[...] = out.astype(o_ref.dtype)


def _fc_chain_kernel(x_ref, w1_ref, b1_ref, w2_ref, b2_ref, w3_ref, b3_ref,
                     o_ref):
    """relu(x@W1+b1) -> relu(@W2+b2) -> @W3+b3, all weights VMEM-resident."""
    h = jnp.dot(x_ref[...], w1_ref[...], preferred_element_type=jnp.float32)
    h = jnp.maximum(h + b1_ref[...], 0.0)
    h = jnp.dot(h.astype(jnp.bfloat16), w2_ref[...],
                preferred_element_type=jnp.float32)
    h = jnp.maximum(h + b2_ref[...], 0.0)
    o = jnp.dot(h.astype(jnp.bfloat16), w3_ref[...],
                preferred_element_type=jnp.float32)
    o_ref[...] = (o + b3_ref[...]).astype(o_ref.dtype)


# ---------------------------------------------------------------------------
# Pallas wrappers
# ---------------------------------------------------------------------------
def conv_bn_relu_pool(patches4, w_mat, scale, shift, *, tm=1024):
    """patches4: list of 4 (M, K) arrays (one per 2x2 pool sub-grid).
    Returns the pooled feature rows (M, N) in f32."""
    M, K = patches4[0].shape
    N = w_mat.shape[1]

    TM = min(tm, _round_up(M, 8))          # multiple of 8 sublanes
    Mpad = _round_up(M, TM)

    patches4 = [p.astype(jnp.bfloat16) for p in patches4]
    if Mpad != M:
        patches4 = [jnp.pad(p, ((0, Mpad - M), (0, 0))) for p in patches4]
    w_bf16 = w_mat.astype(jnp.bfloat16)
    s2 = scale.reshape(1, N).astype(jnp.float32)
    b2 = shift.reshape(1, N).astype(jnp.float32)

    out = pl.pallas_call(
        _conv_bn_relu_pool_kernel,
        out_shape=jax.ShapeDtypeStruct((Mpad, N), jnp.float32),
        grid=(Mpad // TM,),
        in_specs=(
            [pl.BlockSpec((TM, K), lambda m: (m, 0)) for _ in range(4)]
            + [pl.BlockSpec((K, N), lambda m: (0, 0)),
               pl.BlockSpec((1, N), lambda m: (0, 0)),
               pl.BlockSpec((1, N), lambda m: (0, 0))]
        ),
        out_specs=pl.BlockSpec((TM, N), lambda m: (m, 0)),
        compiler_params=pltpu.CompilerParams(
            dimension_semantics=("parallel",),
            vmem_limit_bytes=_VMEM_LIMIT,
        ),
    )(*patches4, w_bf16, s2, b2)
    return out[:M] if Mpad != M else out


def fc_chain(x, w1, b1, w2, b2, w3, b3, *, tb=256):
    """Fused fc1+ReLU+fc2+ReLU+fc3; weights (in->out layout) kept in VMEM."""
    B, K = x.shape
    N1, N2, N3 = w1.shape[1], w2.shape[1], w3.shape[1]

    TB = min(tb, _round_up(B, 8))
    Bpad = _round_up(B, TB)

    xb = x.astype(jnp.bfloat16)
    if Bpad != B:
        xb = jnp.pad(xb, ((0, Bpad - B), (0, 0)))

    out = pl.pallas_call(
        _fc_chain_kernel,
        out_shape=jax.ShapeDtypeStruct((Bpad, N3), jnp.float32),
        grid=(Bpad // TB,),
        in_specs=[
            pl.BlockSpec((TB, K), lambda m: (m, 0)),
            pl.BlockSpec((K, N1), lambda m: (0, 0)),
            pl.BlockSpec((1, N1), lambda m: (0, 0)),
            pl.BlockSpec((N1, N2), lambda m: (0, 0)),
            pl.BlockSpec((1, N2), lambda m: (0, 0)),
            pl.BlockSpec((N2, N3), lambda m: (0, 0)),
            pl.BlockSpec((1, N3), lambda m: (0, 0)),
        ],
        out_specs=pl.BlockSpec((TB, N3), lambda m: (m, 0)),
        compiler_params=pltpu.CompilerParams(
            dimension_semantics=("parallel",),
            vmem_limit_bytes=_VMEM_LIMIT,
        ),
    )(xb,
      w1.astype(jnp.bfloat16), b1.reshape(1, N1).astype(jnp.float32),
      w2.astype(jnp.bfloat16), b2.reshape(1, N2).astype(jnp.float32),
      w3.astype(jnp.bfloat16), b3.reshape(1, N3).astype(jnp.float32))
    return out[:B] if Bpad != B else out


# ---------------------------------------------------------------------------
# Glue: pooled im2col + parameter setup
# ---------------------------------------------------------------------------
def im2col_pooled(x, kh, kw, di, dj):
    """Patches of the (di, dj) sub-grid of a VALID conv followed by 2x2/s2 pool.

    x: (B, H, W, C) NHWC.  Returns (B, Hp, Wp, kh*kw*C) where Hp = (H-kh+1)//2,
    patch channel index = (i*kw + j)*C + c  (matches conv_weight_to_mat).
    """
    B, H, W, C = x.shape
    Hp, Wp = (H - kh + 1) // 2, (W - kw + 1) // 2   # floor == MaxPool2d(2,2)
    cols = []
    for i in range(kh):
        for j in range(kw):
            cols.append(x[:, di + i: di + i + 2 * Hp: 2,
                            dj + j: dj + j + 2 * Wp: 2, :])
    return jnp.concatenate(cols, axis=-1)


def conv_weight_to_mat(w_oihw):
    """torch conv weight (O, C, KH, KW) -> (KH*KW*C, O) matching im2col order."""
    O, C, KH, KW = w_oihw.shape
    return jnp.transpose(w_oihw, (2, 3, 1, 0)).reshape(KH * KW * C, O)


def _bn_fuse(conv_bias, gamma, beta, mean, var, eps=1e-5):
    """Fold conv bias + eval-mode BatchNorm into per-channel (scale, shift)."""
    s = gamma / jnp.sqrt(var + eps)
    shift = (conv_bias - mean) * s + beta
    return s, shift


def init_params():
    key = jax.random.PRNGKey(0)
    ks = jax.random.split(key, 20)
    n = lambda k, shape, s=0.05: s * jax.random.normal(k, shape, jnp.float32)

    p = {}
    # conv1: Conv2d(3, 6, 5), BatchNorm2d(6)
    p["conv1_w"] = n(ks[0], (6, 3, 5, 5))
    p["conv1_b"] = n(ks[1], (6,))
    p["bn1_gamma"] = 1.0 + n(ks[2], (6,), 0.1)
    p["bn1_beta"] = n(ks[3], (6,), 0.1)
    p["bn1_mean"] = n(ks[4], (6,), 0.1)
    p["bn1_var"] = 1.0 + jnp.abs(n(ks[5], (6,), 0.1))
    # conv2: Conv2d(6, 16, 5), BatchNorm2d(16)
    p["conv2_w"] = n(ks[6], (16, 6, 5, 5))
    p["conv2_b"] = n(ks[7], (16,))
    p["bn2_gamma"] = 1.0 + n(ks[8], (16,), 0.1)
    p["bn2_beta"] = n(ks[9], (16,), 0.1)
    p["bn2_mean"] = n(ks[10], (16,), 0.1)
    p["bn2_var"] = 1.0 + jnp.abs(n(ks[11], (16,), 0.1))
    # fc layers (torch Linear stores (out, in))
    p["fc1_w"] = n(ks[12], (500, 400))
    p["fc1_b"] = n(ks[13], (500,))
    p["fc2_w"] = n(ks[14], (300, 500))
    p["fc2_b"] = n(ks[15], (300,))
    p["fc3_w"] = n(ks[16], (100, 300))
    p["fc3_b"] = n(ks[17], (100,))
    return p


# ---------------------------------------------------------------------------
# Forward pass (matches the PyTorch CNN.forward in eval mode)
# ---------------------------------------------------------------------------
def cnn_forward(x_nchw, p):
    x = jnp.transpose(x_nchw, (0, 2, 3, 1)).astype(jnp.float32)  # -> NHWC
    B = x.shape[0]

    # --- conv1 + bn1 + relu + pool1 (one fused Pallas kernel) --------------
    s1, sh1 = _bn_fuse(p["conv1_b"], p["bn1_gamma"], p["bn1_beta"],
                       p["bn1_mean"], p["bn1_var"])
    Hp1 = (x.shape[1] - 5 + 1) // 2
    Wp1 = (x.shape[2] - 5 + 1) // 2                               # 14, 14
    pls = [im2col_pooled(x, 5, 5, di, dj).reshape(B * Hp1 * Wp1, -1)
           for di in (0, 1) for dj in (0, 1)]
    y = conv_bn_relu_pool(pls, conv_weight_to_mat(p["conv1_w"]), s1, sh1)
    y = y.reshape(B, Hp1, Wp1, 6)                                 # (B,14,14,6)
    # dropout(0.2): identity at inference

    # --- conv2 + bn2 + relu + pool2 (one fused Pallas kernel) --------------
    s2, sh2 = _bn_fuse(p["conv2_b"], p["bn2_gamma"], p["bn2_beta"],
                       p["bn2_mean"], p["bn2_var"])
    Hp2 = (Hp1 - 5 + 1) // 2
    Wp2 = (Wp1 - 5 + 1) // 2                                      # 5, 5
    pls = [im2col_pooled(y, 5, 5, di, dj).reshape(B * Hp2 * Wp2, -1)
           for di in (0, 1) for dj in (0, 1)]
    y = conv_bn_relu_pool(pls, conv_weight_to_mat(p["conv2_w"]), s2, sh2)
    y = y.reshape(B, Hp2, Wp2, 16)                                # (B,5,5,16)
    # dropout(0.2): identity at inference

    # --- flatten in PyTorch NCHW order, then fused fc1/fc2/fc3 -------------
    flat = jnp.transpose(y, (0, 3, 1, 2)).reshape(B, 16 * Hp2 * Wp2)  # (B,400)
    out = fc_chain(flat,
                   p["fc1_w"].T, p["fc1_b"],
                   p["fc2_w"].T, p["fc2_b"],
                   p["fc3_w"].T, p["fc3_b"])
    return out                                                    # (B, 100)


if __name__ == "__main__":
    params = init_params()
    # CIFAR-sized input: spatial must be 32 so the flatten is 16*5*5 = 400.
    x = jax.random.normal(jax.random.PRNGKey(0), (2, 3, 32, 32), jnp.float32)
    fwd = jax.jit(lambda xx: cnn_forward(xx, params))
    logits = fwd(x)
    jax.block_until_ready(logits)
    assert logits.shape == (2, 100)
    print("KERNEL_OK")
</pallas_src>

<mosaic_0001>
module attributes {stable_mosaic.version = 11 : i64} {
  func.func @_conv_bn_relu_pool_kernel(%arg0: i32, %arg1: memref<392x75xbf16, #tpu.memory_space<vmem>>, %arg2: memref<392x75xbf16, #tpu.memory_space<vmem>>, %arg3: memref<392x75xbf16, #tpu.memory_space<vmem>>, %arg4: memref<392x75xbf16, #tpu.memory_space<vmem>>, %arg5: memref<75x6xbf16, #tpu.memory_space<vmem>>, %arg6: memref<1x6xf32, #tpu.memory_space<vmem>>, %arg7: memref<1x6xf32, #tpu.memory_space<vmem>>, %arg8: memref<392x6xf32, #tpu.memory_space<vmem>>) attributes {dimension_semantics = [#tpu.dimension_semantics<parallel>], iteration_bounds = array<i64: 1>, scalar_prefetch = 0 : i64, scratch_operands = 0 : i64, tpu.core_type = #tpu.core_type<tc>, window_params = [{transform_indices = @transform_0, window_bounds = array<i64: 392, 75>}, {transform_indices = @transform_1, window_bounds = array<i64: 392, 75>}, {transform_indices = @transform_2, window_bounds = array<i64: 392, 75>}, {transform_indices = @transform_3, window_bounds = array<i64: 392, 75>}, {pipeline_mode = #tpu.pipeline_mode<synchronous>, transform_indices = @transform_4, window_bounds = array<i64: 75, 6>}, {pipeline_mode = #tpu.pipeline_mode<synchronous>, transform_indices = @transform_5, window_bounds = array<i64: 1, 6>}, {pipeline_mode = #tpu.pipeline_mode<synchronous>, transform_indices = @transform_6, window_bounds = array<i64: 1, 6>}, {transform_indices = @transform_7, window_bounds = array<i64: 392, 6>}]} {
    %c0 = arith.constant 0 : index
    %c0_0 = arith.constant 0 : index
    %0 = vector.load %arg5[%c0, %c0_0] : memref<75x6xbf16, #tpu.memory_space<vmem>>, vector<75x6xbf16>
    %c0_1 = arith.constant 0 : index
    %c0_2 = arith.constant 0 : index
    %1 = vector.load %arg6[%c0_1, %c0_2] : memref<1x6xf32, #tpu.memory_space<vmem>>, vector<1x6xf32>
    %c0_3 = arith.constant 0 : index
    %c0_4 = arith.constant 0 : index
    %2 = vector.load %arg7[%c0_3, %c0_4] : memref<1x6xf32, #tpu.memory_space<vmem>>, vector<1x6xf32>
    %c0_5 = arith.constant 0 : index
    %c0_6 = arith.constant 0 : index
    %3 = vector.load %arg1[%c0_5, %c0_6] : memref<392x75xbf16, #tpu.memory_space<vmem>>, vector<392x75xbf16>
    %cst = arith.constant dense<0.000000e+00> : vector<392x6xf32>
    %4 = tpu.matmul %3, %0, %cst {dimension_numbers = #tpu.dot_dimension_numbers<[1], [0], [0], [1], [0, 0, 1, 1], [], []>} : vector<392x75xbf16>, vector<75x6xbf16>, vector<392x6xf32> -> vector<392x6xf32>
    %5 = vector.broadcast %1 : vector<1x6xf32> to vector<392x6xf32>
    %6 = arith.mulf %4, %5 : vector<392x6xf32>
    %7 = vector.broadcast %2 : vector<1x6xf32> to vector<392x6xf32>
    %8 = arith.addf %6, %7 : vector<392x6xf32>
    %cst_7 = arith.constant 0.000000e+00 : f32
    %9 = vector.broadcast %cst_7 : f32 to vector<392x6xf32>
    %10 = arith.maximumf %8, %9 : vector<392x6xf32>
    %c0_8 = arith.constant 0 : index
    %c0_9 = arith.constant 0 : index
    %11 = vector.load %arg2[%c0_8, %c0_9] : memref<392x75xbf16, #tpu.memory_space<vmem>>, vector<392x75xbf16>
    %cst_10 = arith.constant dense<0.000000e+00> : vector<392x6xf32>
    %12 = tpu.matmul %11, %0, %cst_10 {dimension_numbers = #tpu.dot_dimension_numbers<[1], [0], [0], [1], [0, 0, 1, 1], [], []>} : vector<392x75xbf16>, vector<75x6xbf16>, vector<392x6xf32> -> vector<392x6xf32>
    %13 = vector.broadcast %1 : vector<1x6xf32> to vector<392x6xf32>
    %14 = arith.mulf %12, %13 : vector<392x6xf32>
    %15 = vector.broadcast %2 : vector<1x6xf32> to vector<392x6xf32>
    %16 = arith.addf %14, %15 : vector<392x6xf32>
    %cst_11 = arith.constant 0.000000e+00 : f32
    %17 = vector.broadcast %cst_11 : f32 to vector<392x6xf32>
    %18 = arith.maximumf %16, %17 : vector<392x6xf32>
    %19 = arith.maximumf %10, %18 : vector<392x6xf32>
    %c0_12 = arith.constant 0 : index
    %c0_13 = arith.constant 0 : index
    %20 = vector.load %arg3[%c0_12, %c0_13] : memref<392x75xbf16, #tpu.memory_space<vmem>>, vector<392x75xbf16>
    %cst_14 = arith.constant dense<0.000000e+00> : vector<392x6xf32>
    %21 = tpu.matmul %20, %0, %cst_14 {dimension_numbers = #tpu.dot_dimension_numbers<[1], [0], [0], [1], [0, 0, 1, 1], [], []>} : vector<392x75xbf16>, vector<75x6xbf16>, vector<392x6xf32> -> vector<392x6xf32>
    %22 = vector.broadcast %1 : vector<1x6xf32> to vector<392x6xf32>
    %23 = arith.mulf %21, %22 : vector<392x6xf32>
    %24 = vector.broadcast %2 : vector<1x6xf32> to vector<392x6xf32>
    %25 = arith.addf %23, %24 : vector<392x6xf32>
    %cst_15 = arith.constant 0.000000e+00 : f32
    %26 = vector.broadcast %cst_15 : f32 to vector<392x6xf32>
    %27 = arith.maximumf %25, %26 : vector<392x6xf32>
    %c0_16 = arith.constant 0 : index
    %c0_17 = arith.constant 0 : index
    %28 = vector.load %arg4[%c0_16, %c0_17] : memref<392x75xbf16, #tpu.memory_space<vmem>>, vector<392x75xbf16>
    %cst_18 = arith.constant dense<0.000000e+00> : vector<392x6xf32>
    %29 = tpu.matmul %28, %0, %cst_18 {dimension_numbers = #tpu.dot_dimension_numbers<[1], [0], [0], [1], [0, 0, 1, 1], [], []>} : vector<392x75xbf16>, vector<75x6xbf16>, vector<392x6xf32> -> vector<392x6xf32>
    %30 = vector.broadcast %1 : vector<1x6xf32> to vector<392x6xf32>
    %31 = arith.mulf %29, %30 : vector<392x6xf32>
    %32 = vector.broadcast %2 : vector<1x6xf32> to vector<392x6xf32>
    %33 = arith.addf %31, %32 : vector<392x6xf32>
    %cst_19 = arith.constant 0.000000e+00 : f32
    %34 = vector.broadcast %cst_19 : f32 to vector<392x6xf32>
    %35 = arith.maximumf %33, %34 : vector<392x6xf32>
    %36 = arith.maximumf %27, %35 : vector<392x6xf32>
    %37 = arith.maximumf %19, %36 : vector<392x6xf32>
    %c0_20 = arith.constant 0 : index
    %c0_21 = arith.constant 0 : index
    %38 = vector.load %arg8[%c0_20, %c0_21] : memref<392x6xf32, #tpu.memory_space<vmem>>, vector<392x6xf32>
    tpu.vector_store %arg8[%c0_20, %c0_21], %37 {strides = array<i32>} : memref<392x6xf32, #tpu.memory_space<vmem>>, vector<392x6xf32>,
    return
  }
  func.func @transform_0(%arg0: i32) -> (i32, i32) {
    %c0_i32 = arith.constant 0 : i32
    %c0_i32_0 = arith.constant 0 : i32
    return %arg0, %c0_i32 : i32, i32
  }
  func.func @transform_1(%arg0: i32) -> (i32, i32) {
    %c0_i32 = arith.constant 0 : i32
    %c0_i32_0 = arith.constant 0 : i32
    return %arg0, %c0_i32 : i32, i32
  }
  func.func @transform_2(%arg0: i32) -> (i32, i32) {
    %c0_i32 = arith.constant 0 : i32
    %c0_i32_0 = arith.constant 0 : i32
    return %arg0, %c0_i32 : i32, i32
  }
  func.func @transform_3(%arg0: i32) -> (i32, i32) {
    %c0_i32 = arith.constant 0 : i32
    %c0_i32_0 = arith.constant 0 : i32
    return %arg0, %c0_i32 : i32, i32
  }
  func.func @transform_4(%arg0: i32) -> (i32, i32) {
    %c0_i32 = arith.constant 0 : i32
    %c0_i32_0 = arith.constant 0 : i32
    %c0_i32_1 = arith.constant 0 : i32
    return %c0_i32, %c0_i32_0 : i32, i32
  }
  func.func @transform_5(%arg0: i32) -> (i32, i32) {
    %c0_i32 = arith.constant 0 : i32
    %c0_i32_0 = arith.constant 0 : i32
    %c0_i32_1 = arith.constant 0 : i32
    return %c0_i32, %c0_i32_0 : i32, i32
  }
  func.func @transform_6(%arg0: i32) -> (i32, i32) {
    %c0_i32 = arith.constant 0 : i32
    %c0_i32_0 = arith.constant 0 : i32
    %c0_i32_1 = arith.constant 0 : i32
    return %c0_i32, %c0_i32_0 : i32, i32
  }
  func.func @transform_7(%arg0: i32) -> (i32, i32) {
    %c0_i32 = arith.constant 0 : i32
    %c0_i32_0 = arith.constant 0 : i32
    return %arg0, %c0_i32 : i32, i32
  }
}

module attributes {stable_mosaic.version = 11 : i64} {
  func.func @_conv_bn_relu_pool_kernel(%arg0: i32, %arg1: memref<56x150xbf16, #tpu.memory_space<vmem>>, %arg2: memref<56x150xbf16, #tpu.memory_space<vmem>>, %arg3: memref<56x150xbf16, #tpu.memory_space<vmem>>, %arg4: memref<56x150xbf16, #tpu.memory_space<vmem>>, %arg5: memref<150x16xbf16, #tpu.memory_space<vmem>>, %arg6: memref<1x16xf32, #tpu.memory_space<vmem>>, %arg7: memref<1x16xf32, #tpu.memory_space<vmem>>, %arg8: memref<56x16xf32, #tpu.memory_space<vmem>>) attributes {dimension_semantics = [#tpu.dimension_semantics<parallel>], iteration_bounds = array<i64: 1>, scalar_prefetch = 0 : i64, scratch_operands = 0 : i64, tpu.core_type = #tpu.core_type<tc>, window_params = [{transform_indices = @transform_0, window_bounds = array<i64: 56, 150>}, {transform_indices = @transform_1, window_bounds = array<i64: 56, 150>}, {transform_indices = @transform_2, window_bounds = array<i64: 56, 150>}, {transform_indices = @transform_3, window_bounds = array<i64: 56, 150>}, {pipeline_mode = #tpu.pipeline_mode<synchronous>, transform_indices = @transform_4, window_bounds = array<i64: 150, 16>}, {pipeline_mode = #tpu.pipeline_mode<synchronous>, transform_indices = @transform_5, window_bounds = array<i64: 1, 16>}, {pipeline_mode = #tpu.pipeline_mode<synchronous>, transform_indices = @transform_6, window_bounds = array<i64: 1, 16>}, {transform_indices = @transform_7, window_bounds = array<i64: 56, 16>}]} {
    %c0 = arith.constant 0 : index
    %c0_0 = arith.constant 0 : index
    %0 = vector.load %arg5[%c0, %c0_0] : memref<150x16xbf16, #tpu.memory_space<vmem>>, vector<150x16xbf16>
    %c0_1 = arith.constant 0 : index
    %c0_2 = arith.constant 0 : index
    %1 = vector.load %arg6[%c0_1, %c0_2] : memref<1x16xf32, #tpu.memory_space<vmem>>, vector<1x16xf32>
    %c0_3 = arith.constant 0 : index
    %c0_4 = arith.constant 0 : index
    %2 = vector.load %arg7[%c0_3, %c0_4] : memref<1x16xf32, #tpu.memory_space<vmem>>, vector<1x16xf32>
    %c0_5 = arith.constant 0 : index
    %c0_6 = arith.constant 0 : index
    %3 = vector.load %arg1[%c0_5, %c0_6] : memref<56x150xbf16, #tpu.memory_space<vmem>>, vector<56x150xbf16>
    %cst = arith.constant dense<0.000000e+00> : vector<56x16xf32>
    %4 = tpu.matmul %3, %0, %cst {dimension_numbers = #tpu.dot_dimension_numbers<[1], [0], [0], [1], [0, 0, 1, 1], [], []>} : vector<56x150xbf16>, vector<150x16xbf16>, vector<56x16xf32> -> vector<56x16xf32>
    %5 = vector.broadcast %1 : vector<1x16xf32> to vector<56x16xf32>
    %6 = arith.mulf %4, %5 : vector<56x16xf32>
    %7 = vector.broadcast %2 : vector<1x16xf32> to vector<56x16xf32>
    %8 = arith.addf %6, %7 : vector<56x16xf32>
    %cst_7 = arith.constant 0.000000e+00 : f32
    %9 = vector.broadcast %cst_7 : f32 to vector<56x16xf32>
    %10 = arith.maximumf %8, %9 : vector<56x16xf32>
    %c0_8 = arith.constant 0 : index
    %c0_9 = arith.constant 0 : index
    %11 = vector.load %arg2[%c0_8, %c0_9] : memref<56x150xbf16, #tpu.memory_space<vmem>>, vector<56x150xbf16>
    %cst_10 = arith.constant dense<0.000000e+00> : vector<56x16xf32>
    %12 = tpu.matmul %11, %0, %cst_10 {dimension_numbers = #tpu.dot_dimension_numbers<[1], [0], [0], [1], [0, 0, 1, 1], [], []>} : vector<56x150xbf16>, vector<150x16xbf16>, vector<56x16xf32> -> vector<56x16xf32>
    %13 = vector.broadcast %1 : vector<1x16xf32> to vector<56x16xf32>
    %14 = arith.mulf %12, %13 : vector<56x16xf32>
    %15 = vector.broadcast %2 : vector<1x16xf32> to vector<56x16xf32>
    %16 = arith.addf %14, %15 : vector<56x16xf32>
    %cst_11 = arith.constant 0.000000e+00 : f32
    %17 = vector.broadcast %cst_11 : f32 to vector<56x16xf32>
    %18 = arith.maximumf %16, %17 : vector<56x16xf32>
    %19 = arith.maximumf %10, %18 : vector<56x16xf32>
    %c0_12 = arith.constant 0 : index
    %c0_13 = arith.constant 0 : index
    %20 = vector.load %arg3[%c0_12, %c0_13] : memref<56x150xbf16, #tpu.memory_space<vmem>>, vector<56x150xbf16>
    %cst_14 = arith.constant dense<0.000000e+00> : vector<56x16xf32>
    %21 = tpu.matmul %20, %0, %cst_14 {dimension_numbers = #tpu.dot_dimension_numbers<[1], [0], [0], [1], [0, 0, 1, 1], [], []>} : vector<56x150xbf16>, vector<150x16xbf16>, vector<56x16xf32> -> vector<56x16xf32>
    %22 = vector.broadcast %1 : vector<1x16xf32> to vector<56x16xf32>
    %23 = arith.mulf %21, %22 : vector<56x16xf32>
    %24 = vector.broadcast %2 : vector<1x16xf32> to vector<56x16xf32>
    %25 = arith.addf %23, %24 : vector<56x16xf32>
    %cst_15 = arith.constant 0.000000e+00 : f32
    %26 = vector.broadcast %cst_15 : f32 to vector<56x16xf32>
    %27 = arith.maximumf %25, %26 : vector<56x16xf32>
    %c0_16 = arith.constant 0 : index
    %c0_17 = arith.constant 0 : index
    %28 = vector.load %arg4[%c0_16, %c0_17] : memref<56x150xbf16, #tpu.memory_space<vmem>>, vector<56x150xbf16>
    %cst_18 = arith.constant dense<0.000000e+00> : vector<56x16xf32>
    %29 = tpu.matmul %28, %0, %cst_18 {dimension_numbers = #tpu.dot_dimension_numbers<[1], [0], [0], [1], [0, 0, 1, 1], [], []>} : vector<56x150xbf16>, vector<150x16xbf16>, vector<56x16xf32> -> vector<56x16xf32>
    %30 = vector.broadcast %1 : vector<1x16xf32> to vector<56x16xf32>
    %31 = arith.mulf %29, %30 : vector<56x16xf32>
    %32 = vector.broadcast %2 : vector<1x16xf32> to vector<56x16xf32>
    %33 = arith.addf %31, %32 : vector<56x16xf32>
    %cst_19 = arith.constant 0.000000e+00 : f32
    %34 = vector.broadcast %cst_19 : f32 to vector<56x16xf32>
    %35 = arith.maximumf %33, %34 : vector<56x16xf32>
    %36 = arith.maximumf %27, %35 : vector<56x16xf32>
    %37 = arith.maximumf %19, %36 : vector<56x16xf32>
    %c0_20 = arith.constant 0 : index
    %c0_21 = arith.constant 0 : index
    %38 = vector.load %arg8[%c0_20, %c0_21] : memref<56x16xf32, #tpu.memory_space<vmem>>, vector<56x16xf32>
    tpu.vector_store %arg8[%c0_20, %c0_21], %37 {strides = array<i32>} : memref<56x16xf32, #tpu.memory_space<vmem>>, vector<56x16xf32>,
    return
  }
  func.func @transform_0(%arg0: i32) -> (i32, i32) {
    %c0_i32 = arith.constant 0 : i32
    %c0_i32_0 = arith.constant 0 : i32
    return %arg0, %c0_i32 : i32, i32
  }
  func.func @transform_1(%arg0: i32) -> (i32, i32) {
    %c0_i32 = arith.constant 0 : i32
    %c0_i32_0 = arith.constant 0 : i32
    return %arg0, %c0_i32 : i32, i32
  }
  func.func @transform_2(%arg0: i32) -> (i32, i32) {
    %c0_i32 = arith.constant 0 : i32
    %c0_i32_0 = arith.constant 0 : i32
    return %arg0, %c0_i32 : i32, i32
  }
  func.func @transform_3(%arg0: i32) -> (i32, i32) {
    %c0_i32 = arith.constant 0 : i32
    %c0_i32_0 = arith.constant 0 : i32
    return %arg0, %c0_i32 : i32, i32
  }
  func.func @transform_4(%arg0: i32) -> (i32, i32) {
    %c0_i32 = arith.constant 0 : i32
    %c0_i32_0 = arith.constant 0 : i32
    %c0_i32_1 = arith.constant 0 : i32
    return %c0_i32, %c0_i32_0 : i32, i32
  }
  func.func @transform_5(%arg0: i32) -> (i32, i32) {
    %c0_i32 = arith.constant 0 : i32
    %c0_i32_0 = arith.constant 0 : i32
    %c0_i32_1 = arith.constant 0 : i32
    return %c0_i32, %c0_i32_0 : i32, i32
  }
  func.func @transform_6(%arg0: i32) -> (i32, i32) {
    %c0_i32 = arith.constant 0 : i32
    %c0_i32_0 = arith.constant 0 : i32
    %c0_i32_1 = arith.constant 0 : i32
    return %c0_i32, %c0_i32_0 : i32, i32
  }
  func.func @transform_7(%arg0: i32) -> (i32, i32) {
    %c0_i32 = arith.constant 0 : i32
    %c0_i32_0 = arith.constant 0 : i32
    return %arg0, %c0_i32 : i32, i32
  }
}

module attributes {stable_mosaic.version = 11 : i64} {
  func.func @_fc_chain_kernel(%arg0: i32, %arg1: memref<8x400xbf16, #tpu.memory_space<vmem>>, %arg2: memref<400x500xbf16, #tpu.memory_space<vmem>>, %arg3: memref<1x500xf32, #tpu.memory_space<vmem>>, %arg4: memref<500x300xbf16, #tpu.memory_space<vmem>>, %arg5: memref<1x300xf32, #tpu.memory_space<vmem>>, %arg6: memref<300x100xbf16, #tpu.memory_space<vmem>>, %arg7: memref<1x100xf32, #tpu.memory_space<vmem>>, %arg8: memref<8x100xf32, #tpu.memory_space<vmem>>) attributes {dimension_semantics = [#tpu.dimension_semantics<parallel>], iteration_bounds = array<i64: 1>, scalar_prefetch = 0 : i64, scratch_operands = 0 : i64, tpu.core_type = #tpu.core_type<tc>, window_params = [{transform_indices = @transform_0, window_bounds = array<i64: 8, 400>}, {pipeline_mode = #tpu.pipeline_mode<synchronous>, transform_indices = @transform_1, window_bounds = array<i64: 400, 500>}, {pipeline_mode = #tpu.pipeline_mode<synchronous>, transform_indices = @transform_2, window_bounds = array<i64: 1, 500>}, {pipeline_mode = #tpu.pipeline_mode<synchronous>, transform_indices = @transform_3, window_bounds = array<i64: 500, 300>}, {pipeline_mode = #tpu.pipeline_mode<synchronous>, transform_indices = @transform_4, window_bounds = array<i64: 1, 300>}, {pipeline_mode = #tpu.pipeline_mode<synchronous>, transform_indices = @transform_5, window_bounds = array<i64: 300, 100>}, {pipeline_mode = #tpu.pipeline_mode<synchronous>, transform_indices = @transform_6, window_bounds = array<i64: 1, 100>}, {transform_indices = @transform_7, window_bounds = array<i64: 8, 100>}]} {
    %c0 = arith.constant 0 : index
    %c0_0 = arith.constant 0 : index
    %0 = vector.load %arg1[%c0, %c0_0] : memref<8x400xbf16, #tpu.memory_space<vmem>>, vector<8x400xbf16>
    %c0_1 = arith.constant 0 : index
    %c0_2 = arith.constant 0 : index
    %1 = vector.load %arg2[%c0_1, %c0_2] : memref<400x500xbf16, #tpu.memory_space<vmem>>, vector<400x500xbf16>
    %cst = arith.constant dense<0.000000e+00> : vector<8x500xf32>
    %2 = tpu.matmul %0, %1, %cst {dimension_numbers = #tpu.dot_dimension_numbers<[1], [0], [0], [1], [0, 0, 1, 1], [], []>} : vector<8x400xbf16>, vector<400x500xbf16>, vector<8x500xf32> -> vector<8x500xf32>
    %c0_3 = arith.constant 0 : index
    %c0_4 = arith.constant 0 : index
    %3 = vector.load %arg3[%c0_3, %c0_4] : memref<1x500xf32, #tpu.memory_space<vmem>>, vector<1x500xf32>
    %4 = vector.broadcast %3 : vector<1x500xf32> to vector<8x500xf32>
    %5 = arith.addf %2, %4 : vector<8x500xf32>
    %cst_5 = arith.constant 0.000000e+00 : f32
    %6 = vector.broadcast %cst_5 : f32 to vector<8x500xf32>
    %7 = arith.maximumf %5, %6 : vector<8x500xf32>
    %8 = arith.truncf %7 : vector<8x500xf32> to vector<8x500xbf16>
    %c0_6 = arith.constant 0 : index
    %c0_7 = arith.constant 0 : index
    %9 = vector.load %arg4[%c0_6, %c0_7] : memref<500x300xbf16, #tpu.memory_space<vmem>>, vector<500x300xbf16>
    %cst_8 = arith.constant dense<0.000000e+00> : vector<8x300xf32>
    %10 = tpu.matmul %8, %9, %cst_8 {dimension_numbers = #tpu.dot_dimension_numbers<[1], [0], [0], [1], [0, 0, 1, 1], [], []>} : vector<8x500xbf16>, vector<500x300xbf16>, vector<8x300xf32> -> vector<8x300xf32>
    %c0_9 = arith.constant 0 : index
    %c0_10 = arith.constant 0 : index
    %11 = vector.load %arg5[%c0_9, %c0_10] : memref<1x300xf32, #tpu.memory_space<vmem>>, vector<1x300xf32>
    %12 = vector.broadcast %11 : vector<1x300xf32> to vector<8x300xf32>
    %13 = arith.addf %10, %12 : vector<8x300xf32>
    %cst_11 = arith.constant 0.000000e+00 : f32
    %14 = vector.broadcast %cst_11 : f32 to vector<8x300xf32>
    %15 = arith.maximumf %13, %14 : vector<8x300xf32>
    %16 = arith.truncf %15 : vector<8x300xf32> to vector<8x300xbf16>
    %c0_12 = arith.constant 0 : index
    %c0_13 = arith.constant 0 : index
    %17 = vector.load %arg6[%c0_12, %c0_13] : memref<300x100xbf16, #tpu.memory_space<vmem>>, vector<300x100xbf16>
    %cst_14 = arith.constant dense<0.000000e+00> : vector<8x100xf32>
    %18 = tpu.matmul %16, %17, %cst_14 {dimension_numbers = #tpu.dot_dimension_numbers<[1], [0], [0], [1], [0, 0, 1, 1], [], []>} : vector<8x300xbf16>, vector<300x100xbf16>, vector<8x100xf32> -> vector<8x100xf32>
    %c0_15 = arith.constant 0 : index
    %c0_16 = arith.constant 0 : index
    %19 = vector.load %arg7[%c0_15, %c0_16] : memref<1x100xf32, #tpu.memory_space<vmem>>, vector<1x100xf32>
    %20 = vector.broadcast %19 : vector<1x100xf32> to vector<8x100xf32>
    %21 = arith.addf %18, %20 : vector<8x100xf32>
    %c0_17 = arith.constant 0 : index
    %c0_18 = arith.constant 0 : index
    %22 = vector.load %arg8[%c0_17, %c0_18] : memref<8x100xf32, #tpu.memory_space<vmem>>, vector<8x100xf32>
    tpu.vector_store %arg8[%c0_17, %c0_18], %21 {strides = array<i32>} : memref<8x100xf32, #tpu.memory_space<vmem>>, vector<8x100xf32>,
    return
  }
  func.func @transform_0(%arg0: i32) -> (i32, i32) {
    %c0_i32 = arith.constant 0 : i32
    %c0_i32_0 = arith.constant 0 : i32
    return %arg0, %c0_i32 : i32, i32
  }
  func.func @transform_1(%arg0: i32) -> (i32, i32) {
    %c0_i32 = arith.constant 0 : i32
    %c0_i32_0 = arith.constant 0 : i32
    %c0_i32_1 = arith.constant 0 : i32
    return %c0_i32, %c0_i32_0 : i32, i32
  }
  func.func @transform_2(%arg0: i32) -> (i32, i32) {
    %c0_i32 = arith.constant 0 : i32
    %c0_i32_0 = arith.constant 0 : i32
    %c0_i32_1 = arith.constant 0 : i32
    return %c0_i32, %c0_i32_0 : i32, i32
  }
  func.func @transform_3(%arg0: i32) -> (i32, i32) {
    %c0_i32 = arith.constant 0 : i32
    %c0_i32_0 = arith.constant 0 : i32
    %c0_i32_1 = arith.constant 0 : i32
    return %c0_i32, %c0_i32_0 : i32, i32
  }
  func.func @transform_4(%arg0: i32) -> (i32, i32) {
    %c0_i32 = arith.constant 0 : i32
    %c0_i32_0 = arith.constant 0 : i32
    %c0_i32_1 = arith.constant 0 : i32
    return %c0_i32, %c0_i32_0 : i32, i32
  }
  func.func @transform_5(%arg0: i32) -> (i32, i32) {
    %c0_i32 = arith.constant 0 : i32
    %c0_i32_0 = arith.constant 0 : i32
    %c0_i32_1 = arith.constant 0 : i32
    return %c0_i32, %c0_i32_0 : i32, i32
  }
  func.func @transform_6(%arg0: i32) -> (i32, i32) {
    %c0_i32 = arith.constant 0 : i32
    %c0_i32_0 = arith.constant 0 : i32
    %c0_i32_1 = arith.constant 0 : i32
    return %c0_i32, %c0_i32_0 : i32, i32
  }
  func.func @transform_7(%arg0: i32) -> (i32, i32) {
    %c0_i32 = arith.constant 0 : i32
    %c0_i32_0 = arith.constant 0 : i32
    return %arg0, %c0_i32 : i32, i32
  }
}

</mosaic_0001>

<llo_original>
// kernel: _lambda_.3
$region0: #{_lambda_.3}
  #allocation0 [shape = 'u32[]', space=smem, size = 0x4, offset = 0x4, fixed_abs, tag = 'smem constant byte address 0x4 - core index']
  #allocation1 [shape = 'u32[144,128]{1,0:T(1,128)}', space=vmem, size = 0x12000, scoped, tag = 'internal scratch']
  %s0 = inlined_call_operand.vmem [shape: bf16[392,75], index: 0, kind: input, shape index: {}]
  %s1 = inlined_call_operand.vmem [shape: bf16[392,75], index: 1, kind: input, shape index: {}]
  %s2 = inlined_call_operand.vmem [shape: bf16[392,75], index: 2, kind: input, shape index: {}]
  %s3 = inlined_call_operand.vmem [shape: bf16[392,75], index: 3, kind: input, shape index: {}]
  %s4 = inlined_call_operand.vmem [shape: bf16[75,6], index: 4, kind: input, shape index: {}]
  %s5 = inlined_call_operand.vmem [shape: f32[1,6], index: 5, kind: input, shape index: {}]
  %s6 = inlined_call_operand.vmem [shape: f32[1,6], index: 6, kind: input, shape index: {}]
  %s7 = inlined_call_operand.vmem [shape: f32[392,6], index: 7, kind: output, shape index: {}]
  %s8 = sld [smem:[#allocation0]]
  $region38: #{_lambda_.3} parent=0
    _
  %s10 = ssub.s32 1, %s8
  %s11 = scalar_select 0, %s10, %s8
  // Predicated region
  $region2: #{_lambda_.3} parent=0 // pred_check
    _
  $region3: #{_lambda_.3} parent=0 // pred_check_branch
    %13 = sbr.rel (0) target = $region5
  $region4: #{_lambda_.3} parent=0 // pred_region
    _
  $region5: #{_lambda_.3} parent=0 // pred_fallthru
    _
  // Predicated region
  $region6: #{_lambda_.3} parent=0 // pred_check
    _
  $region7: #{_lambda_.3} parent=0 // pred_check_branch
    %15 = sbr.rel (0) target = $region9
  $region8: #{_lambda_.3} parent=0 // pred_region
    _
  $region9: #{_lambda_.3} parent=0 // pred_fallthru
    _
  // Predicated region
  $region10: #{_lambda_.3} parent=0 // pred_check
    _
  $region11: #{_lambda_.3} parent=0 // pred_check_branch
    %17 = sbr.rel (0) target = $region13
  $region12: #{_lambda_.3} parent=0 // pred_region
    _
  $region13: #{_lambda_.3} parent=0 // pred_fallthru
    _
  // Predicated region
  $region14: #{_lambda_.3} parent=0 // pred_check
    _
  $region15: #{_lambda_.3} parent=0 // pred_check_branch
    %19 = sbr.rel (0) target = $region17
  $region16: #{_lambda_.3} parent=0 // pred_region
    _
  $region17: #{_lambda_.3} parent=0 // pred_fallthru
    _
  // Predicated region
  $region18: #{_lambda_.3} parent=0 // pred_check
    _
  $region19: #{_lambda_.3} parent=0 // pred_check_branch
    %21 = sbr.rel (0) target = $region21
  $region20: #{_lambda_.3} parent=0 // pred_region
    _
  $region21: #{_lambda_.3} parent=0 // pred_fallthru
    _
  // Predicated region
  $region22: #{_lambda_.3} parent=0 // pred_check
    _
  $region23: #{_lambda_.3} parent=0 // pred_check_branch
    %23 = sbr.rel (0) target = $region25
  $region24: #{_lambda_.3} parent=0 // pred_region
    _
  $region25: #{_lambda_.3} parent=0 // pred_fallthru
    _
  // Predicated region
  $region26: #{_lambda_.3} parent=0 // pred_check
    _
  $region27: #{_lambda_.3} parent=0 // pred_check_branch
    %25 = sbr.rel (0) target = $region29
  $region28: #{_lambda_.3} parent=0 // pred_region
    _
  $region29: #{_lambda_.3} parent=0 // pred_fallthru
    _
  %v27 = vld [vmem:[%s4] sm:$0xf]
  %v28 = vld [vmem:[%s4 + $0x4] sm:$0xf]
  %v29 = vld [vmem:[%s4 + $0x8] sm:$0xf]
  %v30 = vld [vmem:[%s4 + $0xc] sm:$0xf]
  %v31 = vld [vmem:[%s4 + $0x10] sm:$0xf]
  %v32 = vld [vmem:[%s4 + $0x14] sm:$0xf]
  %v33 = vld [vmem:[%s4 + $0x18] sm:$0xf]
  %v34 = vld [vmem:[%s4 + $0x1c] sm:$0xf]
  %v35 = vld [vmem:[%s4 + $0x20] sm:$0xf]
  %v36 = vld [vmem:[%s4 + $0x24] sm:$0x3]
  %v37 = vld [vmem:[%s5] sm:$0x1]
  %v38 = vld [vmem:[%s6] sm:$0x1]
  %v39 = vld [vmem:[%s0] sm:$0xf]
  %v40 = vld [vmem:[%s0 + $0x4] sm:$0xf]
  %v41 = vld [vmem:[%s0 + $0x8] sm:$0xf]
  %v42 = vld [vmem:[%s0 + $0xc] sm:$0xf]
  %v43 = vld [vmem:[%s0 + $0x10] sm:$0xf]
  %v44 = vld [vmem:[%s0 + $0x14] sm:$0xf]
  %v45 = vld [vmem:[%s0 + $0x18] sm:$0xf]
  %v46 = vld [vmem:[%s0 + $0x1c] sm:$0xf]
  %v47 = vld [vmem:[%s0 + $0x20] sm:$0xf]
  %v48 = vld [vmem:[%s0 + $0x24] sm:$0xf]
  %v49 = vld [vmem:[%s0 + $0x28] sm:$0xf]
  %v50 = vld [vmem:[%s0 + $0x2c] sm:$0xf]
  %v51 = vld [vmem:[%s0 + $0x30] sm:$0xf]
  %v52 = vld [vmem:[%s0 + $0x34] sm:$0xf]
  %v53 = vld [vmem:[%s0 + $0x38] sm:$0xf]
  %v54 = vld [vmem:[%s0 + $0x3c] sm:$0xf]
  %v55 = vld [vmem:[%s0 + $0x40] sm:$0xf]
  %v56 = vld [vmem:[%s0 + $0x44] sm:$0xf]
  %v57 = vld [vmem:[%s0 + $0x48] sm:$0xf]
  %v58 = vld [vmem:[%s0 + $0x4c] sm:$0xf]
  %v59 = vld [vmem:[%s0 + $0x50] sm:$0xf]
  %v60 = vld [vmem:[%s0 + $0x54] sm:$0xf]
  %v61 = vld [vmem:[%s0 + $0x58] sm:$0xf]
  %v62 = vld [vmem:[%s0 + $0x5c] sm:$0xf]
  %v63 = vld [vmem:[%s0 + $0x60] sm:$0xf]
  %v64 = vld [vmem:[%s0 + $0x64] sm:$0xf]
  %v65 = vld [vmem:[%s0 + $0x68] sm:$0xf]
  %v66 = vld [vmem:[%s0 + $0x6c] sm:$0xf]
  %v67 = vld [vmem:[%s0 + $0x70] sm:$0xf]
  %v68 = vld [vmem:[%s0 + $0x74] sm:$0xf]
  %v69 = vld [vmem:[%s0 + $0x78] sm:$0xf]
  %v70 = vld [vmem:[%s0 + $0x7c] sm:$0xf]
  %v71 = vld [vmem:[%s0 + $0x80] sm:$0xf]
  %v72 = vld [vmem:[%s0 + $0x84] sm:$0xf]
  %v73 = vld [vmem:[%s0 + $0x88] sm:$0xf]
  %v74 = vld [vmem:[%s0 + $0x8c] sm:$0xf]
  %v75 = vld [vmem:[%s0 + $0x90] sm:$0xf]
  %v76 = vld [vmem:[%s0 + $0x94] sm:$0xf]
  %v77 = vld [vmem:[%s0 + $0x98] sm:$0xf]
  %v78 = vld [vmem:[%s0 + $0x9c] sm:$0xf]
  %v79 = vld [vmem:[%s0 + $0xa0] sm:$0xf]
  %v80 = vld [vmem:[%s0 + $0xa4] sm:$0xf]
  %v81 = vld [vmem:[%s0 + $0xa8] sm:$0xf]
  %v82 = vld [vmem:[%s0 + $0xac] sm:$0xf]
  %v83 = vld [vmem:[%s0 + $0xb0] sm:$0xf]
  %v84 = vld [vmem:[%s0 + $0xb4] sm:$0xf]
  %v85 = vld [vmem:[%s0 + $0xb8] sm:$0xf]
  %v86 = vld [vmem:[%s0 + $0xbc] sm:$0xf]
  %v87 = vld [vmem:[%s0 + $0xc0] sm:$0xf]
  %v137 = vunpack.c.l.b16 %v39
  %v138 = vunpack.c.l.b16 %v40
  %v139 = vunpack.c.l.b16 %v41
  %v140 = vunpack.c.l.b16 %v42
  %v141 = vunpack.c.l.b16 %v43
  %v142 = vunpack.c.l.b16 %v44
  %v143 = vunpack.c.l.b16 %v45
  %v144 = vunpack.c.l.b16 %v46
  %v145 = vunpack.c.l.b16 %v47
  %v146 = vunpack.c.l.b16 %v48
  %v147 = vunpack.c.l.b16 %v49
  %v148 = vunpack.c.l.b16 %v50
  %v149 = vunpack.c.l.b16 %v51
  %v150 = vunpack.c.l.b16 %v52
  %v151 = vunpack.c.l.b16 %v53
  %v152 = vunpack.c.l.b16 %v54
  %v153 = vunpack.c.l.b16 %v55
  %v154 = vunpack.c.l.b16 %v56
  %v155 = vunpack.c.l.b16 %v57
  %v156 = vunpack.c.l.b16 %v58
  %v157 = vunpack.c.l.b16 %v59
  %v158 = vunpack.c.l.b16 %v60
  %v159 = vunpack.c.l.b16 %v61
  %v160 = vunpack.c.l.b16 %v62
  %v161 = vunpack.c.l.b16 %v63
  %v162 = vunpack.c.l.b16 %v64
  %v163 = vunpack.c.l.b16 %v65
  %v164 = vunpack.c.l.b16 %v66
  %v165 = vunpack.c.l.b16 %v67
  %v166 = vunpack.c.l.b16 %v68
  %v167 = vunpack.c.l.b16 %v69
  %v168 = vunpack.c.l.b16 %v70
  %v169 = vunpack.c.l.b16 %v71
  %v170 = vunpack.c.l.b16 %v72
  %v171 = vunpack.c.l.b16 %v73
  %v172 = vunpack.c.l.b16 %v74
  %v173 = vunpack.c.l.b16 %v75
  %v174 = vunpack.c.l.b16 %v76
  %v175 = vunpack.c.l.b16 %v77
  %v176 = vunpack.c.l.b16 %v78
  %v177 = vunpack.c.l.b16 %v79
  %v178 = vunpack.c.l.b16 %v80
  %v179 = vunpack.c.l.b16 %v81
  %v180 = vunpack.c.l.b16 %v82
  %v181 = vunpack.c.l.b16 %v83
  %v182 = vunpack.c.l.b16 %v84
  %v183 = vunpack.c.l.b16 %v85
  %v184 = vunpack.c.l.b16 %v86
  %v185 = vunpack.c.l.b16 %v87
  %v186 = vpack.c.b16 %v138, %v137
  %v187 = vpack.c.b16 %v140, %v139
  %v188 = vpack.c.b16 %v142, %v141
  %v189 = vpack.c.b16 %v144, %v143
  %v190 = vpack.c.b16 %v146, %v145
  %v191 = vpack.c.b16 %v148, %v147
  %v192 = vpack.c.b16 %v150, %v149
  %v193 = vpack.c.b16 %v152, %v151
  %v194 = vpack.c.b16 %v154, %v153
  %v195 = vpack.c.b16 %v156, %v155
  %v196 = vpack.c.b16 %v158, %v157
  %v197 = vpack.c.b16 %v160, %v159
  %v198 = vpack.c.b16 %v162, %v161
  %v199 = vpack.c.b16 %v164, %v163
  %v200 = vpack.c.b16 %v166, %v165
  %v201 = vpack.c.b16 %v168, %v167
  %v202 = vpack.c.b16 %v170, %v169
  %v203 = vpack.c.b16 %v172, %v171
  %v204 = vpack.c.b16 %v174, %v173
  %v205 = vpack.c.b16 %v176, %v175
  %v206 = vpack.c.b16 %v178, %v177
  %v207 = vpack.c.b16 %v180, %v179
  %v208 = vpack.c.b16 %v182, %v181
  %v209 = vpack.c.b16 %v184, %v183
  %v210 = vpack.c.b16 %v185, %v185
  %v221 = vunpack.c.l.b16 %v27
  %v222 = vunpack.c.l.b16 %v28
  %v223 = vunpack.c.l.b16 %v29
  %v224 = vunpack.c.l.b16 %v30
  %v225 = vunpack.c.l.b16 %v31
  %v226 = vunpack.c.l.b16 %v32
  %v227 = vunpack.c.l.b16 %v33
  %v228 = vunpack.c.l.b16 %v34
  %v229 = vunpack.c.l.b16 %v35
  %v230 = vunpack.c.l.b16 %v36
  %v231 = vpack.c.b16 %v222, %v221
  %v232 = vpack.c.b16 %v224, %v223
  %v233 = vpack.c.b16 %v226, %v225
  %v234 = vpack.c.b16 %v228, %v227
  %v235 = vpack.c.b16 %v230, %v229
  %vm240 = vcmask 613376
  %v242 = vsel %vm240, %v186, 0
  %v245 = vsel %vm240, %v187, 0
  %v248 = vsel %vm240, %v188, 0
  %v251 = vsel %vm240, %v189, 0
  %v254 = vsel %vm240, %v190, 0
  %v257 = vsel %vm240, %v191, 0
  %v260 = vsel %vm240, %v192, 0
  %v263 = vsel %vm240, %v193, 0
  %v266 = vsel %vm240, %v194, 0
  %v269 = vsel %vm240, %v195, 0
  %v272 = vsel %vm240, %v196, 0
  %v275 = vsel %vm240, %v197, 0
  %v278 = vsel %vm240, %v198, 0
  %v281 = vsel %vm240, %v199, 0
  %v284 = vsel %vm240, %v200, 0
  %v287 = vsel %vm240, %v201, 0
  %v290 = vsel %vm240, %v202, 0
  %v293 = vsel %vm240, %v203, 0
  %v296 = vsel %vm240, %v204, 0
  %v299 = vsel %vm240, %v205, 0
  %v302 = vsel %vm240, %v206, 0
  %v305 = vsel %vm240, %v207, 0
  %v308 = vsel %vm240, %v208, 0
  %v311 = vsel %vm240, %v209, 0
  %v314 = vsel %vm240, %v210, 0
  %vm316 = vcmask 1044480
  %vm317 = vcmask 1045504
  %v318 = vsel %vm316, 4294967295, 65535
  %v319 = vsel %vm317, %v318, 0
  %v321 = vand.u32 %v235, %v319
  %323 = vmatprep.subr.bf16.mxu0 0
  %324 = vmatpush1.bf16.msra.mxu0 %v231
  %325 = vmatprep.subr.bf16.mxu0 0
  %326 = vmatpush1.bf16.msra.mxu0 %v232
  %327 = vmatprep.subr.bf16.mxu0 0
  %328 = vmatpush1.bf16.msra.mxu0 %v233
  %329 = vmatprep.subr.bf16.mxu0 0
  %330 = vmatpush1.bf16.msra.mxu0 %v234
  %331 = vmatprep.subr.bf16.mxu0 0
  %332 = vmatpush1.bf16.msra.mxu0 %v321
  %333 = vmatprep.subr.bf16.mxu0 0
  %334 = vmatpush1.bf16.msra.mxu0 0
  %335 = vmatprep.subr.bf16.mxu0 0
  %336 = vmatpush1.bf16.msra.mxu0 0
  %337 = vmatprep.subr.bf16.mxu0 0
  %338 = vmatpush1.bf16.msra.mxu0 0
  %339 = vmatprep.subr.bf16.mxu0 0
  %340 = vmatpush1.bf16.msra.mxu0 0
  %341 = vmatprep.subr.bf16.mxu0 0
  %342 = vmatpush1.bf16.msra.mxu0 0
  %343 = vmatprep.subr.bf16.mxu0 0
  %344 = vmatpush1.bf16.msra.mxu0 0
  %345 = vmatprep.subr.bf16.mxu0 0
  %346 = vmatpush1.bf16.msra.mxu0 0
  %347 = vmatprep.subr.bf16.mxu0 0
  %348 = vmatpush1.bf16.msra.mxu0 0
  %349 = vmatprep.subr.bf16.mxu0 0
  %350 = vmatpush1.bf16.msra.mxu0 0
  %351 = vmatprep.subr.bf16.mxu0 0
  %352 = vmatpush1.bf16.msra.mxu0 0
  %353 = vmatprep.subr.bf16.mxu0 0
  %354 = vmatpush1.bf16.msra.mxu0 0
  %355 = vmatprep.mubr.bf16.mxu0 0
  %356 = vmatmul.mubr.bf16.gmra.mrb[0].mxu0 %v242
  %v357 = vpop.f32.mrb[0].mxu0
  %v358 = vadd.f32 0.0, %v357
  %v359 = vpop.f32.mrb[0].mxu0
  %v360 = vpop.f32.mrb[0].mxu0
  %v361 = vadd.f32 0.0, %v360
  %v362 = vpop.f32.mrb[0].mxu0
  %363 = vmatprep.mubr.bf16.mxu0 0
  %364 = vmatmul.mubr.bf16.gmra.mrb[0].mxu0 %v245
  %v365 = vpop.f32.mrb[0].mxu0
  %v366 = vadd.f32 0.0, %v365
  %v367 = vpop.f32.mrb[0].mxu0
  %v368 = vpop.f32.mrb[0].mxu0
  %v369 = vadd.f32 0.0, %v368
  %v370 = vpop.f32.mrb[0].mxu0
  %371 = vmatprep.mubr.bf16.mxu0 0
  %372 = vmatmul.mubr.bf16.gmra.mrb[0].mxu0 %v248
  %v373 = vpop.f32.mrb[0].mxu0
  %v374 = vadd.f32 0.0, %v373
  %v375 = vpop.f32.mrb[0].mxu0
  %v376 = vpop.f32.mrb[0].mxu0
  %v377 = vadd.f32 0.0, %v376
  %v378 = vpop.f32.mrb[0].mxu0
  %379 = vmatprep.mubr.bf16.mxu0 0
  %380 = vmatmul.mubr.bf16.gmra.mrb[0].mxu0 %v251
  %v381 = vpop.f32.mrb[0].mxu0
  %v382 = vadd.f32 0.0, %v381
  %v383 = vpop.f32.mrb[0].mxu0
  %v384 = vpop.f32.mrb[0].mxu0
  %v385 = vadd.f32 0.0, %v384
  %v386 = vpop.f32.mrb[0].mxu0
  %387 = vmatprep.mubr.bf16.mxu0 0
  %388 = vmatmul.mubr.bf16.gmra.mrb[0].mxu0 %v254
  %v389 = vpop.f32.mrb[0].mxu0
  %v390 = vadd.f32 0.0, %v389
  %v391 = vpop.f32.mrb[0].mxu0
  %v392 = vpop.f32.mrb[0].mxu0
  %v393 = vadd.f32 0.0, %v392
  %v394 = vpop.f32.mrb[0].mxu0
  %395 = vmatprep.mubr.bf16.mxu0 0
  %396 = vmatmul.mubr.bf16.gmra.mrb[0].mxu0 %v257
  %v397 = vpop.f32.mrb[0].mxu0
  %v398 = vadd.f32 0.0, %v397
  %v399 = vpop.f32.mrb[0].mxu0
  %v400 = vpop.f32.mrb[0].mxu0
  %v401 = vadd.f32 0.0, %v400
  %v402 = vpop.f32.mrb[0].mxu0
  %403 = vmatprep.mubr.bf16.mxu0 0
  %404 = vmatmul.mubr.bf16.gmra.mrb[0].mxu0 %v260
  %v405 = vpop.f32.mrb[0].mxu0
  %v406 = vadd.f32 0.0, %v405
  %v407 = vpop.f32.mrb[0].mxu0
  %v408 = vpop.f32.mrb[0].mxu0
  %v409 = vadd.f32 0.0, %v408
  %v410 = vpop.f32.mrb[0].mxu0
  %411 = vmatprep.mubr.bf16.mxu0 0
  %412 = vmatmul.mubr.bf16.gmra.mrb[0].mxu0 %v263
  %v413 = vpop.f32.mrb[0].mxu0
  %v414 = vadd.f32 0.0, %v413
  %v415 = vpop.f32.mrb[0].mxu0
  %v416 = vpop.f32.mrb[0].mxu0
  %v417 = vadd.f32 0.0, %v416
  %v418 = vpop.f32.mrb[0].mxu0
  %419 = vmatprep.mubr.bf16.mxu0 0
  %420 = vmatmul.mubr.bf16.gmra.mrb[0].mxu0 %v266
  %v421 = vpop.f32.mrb[0].mxu0
  %v422 = vadd.f32 0.0, %v421
  %v423 = vpop.f32.mrb[0].mxu0
  %v424 = vpop.f32.mrb[0].mxu0
  %v425 = vadd.f32 0.0, %v424
  %v426 = vpop.f32.mrb[0].mxu0
  %427 = vmatprep.mubr.bf16.mxu0 0
  %428 = vmatmul.mubr.bf16.gmra.mrb[0].mxu0 %v269
  %v429 = vpop.f32.mrb[0].mxu0
  %v430 = vadd.f32 0.0, %v429
  %v431 = vpop.f32.mrb[0].mxu0
  %v432 = vpop.f32.mrb[0].mxu0
  %v433 = vadd.f32 0.0, %v432
  %v434 = vpop.f32.mrb[0].mxu0
  %435 = vmatprep.mubr.bf16.mxu0 0
  %436 = vmatmul.mubr.bf16.gmra.mrb[0].mxu0 %v272
  %v437 = vpop.f32.mrb[0].mxu0
  %v438 = vadd.f32 0.0, %v437
  %v439 = vpop.f32.mrb[0].mxu0
  %v440 = vpop.f32.mrb[0].mxu0
  %v441 = vadd.f32 0.0, %v440
  %v442 = vpop.f32.mrb[0].mxu0
  %443 = vmatprep.mubr.bf16.mxu0 0
  %444 = vmatmul.mubr.bf16.gmra.mrb[0].mxu0 %v275
  %v445 = vpop.f32.mrb[0].mxu0
  %v446 = vadd.f32 0.0, %v445
  %v447 = vpop.f32.mrb[0].mxu0
  %v448 = vpop.f32.mrb[0].mxu0
  %v449 = vadd.f32 0.0, %v448
  %v450 = vpop.f32.mrb[0].mxu0
  %451 = vmatprep.mubr.bf16.mxu0 0
  %452 = vmatmul.mubr.bf16.gmra.mrb[0].mxu0 %v278
  %v453 = vpop.f32.mrb[0].mxu0
  %v454 = vadd.f32 0.0, %v453
  %v455 = vpop.f32.mrb[0].mxu0
  %v456 = vpop.f32.mrb[0].mxu0
  %v457 = vadd.f32 0.0, %v456
  %v458 = vpop.f32.mrb[0].mxu0
  %459 = vmatprep.mubr.bf16.mxu0 0
  %460 = vmatmul.mubr.bf16.gmra.mrb[0].mxu0 %v281
  %v461 = vpop.f32.mrb[0].mxu0
  %v462 = vadd.f32 0.0, %v461
  %v463 = vpop.f32.mrb[0].mxu0
  %v464 = vpop.f32.mrb[0].mxu0
  %v465 = vadd.f32 0.0, %v464
  %v466 = vpop.f32.mrb[0].mxu0
  %467 = vmatprep.mubr.bf16.mxu0 0
  %468 = vmatmul.mubr.bf16.gmra.mrb[0].mxu0 %v284
  %v469 = vpop.f32.mrb[0].mxu0
  %v470 = vadd.f32 0.0, %v469
  %v471 = vpop.f32.mrb[0].mxu0
  %v472 = vpop.f32.mrb[0].mxu0
  %v473 = vadd.f32 0.0, %v472
  %v474 = vpop.f32.mrb[0].mxu0
  %475 = vmatprep.mubr.bf16.mxu0 0
  %476 = vmatmul.mubr.bf16.gmra.mrb[0].mxu0 %v287
  %v477 = vpop.f32.mrb[0].mxu0
  %v478 = vadd.f32 0.0, %v477
  %v479 = vpop.f32.mrb[0].mxu0
  %v480 = vpop.f32.mrb[0].mxu0
  %v481 = vadd.f32 0.0, %v480
  %v482 = vpop.f32.mrb[0].mxu0
  %483 = vmatprep.mubr.bf16.mxu0 0
  %484 = vmatmul.mubr.bf16.gmra.mrb[0].mxu0 %v290
  %v485 = vpop.f32.mrb[0].mxu0
  %v486 = vadd.f32 0.0, %v485
  %v487 = vpop.f32.mrb[0].mxu0
  %v488 = vpop.f32.mrb[0].mxu0
  %v489 = vadd.f32 0.0, %v488
  %v490 = vpop.f32.mrb[0].mxu0
  %491 = vmatprep.mubr.bf16.mxu0 0
  %492 = vmatmul.mubr.bf16.gmra.mrb[0].mxu0 %v293
  %v493 = vpop.f32.mrb[0].mxu0
  %v494 = vadd.f32 0.0, %v493
  %v495 = vpop.f32.mrb[0].mxu0
  %v496 = vpop.f32.mrb[0].mxu0
  %v497 = vadd.f32 0.0, %v496
  %v498 = vpop.f32.mrb[0].mxu0
  %499 = vmatprep.mubr.bf16.mxu0 0
  %500 = vmatmul.mubr.bf16.gmra.mrb[0].mxu0 %v296
  %v501 = vpop.f32.mrb[0].mxu0
  %v502 = vadd.f32 0.0, %v501
  %v503 = vpop.f32.mrb[0].mxu0
  %v504 = vpop.f32.mrb[0].mxu0
  %v505 = vadd.f32 0.0, %v504
  %v506 = vpop.f32.mrb[0].mxu0
  %507 = vmatprep.mubr.bf16.mxu0 0
  %508 = vmatmul.mubr.bf16.gmra.mrb[0].mxu0 %v299
  %v509 = vpop.f32.mrb[0].mxu0
  %v510 = vadd.f32 0.0, %v509
  %v511 = vpop.f32.mrb[0].mxu0
  %v512 = vpop.f32.mrb[0].mxu0
  %v513 = vadd.f32 0.0, %v512
  %v514 = vpop.f32.mrb[0].mxu0
  %515 = vmatprep.mubr.bf16.mxu0 0
  %516 = vmatmul.mubr.bf16.gmra.mrb[0].mxu0 %v302
  %v517 = vpop.f32.mrb[0].mxu0
  %v518 = vadd.f32 0.0, %v517
  %v519 = vpop.f32.mrb[0].mxu0
  %v520 = vpop.f32.mrb[0].mxu0
  %v521 = vadd.f32 0.0, %v520
  %v522 = vpop.f32.mrb[0].mxu0
  %523 = vmatprep.mubr.bf16.mxu0 0
  %524 = vmatmul.mubr.bf16.gmra.mrb[0].mxu0 %v305
  %v525 = vpop.f32.mrb[0].mxu0
  %v526 = vadd.f32 0.0, %v525
  %v527 = vpop.f32.mrb[0].mxu0
  %v528 = vpop.f32.mrb[0].mxu0
  %v529 = vadd.f32 0.0, %v528
  %v530 = vpop.f32.mrb[0].mxu0
  %531 = vmatprep.mubr.bf16.mxu0 0
  %532 = vmatmul.mubr.bf16.gmra.mrb[0].mxu0 %v308
  %v533 = vpop.f32.mrb[0].mxu0
  %v534 = vadd.f32 0.0, %v533
  %v535 = vpop.f32.mrb[0].mxu0
  %v536 = vpop.f32.mrb[0].mxu0
  %v537 = vadd.f32 0.0, %v536
  %v538 = vpop.f32.mrb[0].mxu0
  %539 = vmatprep.mubr.bf16.mxu0 0
  %540 = vmatmul.mubr.bf16.gmra.mrb[0].mxu0 %v311
  %v541 = vpop.f32.mrb[0].mxu0
  %v542 = vadd.f32 0.0, %v541
  %v543 = vpop.f32.mrb[0].mxu0
  %v544 = vpop.f32.mrb[0].mxu0
  %v545 = vadd.f32 0.0, %v544
  %v546 = vpop.f32.mrb[0].mxu0
  %547 = vmatprep.mubr.bf16.mxu0 0
  %548 = vmatmul.mubr.bf16.gmra.mrb[0].mxu0 %v314
  %v549 = vpop.f32.mrb[0].mxu0
  %v550 = vadd.f32 0.0, %v549
  %v551 = vpop.f32.mrb[0].mxu0
  %v552 = vpop.f32.mrb[0].mxu0
  %v553 = vpop.f32.mrb[0].mxu0
  %554 = vdwg.mxu0
  %v556 = vlaneseq
  %v557 = vshrl.u32 %v556, 7
  %v558 = vsub.s32 0, %v557
  %v559 = vrot.slane %v37, %v558
  %v561 = vmul.f32 %v358, %v559
  %v562 = vmul.f32 %v361, %v559
  %v563 = vmul.f32 %v366, %v559
  %v564 = vmul.f32 %v369, %v559
  %v565 = vmul.f32 %v374, %v559
  %v566 = vmul.f32 %v377, %v559
  %v567 = vmul.f32 %v382, %v559
  %v568 = vmul.f32 %v385, %v559
  %v569 = vmul.f32 %v390, %v559
  %v570 = vmul.f32 %v393, %v559
  %v571 = vmul.f32 %v398, %v559
  %v572 = vmul.f32 %v401, %v559
  %v573 = vmul.f32 %v406, %v559
  %v574 = vmul.f32 %v409, %v559
  %v575 = vmul.f32 %v414, %v559
  %v576 = vmul.f32 %v417, %v559
  %v577 = vmul.f32 %v422, %v559
  %v578 = vmul.f32 %v425, %v559
  %v579 = vmul.f32 %v430, %v559
  %v580 = vmul.f32 %v433, %v559
  %v581 = vmul.f32 %v438, %v559
  %v582 = vmul.f32 %v441, %v559
  %v583 = vmul.f32 %v446, %v559
  %v584 = vmul.f32 %v449, %v559
  %v585 = vmul.f32 %v454, %v559
  %v586 = vmul.f32 %v457, %v559
  %v587 = vmul.f32 %v462, %v559
  %v588 = vmul.f32 %v465, %v559
  %v589 = vmul.f32 %v470, %v559
  %v590 = vmul.f32 %v473, %v559
  %v591 = vmul.f32 %v478, %v559
  %v592 = vmul.f32 %v481, %v559
  %v593 = vmul.f32 %v486, %v559
  %v594 = vmul.f32 %v489, %v559
  %v595 = vmul.f32 %v494, %v559
  %v596 = vmul.f32 %v497, %v559
  %v597 = vmul.f32 %v502, %v559
  %v598 = vmul.f32 %v505, %v559
  %v599 = vmul.f32 %v510, %v559
  %v600 = vmul.f32 %v513, %v559
  %v601 = vmul.f32 %v518, %v559
  %v602 = vmul.f32 %v521, %v559
  %v603 = vmul.f32 %v526, %v559
  %v604 = vmul.f32 %v529, %v559
  %v605 = vmul.f32 %v534, %v559
  %v606 = vmul.f32 %v537, %v559
  %v607 = vmul.f32 %v542, %v559
  %v608 = vmul.f32 %v545, %v559
  %v609 = vmul.f32 %v550, %v559
  %v611 = vlaneseq
  %v612 = vshrl.u32 %v611, 7
  %v613 = vsub.s32 0, %v612
  %v614 = vrot.slane %v38, %v613
  %v616 = vadd.f32 %v561, %v614
  %v617 = vadd.f32 %v562, %v614
  %v618 = vadd.f32 %v563, %v614
  %v619 = vadd.f32 %v564, %v614
  %v620 = vadd.f32 %v565, %v614
  %v621 = vadd.f32 %v566, %v614
  %v622 = vadd.f32 %v567, %v614
  %v623 = vadd.f32 %v568, %v614
  %v624 = vadd.f32 %v569, %v614
  %v625 = vadd.f32 %v570, %v614
  %v626 = vadd.f32 %v571, %v614
  %v627 = vadd.f32 %v572, %v614
  %v628 = vadd.f32 %v573, %v614
  %v629 = vadd.f32 %v574, %v614
  %v630 = vadd.f32 %v575, %v614
  %v631 = vadd.f32 %v576, %v614
  %v632 = vadd.f32 %v577, %v614
  %v633 = vadd.f32 %v578, %v614
  %v634 = vadd.f32 %v579, %v614
  %v635 = vadd.f32 %v580, %v614
  %v636 = vadd.f32 %v581, %v614
  %v637 = vadd.f32 %v582, %v614
  %v638 = vadd.f32 %v583, %v614
  %v639 = vadd.f32 %v584, %v614
  %v640 = vadd.f32 %v585, %v614
  %v641 = vadd.f32 %v586, %v614
  %v642 = vadd.f32 %v587, %v614
  %v643 = vadd.f32 %v588, %v614
  %v644 = vadd.f32 %v589, %v614
  %v645 = vadd.f32 %v590, %v614
  %v646 = vadd.f32 %v591, %v614
  %v647 = vadd.f32 %v592, %v614
  %v648 = vadd.f32 %v593, %v614
  %v649 = vadd.f32 %v594, %v614
  %v650 = vadd.f32 %v595, %v614
  %v651 = vadd.f32 %v596, %v614
  %v652 = vadd.f32 %v597, %v614
  %v653 = vadd.f32 %v598, %v614
  %v654 = vadd.f32 %v599, %v614
  %v655 = vadd.f32 %v600, %v614
  %v656 = vadd.f32 %v601, %v614
  %v657 = vadd.f32 %v602, %v614
  %v658 = vadd.f32 %v603, %v614
  %v659 = vadd.f32 %v604, %v614
  %v660 = vadd.f32 %v605, %v614
  %v661 = vadd.f32 %v606, %v614
  %v662 = vadd.f32 %v607, %v614
  %v663 = vadd.f32 %v608, %v614
  %v664 = vadd.f32 %v609, %v614
  %v665 = vmax.f32 %v616, 0.0
  %v666 = vmax.f32 %v617, 0.0
  %v667 = vmax.f32 %v618, 0.0
  %v668 = vmax.f32 %v619, 0.0
  %v669 = vmax.f32 %v620, 0.0
  %v670 = vmax.f32 %v621, 0.0
  %v671 = vmax.f32 %v622, 0.0
  %v672 = vmax.f32 %v623, 0.0
  %v673 = vmax.f32 %v624, 0.0
  %v674 = vmax.f32 %v625, 0.0
  %v675 = vmax.f32 %v626, 0.0
  %v676 = vmax.f32 %v627, 0.0
  %v677 = vmax.f32 %v628, 0.0
  %v678 = vmax.f32 %v629, 0.0
  %v679 = vmax.f32 %v630, 0.0
  %v680 = vmax.f32 %v631, 0.0
  %v681 = vmax.f32 %v632, 0.0
  %v682 = vmax.f32 %v633, 0.0
  %v683 = vmax.f32 %v634, 0.0
  %v684 = vmax.f32 %v635, 0.0
  %v685 = vmax.f32 %v636, 0.0
  %v686 = vmax.f32 %v637, 0.0
  %v687 = vmax.f32 %v638, 0.0
  %v688 = vmax.f32 %v639, 0.0
  %v689 = vmax.f32 %v640, 0.0
  %v690 = vmax.f32 %v641, 0.0
  %v691 = vmax.f32 %v642, 0.0
  %v692 = vmax.f32 %v643, 0.0
  %v693 = vmax.f32 %v644, 0.0
  %v694 = vmax.f32 %v645, 0.0
  %v695 = vmax.f32 %v646, 0.0
  %v696 = vmax.f32 %v647, 0.0
  %v697 = vmax.f32 %v648, 0.0
  %v698 = vmax.f32 %v649, 0.0
  %v699 = vmax.f32 %v650, 0.0
  %v700 = vmax.f32 %v651, 0.0
  %v701 = vmax.f32 %v652, 0.0
  %v702 = vmax.f32 %v653, 0.0
  %v703 = vmax.f32 %v654, 0.0
  %v704 = vmax.f32 %v655, 0.0
  %v705 = vmax.f32 %v656, 0.0
  %v706 = vmax.f32 %v657, 0.0
  %v707 = vmax.f32 %v658, 0.0
  %v708 = vmax.f32 %v659, 0.0
  %v709 = vmax.f32 %v660, 0.0
  %v710 = vmax.f32 %v661, 0.0
  %v711 = vmax.f32 %v662, 0.0
  %v712 = vmax.f32 %v663, 0.0
  %v713 = vmax.f32 %v664, 0.0
  %v714 = vld [vmem:[%s1] sm:$0xf]
  %v715 = vld [vmem:[%s1 + $0x4] sm:$0xf]
  %v716 = vld [vmem:[%s1 + $0x8] sm:$0xf]
  %v717 = vld [vmem:[%s1 + $0xc] sm:$0xf]
  %v718 = vld [vmem:[%s1 + $0x10] sm:$0xf]
  %v719 = vld [vmem:[%s1 + $0x14] sm:$0xf]
  %v720 = vld [vmem:[%s1 + $0x18] sm:$0xf]
  %v721 = vld [vmem:[%s1 + $0x1c] sm:$0xf]
  %v722 = vld [vmem:[%s1 + $0x20] sm:$0xf]
  %v723 = vld [vmem:[%s1 + $0x24] sm:$0xf]
  %v724 = vld [vmem:[%s1 + $0x28] sm:$0xf]
  %v725 = vld [vmem:[%s1 + $0x2c] sm:$0xf]
  %v726 = vld [vmem:[%s1 + $0x30] sm:$0xf]
  %v727 = vld [vmem:[%s1 + $0x34] sm:$0xf]
  %v728 = vld [vmem:[%s1 + $0x38] sm:$0xf]
  %v729 = vld [vmem:[%s1 + $0x3c] sm:$0xf]
  %v730 = vld [vmem:[%s1 + $0x40] sm:$0xf]
  %v731 = vld [vmem:[%s1 + $0x44] sm:$0xf]
  %v732 = vld [vmem:[%s1 + $0x48] sm:$0xf]
  %v733 = vld [vmem:[%s1 + $0x4c] sm:$0xf]
  %v734 = vld [vmem:[%s1 + $0x50] sm:$0xf]
  %v735 = vld [vmem:[%s1 + $0x54] sm:$0xf]
  %v736 = vld [vmem:[%s1 + $0x58] sm:$0xf]
  %v737 = vld [vmem:[%s1 + $0x5c] sm:$0xf]
  %v738 = vld [vmem:[%s1 + $0x60] sm:$0xf]
  %v739 = vld [vmem:[%s1 + $0x64] sm:$0xf]
  %v740 = vld [vmem:[%s1 + $0x68] sm:$0xf]
  %v741 = vld [vmem:[%s1 + $0x6c] sm:$0xf]
  %v742 = vld [vmem:[%s1 + $0x70] sm:$0xf]
  %v743 = vld [vmem:[%s1 + $0x74] sm:$0xf]
  %v744 = vld [vmem:[%s1 + $0x78] sm:$0xf]
  %v745 = vld [vmem:[%s1 + $0x7c] sm:$0xf]
  %v746 = vld [vmem:[%s1 + $0x80] sm:$0xf]
  %v747 = vld [vmem:[%s1 + $0x84] sm:$0xf]
  %v748 = vld [vmem:[%s1 + $0x88] sm:$0xf]
  %v749 = vld [vmem:[%s1 + $0x8c] sm:$0xf]
  %v750 = vld [vmem:[%s1 + $0x90] sm:$0xf]
  %v751 = vld [vmem:[%s1 + $0x94] sm:$0xf]
  %v752 = vld [vmem:[%s1 + $0x98] sm:$0xf]
  %v753 = vld [vmem:[%s1 + $0x9c] sm:$0xf]
  %v754 = vld [vmem:[%s1 + $0xa0] sm:$0xf]
  %v755 = vld [vmem:[%s1 + $0xa4] sm:$0xf]
  %v756 = vld [vmem:[%s1 + $0xa8] sm:$0xf]
  %v757 = vld [vmem:[%s1 + $0xac] sm:$0xf]
  %v758 = vld [vmem:[%s1 + $0xb0] sm:$0xf]
  %v759 = vld [vmem:[%s1 + $0xb4] sm:$0xf]
  %v760 = vld [vmem:[%s1 + $0xb8] sm:$0xf]
  %v761 = vld [vmem:[%s1 + $0xbc] sm:$0xf]
  %v762 = vld [vmem:[%s1 + $0xc0] sm:$0xf]
  %v812 = vunpack.c.l.b16 %v714
  %v813 = vunpack.c.l.b16 %v715
  %v814 = vunpack.c.l.b16 %v716
  %v815 = vunpack.c.l.b16 %v717
  %v816 = vunpack.c.l.b16 %v718
  %v817 = vunpack.c.l.b16 %v719
  %v818 = vunpack.c.l.b16 %v720
  %v819 = vunpack.c.l.b16 %v721
  %v820 = vunpack.c.l.b16 %v722
  %v821 = vunpack.c.l.b16 %v723
  %v822 = vunpack.c.l.b16 %v724
  %v823 = vunpack.c.l.b16 %v725
  %v824 = vunpack.c.l.b16 %v726
  %v825 = vunpack.c.l.b16 %v727
  %v826 = vunpack.c.l.b16 %v728
  %v827 = vunpack.c.l.b16 %v729
  %v828 = vunpack.c.l.b16 %v730
  %v829 = vunpack.c.l.b16 %v731
  %v830 = vunpack.c.l.b16 %v732
  %v831 = vunpack.c.l.b16 %v733
  %v832 = vunpack.c.l.b16 %v734
  %v833 = vunpack.c.l.b16 %v735
  %v834 = vunpack.c.l.b16 %v736
  %v835 = vunpack.c.l.b16 %v737
  %v836 = vunpack.c.l.b16 %v738
  %v837 = vunpack.c.l.b16 %v739
  %v838 = vunpack.c.l.b16 %v740
  %v839 = vunpack.c.l.b16 %v741
  %v840 = vunpack.c.l.b16 %v742
  %v841 = vunpack.c.l.b16 %v743
  %v842 = vunpack.c.l.b16 %v744
  %v843 = vunpack.c.l.b16 %v745
  %v844 = vunpack.c.l.b16 %v746
  %v845 = vunpack.c.l.b16 %v747
  %v846 = vunpack.c.l.b16 %v748
  %v847 = vunpack.c.l.b16 %v749
  %v848 = vunpack.c.l.b16 %v750
  %v849 = vunpack.c.l.b16 %v751
  %v850 = vunpack.c.l.b16 %v752
  %v851 = vunpack.c.l.b16 %v753
  %v852 = vunpack.c.l.b16 %v754
  %v853 = vunpack.c.l.b16 %v755
  %v854 = vunpack.c.l.b16 %v756
  %v855 = vunpack.c.l.b16 %v757
  %v856 = vunpack.c.l.b16 %v758
  %v857 = vunpack.c.l.b16 %v759
  %v858 = vunpack.c.l.b16 %v760
  %v859 = vunpack.c.l.b16 %v761
  %v860 = vunpack.c.l.b16 %v762
  %v861 = vpack.c.b16 %v813, %v812
  %v862 = vpack.c.b16 %v815, %v814
  %v863 = vpack.c.b16 %v817, %v816
  %v864 = vpack.c.b16 %v819, %v818
  %v865 = vpack.c.b16 %v821, %v820
  %v866 = vpack.c.b16 %v823, %v822
  %v867 = vpack.c.b16 %v825, %v824
  %v868 = vpack.c.b16 %v827, %v826
  %v869 = vpack.c.b16 %v829, %v828
  %v870 = vpack.c.b16 %v831, %v830
  %v871 = vpack.c.b16 %v833, %v832
  %v872 = vpack.c.b16 %v835, %v834
  %v873 = vpack.c.b16 %v837, %v836
  %v874 = vpack.c.b16 %v839, %v838
  %v875 = vpack.c.b16 %v841, %v840
  %v876 = vpack.c.b16 %v843, %v842
  %v877 = vpack.c.b16 %v845, %v844
  %v878 = vpack.c.b16 %v847, %v846
  %v879 = vpack.c.b16 %v849, %v848
  %v880 = vpack.c.b16 %v851, %v850
  %v881 = vpack.c.b16 %v853, %v852
  %v882 = vpack.c.b16 %v855, %v854
  %v883 = vpack.c.b16 %v857, %v856
  %v884 = vpack.c.b16 %v859, %v858
  %v885 = vpack.c.b16 %v860, %v860
  %v887 = vsel %vm240, %v861, 0
  %v890 = vsel %vm240, %v862, 0
  %v893 = vsel %vm240, %v863, 0
  %v896 = vsel %vm240, %v864, 0
  %v899 = vsel %vm240, %v865, 0
  %v902 = vsel %vm240, %v866, 0
  %v905 = vsel %vm240, %v867, 0
  %v908 = vsel %vm240, %v868, 0
  %v911 = vsel %vm240, %v869, 0
  %v914 = vsel %vm240, %v870, 0
  %v917 = vsel %vm240, %v871, 0
  %v920 = vsel %vm240, %v872, 0
  %v923 = vsel %vm240, %v873, 0
  %v926 = vsel %vm240, %v874, 0
  %v929 = vsel %vm240, %v875, 0
  %v932 = vsel %vm240, %v876, 0
  %v935 = vsel %vm240, %v877, 0
  %v938 = vsel %vm240, %v878, 0
  %v941 = vsel %vm240, %v879, 0
  %v944 = vsel %vm240, %v880, 0
  %v947 = vsel %vm240, %v881, 0
  %v950 = vsel %vm240, %v882, 0
  %v953 = vsel %vm240, %v883, 0
  %v956 = vsel %vm240, %v884, 0
  %v959 = vsel %vm240, %v885, 0
  %961 = vmatprep.subr.bf16.mxu0 0
  %962 = vmatpush1.bf16.msra.mxu0 %v231
  %963 = vmatprep.subr.bf16.mxu0 0
  %964 = vmatpush1.bf16.msra.mxu0 %v232
  %965 = vmatprep.subr.bf16.mxu0 0
  %966 = vmatpush1.bf16.msra.mxu0 %v233
  %967 = vmatprep.subr.bf16.mxu0 0
  %968 = vmatpush1.bf16.msra.mxu0 %v234
  %969 = vmatprep.subr.bf16.mxu0 0
  %970 = vmatpush1.bf16.msra.mxu0 %v321
  %971 = vmatprep.subr.bf16.mxu0 0
  %972 = vmatpush1.bf16.msra.mxu0 0
  %973 = vmatprep.subr.bf16.mxu0 0
  %974 = vmatpush1.bf16.msra.mxu0 0
  %975 = vmatprep.subr.bf16.mxu0 0
  %976 = vmatpush1.bf16.msra.mxu0 0
  %977 = vmatprep.subr.bf16.mxu0 0
  %978 = vmatpush1.bf16.msra.mxu0 0
  %979 = vmatprep.subr.bf16.mxu0 0
  %980 = vmatpush1.bf16.msra.mxu0 0
  %981 = vmatprep.subr.bf16.mxu0 0
  %982 = vmatpush1.bf16.msra.mxu0 0
  %983 = vmatprep.subr.bf16.mxu0 0
  %984 = vmatpush1.bf16.msra.mxu0 0
  %985 = vmatprep.subr.bf16.mxu0 0
  %986 = vmatpush1.bf16.msra.mxu0 0
  %987 = vmatprep.subr.bf16.mxu0 0
  %988 = vmatpush1.bf16.msra.mxu0 0
  %989 = vmatprep.subr.bf16.mxu0 0
  %990 = vmatpush1.bf16.msra.mxu0 0
  %991 = vmatprep.subr.bf16.mxu0 0
  %992 = vmatpush1.bf16.msra.mxu0 0
  %993 = vmatprep.mubr.bf16.mxu0 0
  %994 = vmatmul.mubr.bf16.gmra.mrb[0].mxu0 %v887
  %v995 = vpop.f32.mrb[0].mxu0
  %v996 = vadd.f32 0.0, %v995
  %v997 = vpop.f32.mrb[0].mxu0
  %v998 = vpop.f32.mrb[0].mxu0
  %v999 = vadd.f32 0.0, %v998
  %v1000 = vpop.f32.mrb[0].mxu0
  %1001 = vmatprep.mubr.bf16.mxu0 0
  %1002 = vmatmul.mubr.bf16.gmra.mrb[0].mxu0 %v890
  %v1003 = vpop.f32.mrb[0].mxu0
  %v1004 = vadd.f32 0.0, %v1003
  %v1005 = vpop.f32.mrb[0].mxu0
  %v1006 = vpop.f32.mrb[0].mxu0
  %v1007 = vadd.f32 0.0, %v1006
  %v1008 = vpop.f32.mrb[0].mxu0
  %1009 = vmatprep.mubr.bf16.mxu0 0
  %1010 = vmatmul.mubr.bf16.gmra.mrb[0].mxu0 %v893
  %v1011 = vpop.f32.mrb[0].mxu0
  %v1012 = vadd.f32 0.0, %v1011
  %v1013 = vpop.f32.mrb[0].mxu0
  %v1014 = vpop.f32.mrb[0].mxu0
  %v1015 = vadd.f32 0.0, %v1014
  %v1016 = vpop.f32.mrb[0].mxu0
  %1017 = vmatprep.mubr.bf16.mxu0 0
  %1018 = vmatmul.mubr.bf16.gmra.mrb[0].mxu0 %v896
  %v1019 = vpop.f32.mrb[0].mxu0
  %v1020 = vadd.f32 0.0, %v1019
  %v1021 = vpop.f32.mrb[0].mxu0
  %v1022 = vpop.f32.mrb[0].mxu0
  %v1023 = vadd.f32 0.0, %v1022
  %v1024 = vpop.f32.mrb[0].mxu0
  %1025 = vmatprep.mubr.bf16.mxu0 0
  %1026 = vmatmul.mubr.bf16.gmra.mrb[0].mxu0 %v899
  %v1027 = vpop.f32.mrb[0].mxu0
  %v1028 = vadd.f32 0.0, %v1027
  %v1029 = vpop.f32.mrb[0].mxu0
  %v1030 = vpop.f32.mrb[0].mxu0
  %v1031 = vadd.f32 0.0, %v1030
  %v1032 = vpop.f32.mrb[0].mxu0
  %1033 = vmatprep.mubr.bf16.mxu0 0
  %1034 = vmatmul.mubr.bf16.gmra.mrb[0].mxu0 %v902
  %v1035 = vpop.f32.mrb[0].mxu0
  %v1036 = vadd.f32 0.0, %v1035
  %v1037 = vpop.f32.mrb[0].mxu0
  %v1038 = vpop.f32.mrb[0].mxu0
  %v1039 = vadd.f32 0.0, %v1038
  %v1040 = vpop.f32.mrb[0].mxu0
  %1041 = vmatprep.mubr.bf16.mxu0 0
  %1042 = vmatmul.mubr.bf16.gmra.mrb[0].mxu0 %v905
  %v1043 = vpop.f32.mrb[0].mxu0
  %v1044 = vadd.f32 0.0, %v1043
  %v1045 = vpop.f32.mrb[0].mxu0
  %v1046 = vpop.f32.mrb[0].mxu0
  %v1047 = vadd.f32 0.0, %v1046
  %v1048 = vpop.f32.mrb[0].mxu0
  %1049 = vmatprep.mubr.bf16.mxu0 0
  %1050 = vmatmul.mubr.bf16.gmra.mrb[0].mxu0 %v908
  %v1051 = vpop.f32.mrb[0].mxu0
  %v1052 = vadd.f32 0.0, %v1051
  %v1053 = vpop.f32.mrb[0].mxu0
  %v1054 = vpop.f32.mrb[0].mxu0
  %v1055 = vadd.f32 0.0, %v1054
  %v1056 = vpop.f32.mrb[0].mxu0
  %1057 = vmatprep.mubr.bf16.mxu0 0
  %1058 = vmatmul.mubr.bf16.gmra.mrb[0].mxu0 %v911
  %v1059 = vpop.f32.mrb[0].mxu0
  %v1060 = vadd.f32 0.0, %v1059
  %v1061 = vpop.f32.mrb[0].mxu0
  %v1062 = vpop.f32.mrb[0].mxu0
  %v1063 = vadd.f32 0.0, %v1062
  %v1064 = vpop.f32.mrb[0].mxu0
  %1065 = vmatprep.mubr.bf16.mxu0 0
  %1066 = vmatmul.mubr.bf16.gmra.mrb[0].mxu0 %v914
  %v1067 = vpop.f32.mrb[0].mxu0
  %v1068 = vadd.f32 0.0, %v1067
  %v1069 = vpop.f32.mrb[0].mxu0
  %v1070 = vpop.f32.mrb[0].mxu0
  %v1071 = vadd.f32 0.0, %v1070
  %v1072 = vpop.f32.mrb[0].mxu0
  %1073 = vmatprep.mubr.bf16.mxu0 0
  %1074 = vmatmul.mubr.bf16.gmra.mrb[0].mxu0 %v917
  %v1075 = vpop.f32.mrb[0].mxu0
  %v1076 = vadd.f32 0.0, %v1075
  %v1077 = vpop.f32.mrb[0].mxu0
  %v1078 = vpop.f32.mrb[0].mxu0
  %v1079 = vadd.f32 0.0, %v1078
  %v1080 = vpop.f32.mrb[0].mxu0
  %1081 = vmatprep.mubr.bf16.mxu0 0
  %1082 = vmatmul.mubr.bf16.gmra.mrb[0].mxu0 %v920
  %v1083 = vpop.f32.mrb[0].mxu0
  %v1084 = vadd.f32 0.0, %v1083
  %v1085 = vpop.f32.mrb[0].mxu0
  %v1086 = vpop.f32.mrb[0].mxu0
  %v1087 = vadd.f32 0.0, %v1086
  %v1088 = vpop.f32.mrb[0].mxu0
  %1089 = vmatprep.mubr.bf16.mxu0 0
  %1090 = vmatmul.mubr.bf16.gmra.mrb[0].mxu0 %v923
  %v1091 = vpop.f32.mrb[0].mxu0
  %v1092 = vadd.f32 0.0, %v1091
  %v1093 = vpop.f32.mrb[0].mxu0
  %v1094 = vpop.f32.mrb[0].mxu0
  %v1095 = vadd.f32 0.0, %v1094
  %v1096 = vpop.f32.mrb[0].mxu0
  %1097 = vmatprep.mubr.bf16.mxu0 0
  %1098 = vmatmul.mubr.bf16.gmra.mrb[0].mxu0 %v926
  %v1099 = vpop.f32.mrb[0].mxu0
  %v1100 = vadd.f32 0.0, %v1099
  %v1101 = vpop.f32.mrb[0].mxu0
  %v1102 = vpop.f32.mrb[0].mxu0
  %v1103 = vadd.f32 0.0, %v1102
  %v1104 = vpop.f32.mrb[0].mxu0
  %1105 = vmatprep.mubr.bf16.mxu0 0
  %1106 = vmatmul.mubr.bf16.gmra.mrb[0].mxu0 %v929
  %v1107 = vpop.f32.mrb[0].mxu0
  %v1108 = vadd.f32 0.0, %v1107
  %v1109 = vpop.f32.mrb[0].mxu0
  %v1110 = vpop.f32.mrb[0].mxu0
  %v1111 = vadd.f32 0.0, %v1110
  %v1112 = vpop.f32.mrb[0].mxu0
  %1113 = vmatprep.mubr.bf16.mxu0 0
  %1114 = vmatmul.mubr.bf16.gmra.mrb[0].mxu0 %v932
  %v1115 = vpop.f32.mrb[0].mxu0
  %v1116 = vadd.f32 0.0, %v1115
  %v1117 = vpop.f32.mrb[0].mxu0
  %v1118 = vpop.f32.mrb[0].mxu0
  %v1119 = vadd.f32 0.0, %v1118
  %v1120 = vpop.f32.mrb[0].mxu0
  %1121 = vmatprep.mubr.bf16.mxu0 0
  %1122 = vmatmul.mubr.bf16.gmra.mrb[0].mxu0 %v935
  %v1123 = vpop.f32.mrb[0].mxu0
  %v1124 = vadd.f32 0.0, %v1123
  %v1125 = vpop.f32.mrb[0].mxu0
  %v1126 = vpop.f32.mrb[0].mxu0
  %v1127 = vadd.f32 0.0, %v1126
  %v1128 = vpop.f32.mrb[0].mxu0
  %1129 = vmatprep.mubr.bf16.mxu0 0
  %1130 = vmatmul.mubr.bf16.gmra.mrb[0].mxu0 %v938
  %v1131 = vpop.f32.mrb[0].mxu0
  %v1132 = vadd.f32 0.0, %v1131
  %v1133 = vpop.f32.mrb[0].mxu0
  %v1134 = vpop.f32.mrb[0].mxu0
  %v1135 = vadd.f32 0.0, %v1134
  %v1136 = vpop.f32.mrb[0].mxu0
  %1137 = vmatprep.mubr.bf16.mxu0 0
  %1138 = vmatmul.mubr.bf16.gmra.mrb[0].mxu0 %v941
  %v1139 = vpop.f32.mrb[0].mxu0
  %v1140 = vadd.f32 0.0, %v1139
  %v1141 = vpop.f32.mrb[0].mxu0
  %v1142 = vpop.f32.mrb[0].mxu0
  %v1143 = vadd.f32 0.0, %v1142
  %v1144 = vpop.f32.mrb[0].mxu0
  %1145 = vmatprep.mubr.bf16.mxu0 0
  %1146 = vmatmul.mubr.bf16.gmra.mrb[0].mxu0 %v944
  %v1147 = vpop.f32.mrb[0].mxu0
  %v1148 = vadd.f32 0.0, %v1147
  %v1149 = vpop.f32.mrb[0].mxu0
  %v1150 = vpop.f32.mrb[0].mxu0
  %v1151 = vadd.f32 0.0, %v1150
  %v1152 = vpop.f32.mrb[0].mxu0
  %1153 = vmatprep.mubr.bf16.mxu0 0
  %1154 = vmatmul.mubr.bf16.gmra.mrb[0].mxu0 %v947
  %v1155 = vpop.f32.mrb[0].mxu0
  %v1156 = vadd.f32 0.0, %v1155
  %v1157 = vpop.f32.mrb[0].mxu0
  %v1158 = vpop.f32.mrb[0].mxu0
  %v1159 = vadd.f32 0.0, %v1158
  %v1160 = vpop.f32.mrb[0].mxu0
  %1161 = vmatprep.mubr.bf16.mxu0 0
  %1162 = vmatmul.mubr.bf16.gmra.mrb[0].mxu0 %v950
  %v1163 = vpop.f32.mrb[0].mxu0
  %v1164 = vadd.f32 0.0, %v1163
  %v1165 = vpop.f32.mrb[0].mxu0
  %v1166 = vpop.f32.mrb[0].mxu0
  %v1167 = vadd.f32 0.0, %v1166
  %v1168 = vpop.f32.mrb[0].mxu0
  %1169 = vmatprep.mubr.bf16.mxu0 0
  %1170 = vmatmul.mubr.bf16.gmra.mrb[0].mxu0 %v953
  %v1171 = vpop.f32.mrb[0].mxu0
  %v1172 = vadd.f32 0.0, %v1171
  %v1173 = vpop.f32.mrb[0].mxu0
  %v1174 = vpop.f32.mrb[0].mxu0
  %v1175 = vadd.f32 0.0, %v1174
  %v1176 = vpop.f32.mrb[0].mxu0
  %1177 = vmatprep.mubr.bf16.mxu0 0
  %1178 = vmatmul.mubr.bf16.gmra.mrb[0].mxu0 %v956
  %v1179 = vpop.f32.mrb[0].mxu0
  %v1180 = vadd.f32 0.0, %v1179
  %v1181 = vpop.f32.mrb[0].mxu0
  %v1182 = vpop.f32.mrb[0].mxu0
  %v1183 = vadd.f32 0.0, %v1182
  %v1184 = vpop.f32.mrb[0].mxu0
  %1185 = vmatprep.mubr.bf16.mxu0 0
  %1186 = vmatmul.mubr.bf16.gmra.mrb[0].mxu0 %v959
  %v1187 = vpop.f32.mrb[0].mxu0
  %v1188 = vadd.f32 0.0, %v1187
  %v1189 = vpop.f32.mrb[0].mxu0
  %v1190 = vpop.f32.mrb[0].mxu0
  %v1191 = vpop.f32.mrb[0].mxu0
  %1192 = vdwg.mxu0
  %v1193 = vmul.f32 %v996, %v559
  %v1194 = vmul.f32 %v999, %v559
  %v1195 = vmul.f32 %v1004, %v559
  %v1196 = vmul.f32 %v1007, %v559
  %v1197 = vmul.f32 %v1012, %v559
  %v1198 = vmul.f32 %v1015, %v559
  %v1199 = vmul.f32 %v1020, %v559
  %v1200 = vmul.f32 %v1023, %v559
  %v1201 = vmul.f32 %v1028, %v559
  %v1202 = vmul.f32 %v1031, %v559
  %v1203 = vmul.f32 %v1036, %v559
  %v1204 = vmul.f32 %v1039, %v559
  %v1205 = vmul.f32 %v1044, %v559
  %v1206 = vmul.f32 %v1047, %v559
  %v1207 = vmul.f32 %v1052, %v559
  %v1208 = vmul.f32 %v1055, %v559
  %v1209 = vmul.f32 %v1060, %v559
  %v1210 = vmul.f32 %v1063, %v559
  %v1211 = vmul.f32 %v1068, %v559
  %v1212 = vmul.f32 %v1071, %v559
  %v1213 = vmul.f32 %v1076, %v559
  %v1214 = vmul.f32 %v1079, %v559
  %v1215 = vmul.f32 %v1084, %v559
  %v1216 = vmul.f32 %v1087, %v559
  %v1217 = vmul.f32 %v1092, %v559
  %v1218 = vmul.f32 %v1095, %v559
  %v1219 = vmul.f32 %v1100, %v559
  %v1220 = vmul.f32 %v1103, %v559
  %v1221 = vmul.f32 %v1108, %v559
  %v1222 = vmul.f32 %v1111, %v559
  %v1223 = vmul.f32 %v1116, %v559
  %v1224 = vmul.f32 %v1119, %v559
  %v1225 = vmul.f32 %v1124, %v559
  %v1226 = vmul.f32 %v1127, %v559
  %v1227 = vmul.f32 %v1132, %v559
  %v1228 = vmul.f32 %v1135, %v559
  %v1229 = vmul.f32 %v1140, %v559
  %v1230 = vmul.f32 %v1143, %v559
  %v1231 = vmul.f32 %v1148, %v559
  %v1232 = vmul.f32 %v1151, %v559
  %v1233 = vmul.f32 %v1156, %v559
  %v1234 = vmul.f32 %v1159, %v559
  %v1235 = vmul.f32 %v1164, %v559
  %v1236 = vmul.f32 %v1167, %v559
  %v1237 = vmul.f32 %v1172, %v559
  %v1238 = vmul.f32 %v1175, %v559
  %v1239 = vmul.f32 %v1180, %v559
  %v1240 = vmul.f32 %v1183, %v559
  %v1241 = vmul.f32 %v1188, %v559
  %v1242 = vadd.f32 %v1193, %v614
  %v1243 = vadd.f32 %v1194, %v614
  %v1244 = vadd.f32 %v1195, %v614
  %v1245 = vadd.f32 %v1196, %v614
  %v1246 = vadd.f32 %v1197, %v614
  %v1247 = vadd.f32 %v1198, %v614
  %v1248 = vadd.f32 %v1199, %v614
  %v1249 = vadd.f32 %v1200, %v614
  %v1250 = vadd.f32 %v1201, %v614
  %v1251 = vadd.f32 %v1202, %v614
  %v1252 = vadd.f32 %v1203, %v614
  %v1253 = vadd.f32 %v1204, %v614
  %v1254 = vadd.f32 %v1205, %v614
  %v1255 = vadd.f32 %v1206, %v614
  %v1256 = vadd.f32 %v1207, %v614
  %v1257 = vadd.f32 %v1208, %v614
  %v1258 = vadd.f32 %v1209, %v614
  %v1259 = vadd.f32 %v1210, %v614
  %v1260 = vadd.f32 %v1211, %v614
  %v1261 = vadd.f32 %v1212, %v614
  %v1262 = vadd.f32 %v1213, %v614
  %v1263 = vadd.f32 %v1214, %v614
  %v1264 = vadd.f32 %v1215, %v614
  %v1265 = vadd.f32 %v1216, %v614
  %v1266 = vadd.f32 %v1217, %v614
  %v1267 = vadd.f32 %v1218, %v614
  %v1268 = vadd.f32 %v1219, %v614
  %v1269 = vadd.f32 %v1220, %v614
  %v1270 = vadd.f32 %v1221, %v614
  %v1271 = vadd.f32 %v1222, %v614
  %v1272 = vadd.f32 %v1223, %v614
  %v1273 = vadd.f32 %v1224, %v614
  %v1274 = vadd.f32 %v1225, %v614
  %v1275 = vadd.f32 %v1226, %v614
  %v1276 = vadd.f32 %v1227, %v614
  %v1277 = vadd.f32 %v1228, %v614
  %v1278 = vadd.f32 %v1229, %v614
  %v1279 = vadd.f32 %v1230, %v614
  %v1280 = vadd.f32 %v1231, %v614
  %v1281 = vadd.f32 %v1232, %v614
  %v1282 = vadd.f32 %v1233, %v614
  %v1283 = vadd.f32 %v1234, %v614
  %v1284 = vadd.f32 %v1235, %v614
  %v1285 = vadd.f32 %v1236, %v614
  %v1286 = vadd.f32 %v1237, %v614
  %v1287 = vadd.f32 %v1238, %v614
  %v1288 = vadd.f32 %v1239, %v614
  %v1289 = vadd.f32 %v1240, %v614
  %v1290 = vadd.f32 %v1241, %v614
  %v1291 = vmax.f32 %v1242, 0.0
  %v1292 = vmax.f32 %v1243, 0.0
  %v1293 = vmax.f32 %v1244, 0.0
  %v1294 = vmax.f32 %v1245, 0.0
  %v1295 = vmax.f32 %v1246, 0.0
  %v1296 = vmax.f32 %v1247, 0.0
  %v1297 = vmax.f32 %v1248, 0.0
  %v1298 = vmax.f32 %v1249, 0.0
  %v1299 = vmax.f32 %v1250, 0.0
  %v1300 = vmax.f32 %v1251, 0.0
  %v1301 = vmax.f32 %v1252, 0.0
  %v1302 = vmax.f32 %v1253, 0.0
  %v1303 = vmax.f32 %v1254, 0.0
  %v1304 = vmax.f32 %v1255, 0.0
  %v1305 = vmax.f32 %v1256, 0.0
  %v1306 = vmax.f32 %v1257, 0.0
  %v1307 = vmax.f32 %v1258, 0.0
  %v1308 = vmax.f32 %v1259, 0.0
  %v1309 = vmax.f32 %v1260, 0.0
  %v1310 = vmax.f32 %v1261, 0.0
  %v1311 = vmax.f32 %v1262, 0.0
  %v1312 = vmax.f32 %v1263, 0.0
  %v1313 = vmax.f32 %v1264, 0.0
  %v1314 = vmax.f32 %v1265, 0.0
  %v1315 = vmax.f32 %v1266, 0.0
  %v1316 = vmax.f32 %v1267, 0.0
  %v1317 = vmax.f32 %v1268, 0.0
  %v1318 = vmax.f32 %v1269, 0.0
  %v1319 = vmax.f32 %v1270, 0.0
  %v1320 = vmax.f32 %v1271, 0.0
  %v1321 = vmax.f32 %v1272, 0.0
  %v1322 = vmax.f32 %v1273, 0.0
  %v1323 = vmax.f32 %v1274, 0.0
  %v1324 = vmax.f32 %v1275, 0.0
  %v1325 = vmax.f32 %v1276, 0.0
  %v1326 = vmax.f32 %v1277, 0.0
  %v1327 = vmax.f32 %v1278, 0.0
  %v1328 = vmax.f32 %v1279, 0.0
  %v1329 = vmax.f32 %v1280, 0.0
  %v1330 = vmax.f32 %v1281, 0.0
  %v1331 = vmax.f32 %v1282, 0.0
  %v1332 = vmax.f32 %v1283, 0.0
  %v1333 = vmax.f32 %v1284, 0.0
  %v1334 = vmax.f32 %v1285, 0.0
  %v1335 = vmax.f32 %v1286, 0.0
  %v1336 = vmax.f32 %v1287, 0.0
  %v1337 = vmax.f32 %v1288, 0.0
  %v1338 = vmax.f32 %v1289, 0.0
  %v1339 = vmax.f32 %v1290, 0.0
  %v1340 = vmax.f32 %v665, %v1291
  %v1341 = vmax.f32 %v666, %v1292
  %v1342 = vmax.f32 %v667, %v1293
  %v1343 = vmax.f32 %v668, %v1294
  %v1344 = vmax.f32 %v669, %v1295
  %v1345 = vmax.f32 %v670, %v1296
  %v1346 = vmax.f32 %v671, %v1297
  %v1347 = vmax.f32 %v672, %v1298
  %v1348 = vmax.f32 %v673, %v1299
  %v1349 = vmax.f32 %v674, %v1300
  %v1350 = vmax.f32 %v675, %v1301
  %v1351 = vmax.f32 %v676, %v1302
  %v1352 = vmax.f32 %v677, %v1303
  %v1353 = vmax.f32 %v678, %v1304
  %v1354 = vmax.f32 %v679, %v1305
  %v1355 = vmax.f32 %v680, %v1306
  %v1356 = vmax.f32 %v681, %v1307
  %v1357 = vmax.f32 %v682, %v1308
  %v1358 = vmax.f32 %v683, %v1309
  %v1359 = vmax.f32 %v684, %v1310
  %v1360 = vmax.f32 %v685, %v1311
  %v1361 = vmax.f32 %v686, %v1312
  %v1362 = vmax.f32 %v687, %v1313
  %v1363 = vmax.f32 %v688, %v1314
  %v1364 = vmax.f32 %v689, %v1315
  %v1365 = vmax.f32 %v690, %v1316
  %v1366 = vmax.f32 %v691, %v1317
  %v1367 = vmax.f32 %v692, %v1318
  %v1368 = vmax.f32 %v693, %v1319
  %v1369 = vmax.f32 %v694, %v1320
  %v1370 = vmax.f32 %v695, %v1321
  %v1371 = vmax.f32 %v696, %v1322
  %v1372 = vmax.f32 %v697, %v1323
  %v1373 = vmax.f32 %v698, %v1324
  %v1374 = vmax.f32 %v699, %v1325
  %v1375 = vmax.f32 %v700, %v1326
  %v1376 = vmax.f32 %v701, %v1327
  %v1377 = vmax.f32 %v702, %v1328
  %v1378 = vmax.f32 %v703, %v1329
  %v1379 = vmax.f32 %v704, %v1330
  %v1380 = vmax.f32 %v705, %v1331
  %v1381 = vmax.f32 %v706, %v1332
  %v1382 = vmax.f32 %v707, %v1333
  %v1383 = vmax.f32 %v708, %v1334
  %v1384 = vmax.f32 %v709, %v1335
  %v1385 = vmax.f32 %v710, %v1336
  %v1386 = vmax.f32 %v711, %v1337
  %v1387 = vmax.f32 %v712, %v1338
  %v1388 = vmax.f32 %v713, %v1339
  %v1389 = vld [vmem:[%s2] sm:$0xf]
  %v1390 = vld [vmem:[%s2 + $0x4] sm:$0xf]
  %v1391 = vld [vmem:[%s2 + $0x8] sm:$0xf]
  %v1392 = vld [vmem:[%s2 + $0xc] sm:$0xf]
  %v1393 = vld [vmem:[%s2 + $0x10] sm:$0xf]
  %v1394 = vld [vmem:[%s2 + $0x14] sm:$0xf]
  %v1395 = vld [vmem:[%s2 + $0x18] sm:$0xf]
  %v1396 = vld [vmem:[%s2 + $0x1c] sm:$0xf]
  %v1397 = vld [vmem:[%s2 + $0x20] sm:$0xf]
  %v1398 = vld [vmem:[%s2 + $0x24] sm:$0xf]
  %v1399 = vld [vmem:[%s2 + $0x28] sm:$0xf]
  %v1400 = vld [vmem:[%s2 + $0x2c] sm:$0xf]
  %v1401 = vld [vmem:[%s2 + $0x30] sm:$0xf]
  %v1402 = vld [vmem:[%s2 + $0x34] sm:$0xf]
  %v1403 = vld [vmem:[%s2 + $0x38] sm:$0xf]
  %v1404 = vld [vmem:[%s2 + $0x3c] sm:$0xf]
  %v1405 = vld [vmem:[%s2 + $0x40] sm:$0xf]
  %v1406 = vld [vmem:[%s2 + $0x44] sm:$0xf]
  %v1407 = vld [vmem:[%s2 + $0x48] sm:$0xf]
  %v1408 = vld [vmem:[%s2 + $0x4c] sm:$0xf]
  %v1409 = vld [vmem:[%s2 + $0x50] sm:$0xf]
  %v1410 = vld [vmem:[%s2 + $0x54] sm:$0xf]
  %v1411 = vld [vmem:[%s2 + $0x58] sm:$0xf]
  %v1412 = vld [vmem:[%s2 + $0x5c] sm:$0xf]
  %v1413 = vld [vmem:[%s2 + $0x60] sm:$0xf]
  %v1414 = vld [vmem:[%s2 + $0x64] sm:$0xf]
  %v1415 = vld [vmem:[%s2 + $0x68] sm:$0xf]
  %v1416 = vld [vmem:[%s2 + $0x6c] sm:$0xf]
  %v1417 = vld [vmem:[%s2 + $0x70] sm:$0xf]
  %v1418 = vld [vmem:[%s2 + $0x74] sm:$0xf]
  %v1419 = vld [vmem:[%s2 + $0x78] sm:$0xf]
  %v1420 = vld [vmem:[%s2 + $0x7c] sm:$0xf]
  %v1421 = vld [vmem:[%s2 + $0x80] sm:$0xf]
  %v1422 = vld [vmem:[%s2 + $0x84] sm:$0xf]
  %v1423 = vld [vmem:[%s2 + $0x88] sm:$0xf]
  %v1424 = vld [vmem:[%s2 + $0x8c] sm:$0xf]
  %v1425 = vld [vmem:[%s2 + $0x90] sm:$0xf]
  %v1426 = vld [vmem:[%s2 + $0x94] sm:$0xf]
  %v1427 = vld [vmem:[%s2 + $0x98] sm:$0xf]
  %v1428 = vld [vmem:[%s2 + $0x9c] sm:$0xf]
  %v1429 = vld [vmem:[%s2 + $0xa0] sm:$0xf]
  %v1430 = vld [vmem:[%s2 + $0xa4] sm:$0xf]
  %v1431 = vld [vmem:[%s2 + $0xa8] sm:$0xf]
  %v1432 = vld [vmem:[%s2 + $0xac] sm:$0xf]
  %v1433 = vld [vmem:[%s2 + $0xb0] sm:$0xf]
  %v1434 = vld [vmem:[%s2 + $0xb4] sm:$0xf]
  %v1435 = vld [vmem:[%s2 + $0xb8] sm:$0xf]
  %v1436 = vld [vmem:[%s2 + $0xbc] sm:$0xf]
  %v1437 = vld [vmem:[%s2 + $0xc0] sm:$0xf]
  %v1487 = vunpack.c.l.b16 %v1389
  %v1488 = vunpack.c.l.b16 %v1390
  %v1489 = vunpack.c.l.b16 %v1391
  %v1490 = vunpack.c.l.b16 %v1392
  %v1491 = vunpack.c.l.b16 %v1393
  %v1492 = vunpack.c.l.b16 %v1394
  %v1493 = vunpack.c.l.b16 %v1395
  %v1494 = vunpack.c.l.b16 %v1396
  %v1495 = vunpack.c.l.b16 %v1397
  %v1496 = vunpack.c.l.b16 %v1398
  %v1497 = vunpack.c.l.b16 %v1399
  %v1498 = vunpack.c.l.b16 %v1400
  %v1499 = vunpack.c.l.b16 %v1401
  %v1500 = vunpack.c.l.b16 %v1402
  %v1501 = vunpack.c.l.b16 %v1403
  %v1502 = vunpack.c.l.b16 %v1404
  %v1503 = vunpack.c.l.b16 %v1405
  %v1504 = vunpack.c.l.b16 %v1406
  %v1505 = vunpack.c.l.b16 %v1407
  %v1506 = vunpack.c.l.b16 %v1408
  %v1507 = vunpack.c.l.b16 %v1409
  %v1508 = vunpack.c.l.b16 %v1410
  %v1509 = vunpack.c.l.b16 %v1411
  %v1510 = vunpack.c.l.b16 %v1412
  %v1511 = vunpack.c.l.b16 %v1413
  %v1512 = vunpack.c.l.b16 %v1414
  %v1513 = vunpack.c.l.b16 %v1415
  %v1514 = vunpack.c.l.b16 %v1416
  %v1515 = vunpack.c.l.b16 %v1417
  %v1516 = vunpack.c.l.b16 %v1418
  %v1517 = vunpack.c.l.b16 %v1419
  %v1518 = vunpack.c.l.b16 %v1420
  %v1519 = vunpack.c.l.b16 %v1421
  %v1520 = vunpack.c.l.b16 %v1422
  %v1521 = vunpack.c.l.b16 %v1423
  %v1522 = vunpack.c.l.b16 %v1424
  %v1523 = vunpack.c.l.b16 %v1425
  %v1524 = vunpack.c.l.b16 %v1426
  %v1525 = vunpack.c.l.b16 %v1427
  %v1526 = vunpack.c.l.b16 %v1428
  %v1527 = vunpack.c.l.b16 %v1429
  %v1528 = vunpack.c.l.b16 %v1430
  %v1529 = vunpack.c.l.b16 %v1431
  %v1530 = vunpack.c.l.b16 %v1432
  %v1531 = vunpack.c.l.b16 %v1433
  %v1532 = vunpack.c.l.b16 %v1434
  %v1533 = vunpack.c.l.b16 %v1435
  %v1534 = vunpack.c.l.b16 %v1436
  %v1535 = vunpack.c.l.b16 %v1437
  %v1536 = vpack.c.b16 %v1488, %v1487
  %v1537 = vpack.c.b16 %v1490, %v1489
  %v1538 = vpack.c.b16 %v1492, %v1491
  %v1539 = vpack.c.b16 %v1494, %v1493
  %v1540 = vpack.c.b16 %v1496, %v1495
  %v1541 = vpack.c.b16 %v1498, %v1497
  %v1542 = vpack.c.b16 %v1500, %v1499
  %v1543 = vpack.c.b16 %v1502, %v1501
  %v1544 = vpack.c.b16 %v1504, %v1503
  %v1545 = vpack.c.b16 %v1506, %v1505
  %v1546 = vpack.c.b16 %v1508, %v1507
  %v1547 = vpack.c.b16 %v1510, %v1509
  %v1548 = vpack.c.b16 %v1512, %v1511
  %v1549 = vpack.c.b16 %v1514, %v1513
  %v1550 = vpack.c.b16 %v1516, %v1515
  %v1551 = vpack.c.b16 %v1518, %v1517
  %v1552 = vpack.c.b16 %v1520, %v1519
  %v1553 = vpack.c.b16 %v1522, %v1521
  %v1554 = vpack.c.b16 %v1524, %v1523
  %v1555 = vpack.c.b16 %v1526, %v1525
  %v1556 = vpack.c.b16 %v1528, %v1527
  %v1557 = vpack.c.b16 %v1530, %v1529
  %v1558 = vpack.c.b16 %v1532, %v1531
  %v1559 = vpack.c.b16 %v1534, %v1533
  %v1560 = vpack.c.b16 %v1535, %v1535
  %v1562 = vsel %vm240, %v1536, 0
  %v1565 = vsel %vm240, %v1537, 0
  %v1568 = vsel %vm240, %v1538, 0
  %v1571 = vsel %vm240, %v1539, 0
  %v1574 = vsel %vm240, %v1540, 0
  %v1577 = vsel %vm240, %v1541, 0
  %v1580 = vsel %vm240, %v1542, 0
  %v1583 = vsel %vm240, %v1543, 0
  %v1586 = vsel %vm240, %v1544, 0
  %v1589 = vsel %vm240, %v1545, 0
  %v1592 = vsel %vm240, %v1546, 0
  %v1595 = vsel %vm240, %v1547, 0
  %v1598 = vsel %vm240, %v1548, 0
  %v1601 = vsel %vm240, %v1549, 0
  %v1604 = vsel %vm240, %v1550, 0
  %v1607 = vsel %vm240, %v1551, 0
  %v1610 = vsel %vm240, %v1552, 0
  %v1613 = vsel %vm240, %v1553, 0
  %v1616 = vsel %vm240, %v1554, 0
  %v1619 = vsel %vm240, %v1555, 0
  %v1622 = vsel %vm240, %v1556, 0
  %v1625 = vsel %vm240, %v1557, 0
  %v1628 = vsel %vm240, %v1558, 0
  %v1631 = vsel %vm240, %v1559, 0
  %v1634 = vsel %vm240, %v1560, 0
  %1636 = vmatprep.subr.bf16.mxu0 0
  %1637 = vmatpush1.bf16.msra.mxu0 %v231
  %1638 = vmatprep.subr.bf16.mxu0 0
  %1639 = vmatpush1.bf16.msra.mxu0 %v232
  %1640 = vmatprep.subr.bf16.mxu0 0
  %1641 = vmatpush1.bf16.msra.mxu0 %v233
  %1642 = vmatprep.subr.bf16.mxu0 0
  %1643 = vmatpush1.bf16.msra.mxu0 %v234
  %1644 = vmatprep.subr.bf16.mxu0 0
  %1645 = vmatpush1.bf16.msra.mxu0 %v321
  %1646 = vmatprep.subr.bf16.mxu0 0
  %1647 = vmatpush1.bf16.msra.mxu0 0
  %1648 = vmatprep.subr.bf16.mxu0 0
  %1649 = vmatpush1.bf16.msra.mxu0 0
  %1650 = vmatprep.subr.bf16.mxu0 0
  %1651 = vmatpush1.bf16.msra.mxu0 0
  %1652 = vmatprep.subr.bf16.mxu0 0
  %1653 = vmatpush1.bf16.msra.mxu0 0
  %1654 = vmatprep.subr.bf16.mxu0 0
  %1655 = vmatpush1.bf16.msra.mxu0 0
  %1656 = vmatprep.subr.bf16.mxu0 0
  %1657 = vmatpush1.bf16.msra.mxu0 0
  %1658 = vmatprep.subr.bf16.mxu0 0
  %1659 = vmatpush1.bf16.msra.mxu0 0
  %1660 = vmatprep.subr.bf16.mxu0 0
  %1661 = vmatpush1.bf16.msra.mxu0 0
  %1662 = vmatprep.subr.bf16.mxu0 0
  %1663 = vmatpush1.bf16.msra.mxu0 0
  %1664 = vmatprep.subr.bf16.mxu0 0
  %1665 = vmatpush1.bf16.msra.mxu0 0
  %1666 = vmatprep.subr.bf16.mxu0 0
  %1667 = vmatpush1.bf16.msra.mxu0 0
  %1668 = vmatprep.mubr.bf16.mxu0 0
  %1669 = vmatmul.mubr.bf16.gmra.mrb[0].mxu0 %v1562
  %v1670 = vpop.f32.mrb[0].mxu0
  %v1671 = vadd.f32 0.0, %v1670
  %v1672 = vpop.f32.mrb[0].mxu0
  %v1673 = vpop.f32.mrb[0].mxu0
  %v1674 = vadd.f32 0.0, %v1673
  %v1675 = vpop.f32.mrb[0].mxu0
  %1676 = vmatprep.mubr.bf16.mxu0 0
  %1677 = vmatmul.mubr.bf16.gmra.mrb[0].mxu0 %v1565
  %v1678 = vpop.f32.mrb[0].mxu0
  %v1679 = vadd.f32 0.0, %v1678
  %v1680 = vpop.f32.mrb[0].mxu0
  %v1681 = vpop.f32.mrb[0].mxu0
  %v1682 = vadd.f32 0.0, %v1681
  %v1683 = vpop.f32.mrb[0].mxu0
  %1684 = vmatprep.mubr.bf16.mxu0 0
  %1685 = vmatmul.mubr.bf16.gmra.mrb[0].mxu0 %v1568
  %v1686 = vpop.f32.mrb[0].mxu0
  %v1687 = vadd.f32 0.0, %v1686
  %v1688 = vpop.f32.mrb[0].mxu0
  %v1689 = vpop.f32.mrb[0].mxu0
  %v1690 = vadd.f32 0.0, %v1689
  %v1691 = vpop.f32.mrb[0].mxu0
  %1692 = vmatprep.mubr.bf16.mxu0 0
  %1693 = vmatmul.mubr.bf16.gmra.mrb[0].mxu0 %v1571
  %v1694 = vpop.f32.mrb[0].mxu0
  %v1695 = vadd.f32 0.0, %v1694
  %v1696 = vpop.f32.mrb[0].mxu0
  %v1697 = vpop.f32.mrb[0].mxu0
  %v1698 = vadd.f32 0.0, %v1697
  %v1699 = vpop.f32.mrb[0].mxu0
  %1700 = vmatprep.mubr.bf16.mxu0 0
  %1701 = vmatmul.mubr.bf16.gmra.mrb[0].mxu0 %v1574
  %v1702 = vpop.f32.mrb[0].mxu0
  %v1703 = vadd.f32 0.0, %v1702
  %v1704 = vpop.f32.mrb[0].mxu0
  %v1705 = vpop.f32.mrb[0].mxu0
  %v1706 = vadd.f32 0.0, %v1705
  %v1707 = vpop.f32.mrb[0].mxu0
  %1708 = vmatprep.mubr.bf16.mxu0 0
  %1709 = vmatmul.mubr.bf16.gmra.mrb[0].mxu0 %v1577
  %v1710 = vpop.f32.mrb[0].mxu0
  %v1711 = vadd.f32 0.0, %v1710
  %v1712 = vpop.f32.mrb[0].mxu0
  %v1713 = vpop.f32.mrb[0].mxu0
  %v1714 = vadd.f32 0.0, %v1713
  %v1715 = vpop.f32.mrb[0].mxu0
  %1716 = vmatprep.mubr.bf16.mxu0 0
  %1717 = vmatmul.mubr.bf16.gmra.mrb[0].mxu0 %v1580
  %v1718 = vpop.f32.mrb[0].mxu0
  %v1719 = vadd.f32 0.0, %v1718
  %v1720 = vpop.f32.mrb[0].mxu0
  %v1721 = vpop.f32.mrb[0].mxu0
  %v1722 = vadd.f32 0.0, %v1721
  %v1723 = vpop.f32.mrb[0].mxu0
  %1724 = vmatprep.mubr.bf16.mxu0 0
  %1725 = vmatmul.mubr.bf16.gmra.mrb[0].mxu0 %v1583
  %v1726 = vpop.f32.mrb[0].mxu0
  %v1727 = vadd.f32 0.0, %v1726
  %v1728 = vpop.f32.mrb[0].mxu0
  %v1729 = vpop.f32.mrb[0].mxu0
  %v1730 = vadd.f32 0.0, %v1729
  %v1731 = vpop.f32.mrb[0].mxu0
  %1732 = vmatprep.mubr.bf16.mxu0 0
  %1733 = vmatmul.mubr.bf16.gmra.mrb[0].mxu0 %v1586
  %v1734 = vpop.f32.mrb[0].mxu0
  %v1735 = vadd.f32 0.0, %v1734
  %v1736 = vpop.f32.mrb[0].mxu0
  %v1737 = vpop.f32.mrb[0].mxu0
  %v1738 = vadd.f32 0.0, %v1737
  %v1739 = vpop.f32.mrb[0].mxu0
  %1740 = vmatprep.mubr.bf16.mxu0 0
  %1741 = vmatmul.mubr.bf16.gmra.mrb[0].mxu0 %v1589
  %v1742 = vpop.f32.mrb[0].mxu0
  %v1743 = vadd.f32 0.0, %v1742
  %v1744 = vpop.f32.mrb[0].mxu0
  %v1745 = vpop.f32.mrb[0].mxu0
  %v1746 = vadd.f32 0.0, %v1745
  %v1747 = vpop.f32.mrb[0].mxu0
  %1748 = vmatprep.mubr.bf16.mxu0 0
  %1749 = vmatmul.mubr.bf16.gmra.mrb[0].mxu0 %v1592
  %v1750 = vpop.f32.mrb[0].mxu0
  %v1751 = vadd.f32 0.0, %v1750
  %v1752 = vpop.f32.mrb[0].mxu0
  %v1753 = vpop.f32.mrb[0].mxu0
  %v1754 = vadd.f32 0.0, %v1753
  %v1755 = vpop.f32.mrb[0].mxu0
  %1756 = vmatprep.mubr.bf16.mxu0 0
  %1757 = vmatmul.mubr.bf16.gmra.mrb[0].mxu0 %v1595
  %v1758 = vpop.f32.mrb[0].mxu0
  %v1759 = vadd.f32 0.0, %v1758
  %v1760 = vpop.f32.mrb[0].mxu0
  %v1761 = vpop.f32.mrb[0].mxu0
  %v1762 = vadd.f32 0.0, %v1761
  %v1763 = vpop.f32.mrb[0].mxu0
  %1764 = vmatprep.mubr.bf16.mxu0 0
  %1765 = vmatmul.mubr.bf16.gmra.mrb[0].mxu0 %v1598
  %v1766 = vpop.f32.mrb[0].mxu0
  %v1767 = vadd.f32 0.0, %v1766
  %v1768 = vpop.f32.mrb[0].mxu0
  %v1769 = vpop.f32.mrb[0].mxu0
  %v1770 = vadd.f32 0.0, %v1769
  %v1771 = vpop.f32.mrb[0].mxu0
  %1772 = vmatprep.mubr.bf16.mxu0 0
  %1773 = vmatmul.mubr.bf16.gmra.mrb[0].mxu0 %v1601
  %v1774 = vpop.f32.mrb[0].mxu0
  %v1775 = vadd.f32 0.0, %v1774
  %v1776 = vpop.f32.mrb[0].mxu0
  %v1777 = vpop.f32.mrb[0].mxu0
  %v1778 = vadd.f32 0.0, %v1777
  %v1779 = vpop.f32.mrb[0].mxu0
  %1780 = vmatprep.mubr.bf16.mxu0 0
  %1781 = vmatmul.mubr.bf16.gmra.mrb[0].mxu0 %v1604
  %v1782 = vpop.f32.mrb[0].mxu0
  %v1783 = vadd.f32 0.0, %v1782
  %v1784 = vpop.f32.mrb[0].mxu0
  %v1785 = vpop.f32.mrb[0].mxu0
  %v1786 = vadd.f32 0.0, %v1785
  %v1787 = vpop.f32.mrb[0].mxu0
  %1788 = vmatprep.mubr.bf16.mxu0 0
  %1789 = vmatmul.mubr.bf16.gmra.mrb[0].mxu0 %v1607
  %v1790 = vpop.f32.mrb[0].mxu0
  %v1791 = vadd.f32 0.0, %v1790
  %v1792 = vpop.f32.mrb[0].mxu0
  %v1793 = vpop.f32.mrb[0].mxu0
  %v1794 = vadd.f32 0.0, %v1793
  %v1795 = vpop.f32.mrb[0].mxu0
  %1796 = vmatprep.mubr.bf16.mxu0 0
  %1797 = vmatmul.mubr.bf16.gmra.mrb[0].mxu0 %v1610
  %v1798 = vpop.f32.mrb[0].mxu0
  %v1799 = vadd.f32 0.0, %v1798
  %v1800 = vpop.f32.mrb[0].mxu0
  %v1801 = vpop.f32.mrb[0].mxu0
  %v1802 = vadd.f32 0.0, %v1801
  %v1803 = vpop.f32.mrb[0].mxu0
  %1804 = vmatprep.mubr.bf16.mxu0 0
  %1805 = vmatmul.mubr.bf16.gmra.mrb[0].mxu0 %v1613
  %v1806 = vpop.f32.mrb[0].mxu0
  %v1807 = vadd.f32 0.0, %v1806
  %v1808 = vpop.f32.mrb[0].mxu0
  %v1809 = vpop.f32.mrb[0].mxu0
  %v1810 = vadd.f32 0.0, %v1809
  %v1811 = vpop.f32.mrb[0].mxu0
  %1812 = vmatprep.mubr.bf16.mxu0 0
  %1813 = vmatmul.mubr.bf16.gmra.mrb[0].mxu0 %v1616
  %v1814 = vpop.f32.mrb[0].mxu0
  %v1815 = vadd.f32 0.0, %v1814
  %v1816 = vpop.f32.mrb[0].mxu0
  %v1817 = vpop.f32.mrb[0].mxu0
  %v1818 = vadd.f32 0.0, %v1817
  %v1819 = vpop.f32.mrb[0].mxu0
  %1820 = vmatprep.mubr.bf16.mxu0 0
  %1821 = vmatmul.mubr.bf16.gmra.mrb[0].mxu0 %v1619
  %v1822 = vpop.f32.mrb[0].mxu0
  %v1823 = vadd.f32 0.0, %v1822
  %v1824 = vpop.f32.mrb[0].mxu0
  %v1825 = vpop.f32.mrb[0].mxu0
  %v1826 = vadd.f32 0.0, %v1825
  %v1827 = vpop.f32.mrb[0].mxu0
  %1828 = vmatprep.mubr.bf16.mxu0 0
  %1829 = vmatmul.mubr.bf16.gmra.mrb[0].mxu0 %v1622
  %v1830 = vpop.f32.mrb[0].mxu0
  %v1831 = vadd.f32 0.0, %v1830
  %v1832 = vpop.f32.mrb[0].mxu0
  %v1833 = vpop.f32.mrb[0].mxu0
  %v1834 = vadd.f32 0.0, %v1833
  %v1835 = vpop.f32.mrb[0].mxu0
  %1836 = vmatprep.mubr.bf16.mxu0 0
  %1837 = vmatmul.mubr.bf16.gmra.mrb[0].mxu0 %v1625
  %v1838 = vpop.f32.mrb[0].mxu0
  %v1839 = vadd.f32 0.0, %v1838
  %v1840 = vpop.f32.mrb[0].mxu0
  %v1841 = vpop.f32.mrb[0].mxu0
  %v1842 = vadd.f32 0.0, %v1841
  %v1843 = vpop.f32.mrb[0].mxu0
  %1844 = vmatprep.mubr.bf16.mxu0 0
  %1845 = vmatmul.mubr.bf16.gmra.mrb[0].mxu0 %v1628
  %v1846 = vpop.f32.mrb[0].mxu0
  %v1847 = vadd.f32 0.0, %v1846
  %v1848 = vpop.f32.mrb[0].mxu0
  %v1849 = vpop.f32.mrb[0].mxu0
  %v1850 = vadd.f32 0.0, %v1849
  %v1851 = vpop.f32.mrb[0].mxu0
  %1852 = vmatprep.mubr.bf16.mxu0 0
  %1853 = vmatmul.mubr.bf16.gmra.mrb[0].mxu0 %v1631
  %v1854 = vpop.f32.mrb[0].mxu0
  %v1855 = vadd.f32 0.0, %v1854
  %v1856 = vpop.f32.mrb[0].mxu0
  %v1857 = vpop.f32.mrb[0].mxu0
  %v1858 = vadd.f32 0.0, %v1857
  %v1859 = vpop.f32.mrb[0].mxu0
  %1860 = vmatprep.mubr.bf16.mxu0 0
  %1861 = vmatmul.mubr.bf16.gmra.mrb[0].mxu0 %v1634
  %v1862 = vpop.f32.mrb[0].mxu0
  %v1863 = vadd.f32 0.0, %v1862
  %v1864 = vpop.f32.mrb[0].mxu0
  %v1865 = vpop.f32.mrb[0].mxu0
  %v1866 = vpop.f32.mrb[0].mxu0
  %1867 = vdwg.mxu0
  %v1868 = vmul.f32 %v1671, %v559
  %v1869 = vmul.f32 %v1674, %v559
  %v1870 = vmul.f32 %v1679, %v559
  %v1871 = vmul.f32 %v1682, %v559
  %v1872 = vmul.f32 %v1687, %v559
  %v1873 = vmul.f32 %v1690, %v559
  %v1874 = vmul.f32 %v1695, %v559
  %v1875 = vmul.f32 %v1698, %v559
  %v1876 = vmul.f32 %v1703, %v559
  %v1877 = vmul.f32 %v1706, %v559
  %v1878 = vmul.f32 %v1711, %v559
  %v1879 = vmul.f32 %v1714, %v559
  %v1880 = vmul.f32 %v1719, %v559
  %v1881 = vmul.f32 %v1722, %v559
  %v1882 = vmul.f32 %v1727, %v559
  %v1883 = vmul.f32 %v1730, %v559
  %v1884 = vmul.f32 %v1735, %v559
  %v1885 = vmul.f32 %v1738, %v559
  %v1886 = vmul.f32 %v1743, %v559
  %v1887 = vmul.f32 %v1746, %v559
  %v1888 = vmul.f32 %v1751, %v559
  %v1889 = vmul.f32 %v1754, %v559
  %v1890 = vmul.f32 %v1759, %v559
  %v1891 = vmul.f32 %v1762, %v559
  %v1892 = vmul.f32 %v1767, %v559
  %v1893 = vmul.f32 %v1770, %v559
  %v1894 = vmul.f32 %v1775, %v559
  %v1895 = vmul.f32 %v1778, %v559
  %v1896 = vmul.f32 %v1783, %v559
  %v1897 = vmul.f32 %v1786, %v559
  %v1898 = vmul.f32 %v1791, %v559
  %v1899 = vmul.f32 %v1794, %v559
  %v1900 = vmul.f32 %v1799, %v559
  %v1901 = vmul.f32 %v1802, %v559
  %v1902 = vmul.f32 %v1807, %v559
  %v1903 = vmul.f32 %v1810, %v559
  %v1904 = vmul.f32 %v1815, %v559
  %v1905 = vmul.f32 %v1818, %v559
  %v1906 = vmul.f32 %v1823, %v559
  %v1907 = vmul.f32 %v1826, %v559
  %v1908 = vmul.f32 %v1831, %v559
  %v1909 = vmul.f32 %v1834, %v559
  %v1910 = vmul.f32 %v1839, %v559
  %v1911 = vmul.f32 %v1842, %v559
  %v1912 = vmul.f32 %v1847, %v559
  %v1913 = vmul.f32 %v1850, %v559
  %v1914 = vmul.f32 %v1855, %v559
  %v1915 = vmul.f32 %v1858, %v559
  %v1916 = vmul.f32 %v1863, %v559
  %v1917 = vadd.f32 %v1868, %v614
  %v1918 = vadd.f32 %v1869, %v614
  %v1919 = vadd.f32 %v1870, %v614
  %v1920 = vadd.f32 %v1871, %v614
  %v1921 = vadd.f32 %v1872, %v614
  %v1922 = vadd.f32 %v1873, %v614
  %v1923 = vadd.f32 %v1874, %v614
  %v1924 = vadd.f32 %v1875, %v614
  %v1925 = vadd.f32 %v1876, %v614
  %v1926 = vadd.f32 %v1877, %v614
  %v1927 = vadd.f32 %v1878, %v614
  %v1928 = vadd.f32 %v1879, %v614
  %v1929 = vadd.f32 %v1880, %v614
  %v1930 = vadd.f32 %v1881, %v614
  %v1931 = vadd.f32 %v1882, %v614
  %v1932 = vadd.f32 %v1883, %v614
  %v1933 = vadd.f32 %v1884, %v614
  %v1934 = vadd.f32 %v1885, %v614
  %v1935 = vadd.f32 %v1886, %v614
  %v1936 = vadd.f32 %v1887, %v614
  %v1937 = vadd.f32 %v1888, %v614
  %v1938 = vadd.f32 %v1889, %v614
  %v1939 = vadd.f32 %v1890, %v614
  %v1940 = vadd.f32 %v1891, %v614
  %v1941 = vadd.f32 %v1892, %v614
  %v1942 = vadd.f32 %v1893, %v614
  %v1943 = vadd.f32 %v1894, %v614
  %v1944 = vadd.f32 %v1895, %v614
  %v1945 = vadd.f32 %v1896, %v614
  %v1946 = vadd.f32 %v1897, %v614
  %v1947 = vadd.f32 %v1898, %v614
  %v1948 = vadd.f32 %v1899, %v614
  %v1949 = vadd.f32 %v1900, %v614
  %v1950 = vadd.f32 %v1901, %v614
  %v1951 = vadd.f32 %v1902, %v614
  %v1952 = vadd.f32 %v1903, %v614
  %v1953 = vadd.f32 %v1904, %v614
  %v1954 = vadd.f32 %v1905, %v614
  %v1955 = vadd.f32 %v1906, %v614
  %v1956 = vadd.f32 %v1907, %v614
  %v1957 = vadd.f32 %v1908, %v614
  %v1958 = vadd.f32 %v1909, %v614
  %v1959 = vadd.f32 %v1910, %v614
  %v1960 = vadd.f32 %v1911, %v614
  %v1961 = vadd.f32 %v1912, %v614
  %v1962 = vadd.f32 %v1913, %v614
  %v1963 = vadd.f32 %v1914, %v614
  %v1964 = vadd.f32 %v1915, %v614
  %v1965 = vadd.f32 %v1916, %v614
  %v1966 = vmax.f32 %v1917, 0.0
  %v1967 = vmax.f32 %v1918, 0.0
  %v1968 = vmax.f32 %v1919, 0.0
  %v1969 = vmax.f32 %v1920, 0.0
  %v1970 = vmax.f32 %v1921, 0.0
  %v1971 = vmax.f32 %v1922, 0.0
  %v1972 = vmax.f32 %v1923, 0.0
  %v1973 = vmax.f32 %v1924, 0.0
  %v1974 = vmax.f32 %v1925, 0.0
  %v1975 = vmax.f32 %v1926, 0.0
  %v1976 = vmax.f32 %v1927, 0.0
  %v1977 = vmax.f32 %v1928, 0.0
  %v1978 = vmax.f32 %v1929, 0.0
  %v1979 = vmax.f32 %v1930, 0.0
  %v1980 = vmax.f32 %v1931, 0.0
  %v1981 = vmax.f32 %v1932, 0.0
  %v1982 = vmax.f32 %v1933, 0.0
  %v1983 = vmax.f32 %v1934, 0.0
  %v1984 = vmax.f32 %v1935, 0.0
  %v1985 = vmax.f32 %v1936, 0.0
  %v1986 = vmax.f32 %v1937, 0.0
  %v1987 = vmax.f32 %v1938, 0.0
  %v1988 = vmax.f32 %v1939, 0.0
  %v1989 = vmax.f32 %v1940, 0.0
  %v1990 = vmax.f32 %v1941, 0.0
  %v1991 = vmax.f32 %v1942, 0.0
  %v1992 = vmax.f32 %v1943, 0.0
  %v1993 = vmax.f32 %v1944, 0.0
  %v1994 = vmax.f32 %v1945, 0.0
  %v1995 = vmax.f32 %v1946, 0.0
  %v1996 = vmax.f32 %v1947, 0.0
  %v1997 = vmax.f32 %v1948, 0.0
  %v1998 = vmax.f32 %v1949, 0.0
  %v1999 = vmax.f32 %v1950, 0.0
  %v2000 = vmax.f32 %v1951, 0.0
  %v2001 = vmax.f32 %v1952, 0.0
  %v2002 = vmax.f32 %v1953, 0.0
  %v2003 = vmax.f32 %v1954, 0.0
  %v2004 = vmax.f32 %v1955, 0.0
  %v2005 = vmax.f32 %v1956, 0.0
  %v2006 = vmax.f32 %v1957, 0.0
  %v2007 = vmax.f32 %v1958, 0.0
  %v2008 = vmax.f32 %v1959, 0.0
  %v2009 = vmax.f32 %v1960, 0.0
  %v2010 = vmax.f32 %v1961, 0.0
  %v2011 = vmax.f32 %v1962, 0.0
  %v2012 = vmax.f32 %v1963, 0.0
  %v2013 = vmax.f32 %v1964, 0.0
  %v2014 = vmax.f32 %v1965, 0.0
  %v2015 = vld [vmem:[%s3] sm:$0xf]
  %v2016 = vld [vmem:[%s3 + $0x4] sm:$0xf]
  %v2017 = vld [vmem:[%s3 + $0x8] sm:$0xf]
  %v2018 = vld [vmem:[%s3 + $0xc] sm:$0xf]
  %v2019 = vld [vmem:[%s3 + $0x10] sm:$0xf]
  %v2020 = vld [vmem:[%s3 + $0x14] sm:$0xf]
  %v2021 = vld [vmem:[%s3 + $0x18] sm:$0xf]
  %v2022 = vld [vmem:[%s3 + $0x1c] sm:$0xf]
  %v2023 = vld [vmem:[%s3 + $0x20] sm:$0xf]
  %v2024 = vld [vmem:[%s3 + $0x24] sm:$0xf]
  %v2025 = vld [vmem:[%s3 + $0x28] sm:$0xf]
  %v2026 = vld [vmem:[%s3 + $0x2c] sm:$0xf]
  %v2027 = vld [vmem:[%s3 + $0x30] sm:$0xf]
  %v2028 = vld [vmem:[%s3 + $0x34] sm:$0xf]
  %v2029 = vld [vmem:[%s3 + $0x38] sm:$0xf]
  %v2030 = vld [vmem:[%s3 + $0x3c] sm:$0xf]
  %v2031 = vld [vmem:[%s3 + $0x40] sm:$0xf]
  %v2032 = vld [vmem:[%s3 + $0x44] sm:$0xf]
  %v2033 = vld [vmem:[%s3 + $0x48] sm:$0xf]
  %v2034 = vld [vmem:[%s3 + $0x4c] sm:$0xf]
  %v2035 = vld [vmem:[%s3 + $0x50] sm:$0xf]
  %v2036 = vld [vmem:[%s3 + $0x54] sm:$0xf]
  %v2037 = vld [vmem:[%s3 + $0x58] sm:$0xf]
  %v2038 = vld [vmem:[%s3 + $0x5c] sm:$0xf]
  %v2039 = vld [vmem:[%s3 + $0x60] sm:$0xf]
  %v2040 = vld [vmem:[%s3 + $0x64] sm:$0xf]
  %v2041 = vld [vmem:[%s3 + $0x68] sm:$0xf]
  %v2042 = vld [vmem:[%s3 + $0x6c] sm:$0xf]
  %v2043 = vld [vmem:[%s3 + $0x70] sm:$0xf]
  %v2044 = vld [vmem:[%s3 + $0x74] sm:$0xf]
  %v2045 = vld [vmem:[%s3 + $0x78] sm:$0xf]
  %v2046 = vld [vmem:[%s3 + $0x7c] sm:$0xf]
  %v2047 = vld [vmem:[%s3 + $0x80] sm:$0xf]
  %v2048 = vld [vmem:[%s3 + $0x84] sm:$0xf]
  %v2049 = vld [vmem:[%s3 + $0x88] sm:$0xf]
  %v2050 = vld [vmem:[%s3 + $0x8c] sm:$0xf]
  %v2051 = vld [vmem:[%s3 + $0x90] sm:$0xf]
  %v2052 = vld [vmem:[%s3 + $0x94] sm:$0xf]
  %v2053 = vld [vmem:[%s3 + $0x98] sm:$0xf]
  %v2054 = vld [vmem:[%s3 + $0x9c] sm:$0xf]
  %v2055 = vld [vmem:[%s3 + $0xa0] sm:$0xf]
  %v2056 = vld [vmem:[%s3 + $0xa4] sm:$0xf]
  %v2057 = vld [vmem:[%s3 + $0xa8] sm:$0xf]
  %v2058 = vld [vmem:[%s3 + $0xac] sm:$0xf]
  %v2059 = vld [vmem:[%s3 + $0xb0] sm:$0xf]
  %v2060 = vld [vmem:[%s3 + $0xb4] sm:$0xf]
  %v2061 = vld [vmem:[%s3 + $0xb8] sm:$0xf]
  %v2062 = vld [vmem:[%s3 + $0xbc] sm:$0xf]
  %v2063 = vld [vmem:[%s3 + $0xc0] sm:$0xf]
  %v2113 = vunpack.c.l.b16 %v2015
  %v2114 = vunpack.c.l.b16 %v2016
  %v2115 = vunpack.c.l.b16 %v2017
  %v2116 = vunpack.c.l.b16 %v2018
  %v2117 = vunpack.c.l.b16 %v2019
  %v2118 = vunpack.c.l.b16 %v2020
  %v2119 = vunpack.c.l.b16 %v2021
  %v2120 = vunpack.c.l.b16 %v2022
  %v2121 = vunpack.c.l.b16 %v2023
  %v2122 = vunpack.c.l.b16 %v2024
  %v2123 = vunpack.c.l.b16 %v2025
  %v2124 = vunpack.c.l.b16 %v2026
  %v2125 = vunpack.c.l.b16 %v2027
  %v2126 = vunpack.c.l.b16 %v2028
  %v2127 = vunpack.c.l.b16 %v2029
  %v2128 = vunpack.c.l.b16 %v2030
  %v2129 = vunpack.c.l.b16 %v2031
  %v2130 = vunpack.c.l.b16 %v2032
  %v2131 = vunpack.c.l.b16 %v2033
  %v2132 = vunpack.c.l.b16 %v2034
  %v2133 = vunpack.c.l.b16 %v2035
  %v2134 = vunpack.c.l.b16 %v2036
  %v2135 = vunpack.c.l.b16 %v2037
  %v2136 = vunpack.c.l.b16 %v2038
  %v2137 = vunpack.c.l.b16 %v2039
  %v2138 = vunpack.c.l.b16 %v2040
  %v2139 = vunpack.c.l.b16 %v2041
  %v2140 = vunpack.c.l.b16 %v2042
  %v2141 = vunpack.c.l.b16 %v2043
  %v2142 = vunpack.c.l.b16 %v2044
  %v2143 = vunpack.c.l.b16 %v2045
  %v2144 = vunpack.c.l.b16 %v2046
  %v2145 = vunpack.c.l.b16 %v2047
  %v2146 = vunpack.c.l.b16 %v2048
  %v2147 = vunpack.c.l.b16 %v2049
  %v2148 = vunpack.c.l.b16 %v2050
  %v2149 = vunpack.c.l.b16 %v2051
  %v2150 = vunpack.c.l.b16 %v2052
  %v2151 = vunpack.c.l.b16 %v2053
  %v2152 = vunpack.c.l.b16 %v2054
  %v2153 = vunpack.c.l.b16 %v2055
  %v2154 = vunpack.c.l.b16 %v2056
  %v2155 = vunpack.c.l.b16 %v2057
  %v2156 = vunpack.c.l.b16 %v2058
  %v2157 = vunpack.c.l.b16 %v2059
  %v2158 = vunpack.c.l.b16 %v2060
  %v2159 = vunpack.c.l.b16 %v2061
  %v2160 = vunpack.c.l.b16 %v2062
  %v2161 = vunpack.c.l.b16 %v2063
  %v2162 = vpack.c.b16 %v2114, %v2113
  %v2163 = vpack.c.b16 %v2116, %v2115
  %v2164 = vpack.c.b16 %v2118, %v2117
  %v2165 = vpack.c.b16 %v2120, %v2119
  %v2166 = vpack.c.b16 %v2122, %v2121
  %v2167 = vpack.c.b16 %v2124, %v2123
  %v2168 = vpack.c.b16 %v2126, %v2125
  %v2169 = vpack.c.b16 %v2128, %v2127
  %v2170 = vpack.c.b16 %v2130, %v2129
  %v2171 = vpack.c.b16 %v2132, %v2131
  %v2172 = vpack.c.b16 %v2134, %v2133
  %v2173 = vpack.c.b16 %v2136, %v2135
  %v2174 = vpack.c.b16 %v2138, %v2137
  %v2175 = vpack.c.b16 %v2140, %v2139
  %v2176 = vpack.c.b16 %v2142, %v2141
  %v2177 = vpack.c.b16 %v2144, %v2143
  %v2178 = vpack.c.b16 %v2146, %v2145
  %v2179 = vpack.c.b16 %v2148, %v2147
  %v2180 = vpack.c.b16 %v2150, %v2149
  %v2181 = vpack.c.b16 %v2152, %v2151
  %v2182 = vpack.c.b16 %v2154, %v2153
  %v2183 = vpack.c.b16 %v2156, %v2155
  %v2184 = vpack.c.b16 %v2158, %v2157
  %v2185 = vpack.c.b16 %v2160, %v2159
  %v2186 = vpack.c.b16 %v2161, %v2161
  %v2188 = vsel %vm240, %v2162, 0
  %v2191 = vsel %vm240, %v2163, 0
  %v2194 = vsel %vm240, %v2164, 0
  %v2197 = vsel %vm240, %v2165, 0
  %v2200 = vsel %vm240, %v2166, 0
  %v2203 = vsel %vm240, %v2167, 0
  %v2206 = vsel %vm240, %v2168, 0
  %v2209 = vsel %vm240, %v2169, 0
  %v2212 = vsel %vm240, %v2170, 0
  %v2215 = vsel %vm240, %v2171, 0
  %v2218 = vsel %vm240, %v2172, 0
  %v2221 = vsel %vm240, %v2173, 0
  %v2224 = vsel %vm240, %v2174, 0
  %v2227 = vsel %vm240, %v2175, 0
  %v2230 = vsel %vm240, %v2176, 0
  %v2233 = vsel %vm240, %v2177, 0
  %v2236 = vsel %vm240, %v2178, 0
  %v2239 = vsel %vm240, %v2179, 0
  %v2242 = vsel %vm240, %v2180, 0
  %v2245 = vsel %vm240, %v2181, 0
  %v2248 = vsel %vm240, %v2182, 0
  %v2251 = vsel %vm240, %v2183, 0
  %v2254 = vsel %vm240, %v2184, 0
  %v2257 = vsel %vm240, %v2185, 0
  %v2260 = vsel %vm240, %v2186, 0
  %2262 = vmatprep.subr.bf16.mxu0 0
  %2263 = vmatpush1.bf16.msra.mxu0 %v231
  %2264 = vmatprep.subr.bf16.mxu0 0
  %2265 = vmatpush1.bf16.msra.mxu0 %v232
  %2266 = vmatprep.subr.bf16.mxu0 0
  %2267 = vmatpush1.bf16.msra.mxu0 %v233
  %2268 = vmatprep.subr.bf16.mxu0 0
  %2269 = vmatpush1.bf16.msra.mxu0 %v234
  %2270 = vmatprep.subr.bf16.mxu0 0
  %2271 = vmatpush1.bf16.msra.mxu0 %v321
  %2272 = vmatprep.subr.bf16.mxu0 0
  %2273 = vmatpush1.bf16.msra.mxu0 0
  %2274 = vmatprep.subr.bf16.mxu0 0
  %2275 = vmatpush1.bf16.msra.mxu0 0
  %2276 = vmatprep.subr.bf16.mxu0 0
  %2277 = vmatpush1.bf16.msra.mxu0 0
  %2278 = vmatprep.subr.bf16.mxu0 0
  %2279 = vmatpush1.bf16.msra.mxu0 0
  %2280 = vmatprep.subr.bf16.mxu0 0
  %2281 = vmatpush1.bf16.msra.mxu0 0
  %2282 = vmatprep.subr.bf16.mxu0 0
  %2283 = vmatpush1.bf16.msra.mxu0 0
  %2284 = vmatprep.subr.bf16.mxu0 0
  %2285 = vmatpush1.bf16.msra.mxu0 0
  %2286 = vmatprep.subr.bf16.mxu0 0
  %2287 = vmatpush1.bf16.msra.mxu0 0
  %2288 = vmatprep.subr.bf16.mxu0 0
  %2289 = vmatpush1.bf16.msra.mxu0 0
  %2290 = vmatprep.subr.bf16.mxu0 0
  %2291 = vmatpush1.bf16.msra.mxu0 0
  %2292 = vmatprep.subr.bf16.mxu0 0
  %2293 = vmatpush1.bf16.msra.mxu0 0
  %2294 = vmatprep.mubr.bf16.mxu0 0
  %2295 = vmatmul.mubr.bf16.gmra.mrb[0].mxu0 %v2188
  %v2296 = vpop.f32.mrb[0].mxu0
  %v2297 = vadd.f32 0.0, %v2296
  %v2298 = vpop.f32.mrb[0].mxu0
  %v2299 = vpop.f32.mrb[0].mxu0
  %v2300 = vadd.f32 0.0, %v2299
  %v2301 = vpop.f32.mrb[0].mxu0
  %2302 = vmatprep.mubr.bf16.mxu0 0
  %2303 = vmatmul.mubr.bf16.gmra.mrb[0].mxu0 %v2191
  %v2304 = vpop.f32.mrb[0].mxu0
  %v2305 = vadd.f32 0.0, %v2304
  %v2306 = vpop.f32.mrb[0].mxu0
  %v2307 = vpop.f32.mrb[0].mxu0
  %v2308 = vadd.f32 0.0, %v2307
  %v2309 = vpop.f32.mrb[0].mxu0
  %2310 = vmatprep.mubr.bf16.mxu0 0
  %2311 = vmatmul.mubr.bf16.gmra.mrb[0].mxu0 %v2194
  %v2312 = vpop.f32.mrb[0].mxu0
  %v2313 = vadd.f32 0.0, %v2312
  %v2314 = vpop.f32.mrb[0].mxu0
  %v2315 = vpop.f32.mrb[0].mxu0
  %v2316 = vadd.f32 0.0, %v2315
  %v2317 = vpop.f32.mrb[0].mxu0
  %2318 = vmatprep.mubr.bf16.mxu0 0
  %2319 = vmatmul.mubr.bf16.gmra.mrb[0].mxu0 %v2197
  %v2320 = vpop.f32.mrb[0].mxu0
  %v2321 = vadd.f32 0.0, %v2320
  %v2322 = vpop.f32.mrb[0].mxu0
  %v2323 = vpop.f32.mrb[0].mxu0
  %v2324 = vadd.f32 0.0, %v2323
  %v2325 = vpop.f32.mrb[0].mxu0
  %2326 = vmatprep.mubr.bf16.mxu0 0
  %2327 = vmatmul.mubr.bf16.gmra.mrb[0].mxu0 %v2200
  %v2328 = vpop.f32.mrb[0].mxu0
  %v2329 = vadd.f32 0.0, %v2328
  %v2330 = vpop.f32.mrb[0].mxu0
  %v2331 = vpop.f32.mrb[0].mxu0
  %v2332 = vadd.f32 0.0, %v2331
  %v2333 = vpop.f32.mrb[0].mxu0
  %2334 = vmatprep.mubr.bf16.mxu0 0
  %2335 = vmatmul.mubr.bf16.gmra.mrb[0].mxu0 %v2203
  %v2336 = vpop.f32.mrb[0].mxu0
  %v2337 = vadd.f32 0.0, %v2336
  %v2338 = vpop.f32.mrb[0].mxu0
  %v2339 = vpop.f32.mrb[0].mxu0
  %v2340 = vadd.f32 0.0, %v2339
  %v2341 = vpop.f32.mrb[0].mxu0
  %2342 = vmatprep.mubr.bf16.mxu0 0
  %2343 = vmatmul.mubr.bf16.gmra.mrb[0].mxu0 %v2206
  %v2344 = vpop.f32.mrb[0].mxu0
  %v2345 = vadd.f32 0.0, %v2344
  %v2346 = vpop.f32.mrb[0].mxu0
  %v2347 = vpop.f32.mrb[0].mxu0
  %v2348 = vadd.f32 0.0, %v2347
  %v2349 = vpop.f32.mrb[0].mxu0
  %2350 = vmatprep.mubr.bf16.mxu0 0
  %2351 = vmatmul.mubr.bf16.gmra.mrb[0].mxu0 %v2209
  %v2352 = vpop.f32.mrb[0].mxu0
  %v2353 = vadd.f32 0.0, %v2352
  %v2354 = vpop.f32.mrb[0].mxu0
  %v2355 = vpop.f32.mrb[0].mxu0
  %v2356 = vadd.f32 0.0, %v2355
  %v2357 = vpop.f32.mrb[0].mxu0
  %2358 = vmatprep.mubr.bf16.mxu0 0
  %2359 = vmatmul.mubr.bf16.gmra.mrb[0].mxu0 %v2212
  %v2360 = vpop.f32.mrb[0].mxu0
  %v2361 = vadd.f32 0.0, %v2360
  %v2362 = vpop.f32.mrb[0].mxu0
  %v2363 = vpop.f32.mrb[0].mxu0
  %v2364 = vadd.f32 0.0, %v2363
  %v2365 = vpop.f32.mrb[0].mxu0
  %2366 = vmatprep.mubr.bf16.mxu0 0
  %2367 = vmatmul.mubr.bf16.gmra.mrb[0].mxu0 %v2215
  %v2368 = vpop.f32.mrb[0].mxu0
  %v2369 = vadd.f32 0.0, %v2368
  %v2370 = vpop.f32.mrb[0].mxu0
  %v2371 = vpop.f32.mrb[0].mxu0
  %v2372 = vadd.f32 0.0, %v2371
  %v2373 = vpop.f32.mrb[0].mxu0
  %2374 = vmatprep.mubr.bf16.mxu0 0
  %2375 = vmatmul.mubr.bf16.gmra.mrb[0].mxu0 %v2218
  %v2376 = vpop.f32.mrb[0].mxu0
  %v2377 = vadd.f32 0.0, %v2376
  %v2378 = vpop.f32.mrb[0].mxu0
  %v2379 = vpop.f32.mrb[0].mxu0
  %v2380 = vadd.f32 0.0, %v2379
  %v2381 = vpop.f32.mrb[0].mxu0
  %2382 = vmatprep.mubr.bf16.mxu0 0
  %2383 = vmatmul.mubr.bf16.gmra.mrb[0].mxu0 %v2221
  %v2384 = vpop.f32.mrb[0].mxu0
  %v2385 = vadd.f32 0.0, %v2384
  %v2386 = vpop.f32.mrb[0].mxu0
  %v2387 = vpop.f32.mrb[0].mxu0
  %v2388 = vadd.f32 0.0, %v2387
  %v2389 = vpop.f32.mrb[0].mxu0
  %2390 = vmatprep.mubr.bf16.mxu0 0
  %2391 = vmatmul.mubr.bf16.gmra.mrb[0].mxu0 %v2224
  %v2392 = vpop.f32.mrb[0].mxu0
  %v2393 = vadd.f32 0.0, %v2392
  %v2394 = vpop.f32.mrb[0].mxu0
  %v2395 = vpop.f32.mrb[0].mxu0
  %v2396 = vadd.f32 0.0, %v2395
  %v2397 = vpop.f32.mrb[0].mxu0
  %2398 = vmatprep.mubr.bf16.mxu0 0
  %2399 = vmatmul.mubr.bf16.gmra.mrb[0].mxu0 %v2227
  %v2400 = vpop.f32.mrb[0].mxu0
  %v2401 = vadd.f32 0.0, %v2400
  %v2402 = vpop.f32.mrb[0].mxu0
  %v2403 = vpop.f32.mrb[0].mxu0
  %v2404 = vadd.f32 0.0, %v2403
  %v2405 = vpop.f32.mrb[0].mxu0
  %2406 = vmatprep.mubr.bf16.mxu0 0
  %2407 = vmatmul.mubr.bf16.gmra.mrb[0].mxu0 %v2230
  %v2408 = vpop.f32.mrb[0].mxu0
  %v2409 = vadd.f32 0.0, %v2408
  %v2410 = vpop.f32.mrb[0].mxu0
  %v2411 = vpop.f32.mrb[0].mxu0
  %v2412 = vadd.f32 0.0, %v2411
  %v2413 = vpop.f32.mrb[0].mxu0
  %2414 = vmatprep.mubr.bf16.mxu0 0
  %2415 = vmatmul.mubr.bf16.gmra.mrb[0].mxu0 %v2233
  %v2416 = vpop.f32.mrb[0].mxu0
  %v2417 = vadd.f32 0.0, %v2416
  %v2418 = vpop.f32.mrb[0].mxu0
  %v2419 = vpop.f32.mrb[0].mxu0
  %v2420 = vadd.f32 0.0, %v2419
  %v2421 = vpop.f32.mrb[0].mxu0
  %2422 = vmatprep.mubr.bf16.mxu0 0
  %2423 = vmatmul.mubr.bf16.gmra.mrb[0].mxu0 %v2236
  %v2424 = vpop.f32.mrb[0].mxu0
  %v2425 = vadd.f32 0.0, %v2424
  %v2426 = vpop.f32.mrb[0].mxu0
  %v2427 = vpop.f32.mrb[0].mxu0
  %v2428 = vadd.f32 0.0, %v2427
  %v2429 = vpop.f32.mrb[0].mxu0
  %2430 = vmatprep.mubr.bf16.mxu0 0
  %2431 = vmatmul.mubr.bf16.gmra.mrb[0].mxu0 %v2239
  %v2432 = vpop.f32.mrb[0].mxu0
  %v2433 = vadd.f32 0.0, %v2432
  %v2434 = vpop.f32.mrb[0].mxu0
  %v2435 = vpop.f32.mrb[0].mxu0
  %v2436 = vadd.f32 0.0, %v2435
  %v2437 = vpop.f32.mrb[0].mxu0
  %2438 = vmatprep.mubr.bf16.mxu0 0
  %2439 = vmatmul.mubr.bf16.gmra.mrb[0].mxu0 %v2242
  %v2440 = vpop.f32.mrb[0].mxu0
  %v2441 = vadd.f32 0.0, %v2440
  %v2442 = vpop.f32.mrb[0].mxu0
  %v2443 = vpop.f32.mrb[0].mxu0
  %v2444 = vadd.f32 0.0, %v2443
  %v2445 = vpop.f32.mrb[0].mxu0
  %2446 = vmatprep.mubr.bf16.mxu0 0
  %2447 = vmatmul.mubr.bf16.gmra.mrb[0].mxu0 %v2245
  %v2448 = vpop.f32.mrb[0].mxu0
  %v2449 = vadd.f32 0.0, %v2448
  %v2450 = vpop.f32.mrb[0].mxu0
  %v2451 = vpop.f32.mrb[0].mxu0
  %v2452 = vadd.f32 0.0, %v2451
  %v2453 = vpop.f32.mrb[0].mxu0
  %2454 = vmatprep.mubr.bf16.mxu0 0
  %2455 = vmatmul.mubr.bf16.gmra.mrb[0].mxu0 %v2248
  %v2456 = vpop.f32.mrb[0].mxu0
  %v2457 = vadd.f32 0.0, %v2456
  %v2458 = vpop.f32.mrb[0].mxu0
  %v2459 = vpop.f32.mrb[0].mxu0
  %v2460 = vadd.f32 0.0, %v2459
  %v2461 = vpop.f32.mrb[0].mxu0
  %2462 = vmatprep.mubr.bf16.mxu0 0
  %2463 = vmatmul.mubr.bf16.gmra.mrb[0].mxu0 %v2251
  %v2464 = vpop.f32.mrb[0].mxu0
  %v2465 = vadd.f32 0.0, %v2464
  %v2466 = vpop.f32.mrb[0].mxu0
  %v2467 = vpop.f32.mrb[0].mxu0
  %v2468 = vadd.f32 0.0, %v2467
  %v2469 = vpop.f32.mrb[0].mxu0
  %2470 = vmatprep.mubr.bf16.mxu0 0
  %2471 = vmatmul.mubr.bf16.gmra.mrb[0].mxu0 %v2254
  %v2472 = vpop.f32.mrb[0].mxu0
  %v2473 = vadd.f32 0.0, %v2472
  %v2474 = vpop.f32.mrb[0].mxu0
  %v2475 = vpop.f32.mrb[0].mxu0
  %v2476 = vadd.f32 0.0, %v2475
  %v2477 = vpop.f32.mrb[0].mxu0
  %2478 = vmatprep.mubr.bf16.mxu0 0
  %2479 = vmatmul.mubr.bf16.gmra.mrb[0].mxu0 %v2257
  %v2480 = vpop.f32.mrb[0].mxu0
  %v2481 = vadd.f32 0.0, %v2480
  %v2482 = vpop.f32.mrb[0].mxu0
  %v2483 = vpop.f32.mrb[0].mxu0
  %v2484 = vadd.f32 0.0, %v2483
  %v2485 = vpop.f32.mrb[0].mxu0
  %2486 = vmatprep.mubr.bf16.mxu0 0
  %2487 = vmatmul.mubr.bf16.gmra.mrb[0].mxu0 %v2260
  %v2488 = vpop.f32.mrb[0].mxu0
  %v2489 = vadd.f32 0.0, %v2488
  %v2490 = vpop.f32.mrb[0].mxu0
  %v2491 = vpop.f32.mrb[0].mxu0
  %v2492 = vpop.f32.mrb[0].mxu0
  %2493 = vdwg.mxu0
  %v2494 = vmul.f32 %v2297, %v559
  %v2495 = vmul.f32 %v2300, %v559
  %v2496 = vmul.f32 %v2305, %v559
  %v2497 = vmul.f32 %v2308, %v559
  %v2498 = vmul.f32 %v2313, %v559
  %v2499 = vmul.f32 %v2316, %v559
  %v2500 = vmul.f32 %v2321, %v559
  %v2501 = vmul.f32 %v2324, %v559
  %v2502 = vmul.f32 %v2329, %v559
  %v2503 = vmul.f32 %v2332, %v559
  %v2504 = vmul.f32 %v2337, %v559
  %v2505 = vmul.f32 %v2340, %v559
  %v2506 = vmul.f32 %v2345, %v559
  %v2507 = vmul.f32 %v2348, %v559
  %v2508 = vmul.f32 %v2353, %v559
  %v2509 = vmul.f32 %v2356, %v559
  %v2510 = vmul.f32 %v2361, %v559
  %v2511 = vmul.f32 %v2364, %v559
  %v2512 = vmul.f32 %v2369, %v559
  %v2513 = vmul.f32 %v2372, %v559
  %v2514 = vmul.f32 %v2377, %v559
  %v2515 = vmul.f32 %v2380, %v559
  %v2516 = vmul.f32 %v2385, %v559
  %v2517 = vmul.f32 %v2388, %v559
  %v2518 = vmul.f32 %v2393, %v559
  %v2519 = vmul.f32 %v2396, %v559
  %v2520 = vmul.f32 %v2401, %v559
  %v2521 = vmul.f32 %v2404, %v559
  %v2522 = vmul.f32 %v2409, %v559
  %v2523 = vmul.f32 %v2412, %v559
  %v2524 = vmul.f32 %v2417, %v559
  %v2525 = vmul.f32 %v2420, %v559
  %v2526 = vmul.f32 %v2425, %v559
  %v2527 = vmul.f32 %v2428, %v559
  %v2528 = vmul.f32 %v2433, %v559
  %v2529 = vmul.f32 %v2436, %v559
  %v2530 = vmul.f32 %v2441, %v559
  %v2531 = vmul.f32 %v2444, %v559
  %v2532 = vmul.f32 %v2449, %v559
  %v2533 = vmul.f32 %v2452, %v559
  %v2534 = vmul.f32 %v2457, %v559
  %v2535 = vmul.f32 %v2460, %v559
  %v2536 = vmul.f32 %v2465, %v559
  %v2537 = vmul.f32 %v2468, %v559
  %v2538 = vmul.f32 %v2473, %v559
  %v2539 = vmul.f32 %v2476, %v559
  %v2540 = vmul.f32 %v2481, %v559
  %v2541 = vmul.f32 %v2484, %v559
  %v2542 = vmul.f32 %v2489, %v559
  %v2543 = vadd.f32 %v2494, %v614
  %v2544 = vadd.f32 %v2495, %v614
  %v2545 = vadd.f32 %v2496, %v614
  %v2546 = vadd.f32 %v2497, %v614
  %v2547 = vadd.f32 %v2498, %v614
  %v2548 = vadd.f32 %v2499, %v614
  %v2549 = vadd.f32 %v2500, %v614
  %v2550 = vadd.f32 %v2501, %v614
  %v2551 = vadd.f32 %v2502, %v614
  %v2552 = vadd.f32 %v2503, %v614
  %v2553 = vadd.f32 %v2504, %v614
  %v2554 = vadd.f32 %v2505, %v614
  %v2555 = vadd.f32 %v2506, %v614
  %v2556 = vadd.f32 %v2507, %v614
  %v2557 = vadd.f32 %v2508, %v614
  %v2558 = vadd.f32 %v2509, %v614
  %v2559 = vadd.f32 %v2510, %v614
  %v2560 = vadd.f32 %v2511, %v614
  %v2561 = vadd.f32 %v2512, %v614
  %v2562 = vadd.f32 %v2513, %v614
  %v2563 = vadd.f32 %v2514, %v614
  %v2564 = vadd.f32 %v2515, %v614
  %v2565 = vadd.f32 %v2516, %v614
  %v2566 = vadd.f32 %v2517, %v614
  %v2567 = vadd.f32 %v2518, %v614
  %v2568 = vadd.f32 %v2519, %v614
  %v2569 = vadd.f32 %v2520, %v614
  %v2570 = vadd.f32 %v2521, %v614
  %v2571 = vadd.f32 %v2522, %v614
  %v2572 = vadd.f32 %v2523, %v614
  %v2573 = vadd.f32 %v2524, %v614
  %v2574 = vadd.f32 %v2525, %v614
  %v2575 = vadd.f32 %v2526, %v614
  %v2576 = vadd.f32 %v2527, %v614
  %v2577 = vadd.f32 %v2528, %v614
  %v2578 = vadd.f32 %v2529, %v614
  %v2579 = vadd.f32 %v2530, %v614
  %v2580 = vadd.f32 %v2531, %v614
  %v2581 = vadd.f32 %v2532, %v614
  %v2582 = vadd.f32 %v2533, %v614
  %v2583 = vadd.f32 %v2534, %v614
  %v2584 = vadd.f32 %v2535, %v614
  %v2585 = vadd.f32 %v2536, %v614
  %v2586 = vadd.f32 %v2537, %v614
  %v2587 = vadd.f32 %v2538, %v614
  %v2588 = vadd.f32 %v2539, %v614
  %v2589 = vadd.f32 %v2540, %v614
  %v2590 = vadd.f32 %v2541, %v614
  %v2591 = vadd.f32 %v2542, %v614
  %v2592 = vmax.f32 %v2543, 0.0
  %v2593 = vmax.f32 %v2544, 0.0
  %v2594 = vmax.f32 %v2545, 0.0
  %v2595 = vmax.f32 %v2546, 0.0
  %v2596 = vmax.f32 %v2547, 0.0
  %v2597 = vmax.f32 %v2548, 0.0
  %v2598 = vmax.f32 %v2549, 0.0
  %v2599 = vmax.f32 %v2550, 0.0
  %v2600 = vmax.f32 %v2551, 0.0
  %v2601 = vmax.f32 %v2552, 0.0
  %v2602 = vmax.f32 %v2553, 0.0
  %v2603 = vmax.f32 %v2554, 0.0
  %v2604 = vmax.f32 %v2555, 0.0
  %v2605 = vmax.f32 %v2556, 0.0
  %v2606 = vmax.f32 %v2557, 0.0
  %v2607 = vmax.f32 %v2558, 0.0
  %v2608 = vmax.f32 %v2559, 0.0
  %v2609 = vmax.f32 %v2560, 0.0
  %v2610 = vmax.f32 %v2561, 0.0
  %v2611 = vmax.f32 %v2562, 0.0
  %v2612 = vmax.f32 %v2563, 0.0
  %v2613 = vmax.f32 %v2564, 0.0
  %v2614 = vmax.f32 %v2565, 0.0
  %v2615 = vmax.f32 %v2566, 0.0
  %v2616 = vmax.f32 %v2567, 0.0
  %v2617 = vmax.f32 %v2568, 0.0
  %v2618 = vmax.f32 %v2569, 0.0
  %v2619 = vmax.f32 %v2570, 0.0
  %v2620 = vmax.f32 %v2571, 0.0
  %v2621 = vmax.f32 %v2572, 0.0
  %v2622 = vmax.f32 %v2573, 0.0
  %v2623 = vmax.f32 %v2574, 0.0
  %v2624 = vmax.f32 %v2575, 0.0
  %v2625 = vmax.f32 %v2576, 0.0
  %v2626 = vmax.f32 %v2577, 0.0
  %v2627 = vmax.f32 %v2578, 0.0
  %v2628 = vmax.f32 %v2579, 0.0
  %v2629 = vmax.f32 %v2580, 0.0
  %v2630 = vmax.f32 %v2581, 0.0
  %v2631 = vmax.f32 %v2582, 0.0
  %v2632 = vmax.f32 %v2583, 0.0
  %v2633 = vmax.f32 %v2584, 0.0
  %v2634 = vmax.f32 %v2585, 0.0
  %v2635 = vmax.f32 %v2586, 0.0
  %v2636 = vmax.f32 %v2587, 0.0
  %v2637 = vmax.f32 %v2588, 0.0
  %v2638 = vmax.f32 %v2589, 0.0
  %v2639 = vmax.f32 %v2590, 0.0
  %v2640 = vmax.f32 %v2591, 0.0
  %v2641 = vmax.f32 %v1966, %v2592
  %v2642 = vmax.f32 %v1967, %v2593
  %v2643 = vmax.f32 %v1968, %v2594
  %v2644 = vmax.f32 %v1969, %v2595
  %v2645 = vmax.f32 %v1970, %v2596
  %v2646 = vmax.f32 %v1971, %v2597
  %v2647 = vmax.f32 %v1972, %v2598
  %v2648 = vmax.f32 %v1973, %v2599
  %v2649 = vmax.f32 %v1974, %v2600
  %v2650 = vmax.f32 %v1975, %v2601
  %v2651 = vmax.f32 %v1976, %v2602
  %v2652 = vmax.f32 %v1977, %v2603
  %v2653 = vmax.f32 %v1978, %v2604
  %v2654 = vmax.f32 %v1979, %v2605
  %v2655 = vmax.f32 %v1980, %v2606
  %v2656 = vmax.f32 %v1981, %v2607
  %v2657 = vmax.f32 %v1982, %v2608
  %v2658 = vmax.f32 %v1983, %v2609
  %v2659 = vmax.f32 %v1984, %v2610
  %v2660 = vmax.f32 %v1985, %v2611
  %v2661 = vmax.f32 %v1986, %v2612
  %v2662 = vmax.f32 %v1987, %v2613
  %v2663 = vmax.f32 %v1988, %v2614
  %v2664 = vmax.f32 %v1989, %v2615
  %v2665 = vmax.f32 %v1990, %v2616
  %v2666 = vmax.f32 %v1991, %v2617
  %v2667 = vmax.f32 %v1992, %v2618
  %v2668 = vmax.f32 %v1993, %v2619
  %v2669 = vmax.f32 %v1994, %v2620
  %v2670 = vmax.f32 %v1995, %v2621
  %v2671 = vmax.f32 %v1996, %v2622
  %v2672 = vmax.f32 %v1997, %v2623
  %v2673 = vmax.f32 %v1998, %v2624
  %v2674 = vmax.f32 %v1999, %v2625
  %v2675 = vmax.f32 %v2000, %v2626
  %v2676 = vmax.f32 %v2001, %v2627
  %v2677 = vmax.f32 %v2002, %v2628
  %v2678 = vmax.f32 %v2003, %v2629
  %v2679 = vmax.f32 %v2004, %v2630
  %v2680 = vmax.f32 %v2005, %v2631
  %v2681 = vmax.f32 %v2006, %v2632
  %v2682 = vmax.f32 %v2007, %v2633
  %v2683 = vmax.f32 %v2008, %v2634
  %v2684 = vmax.f32 %v2009, %v2635
  %v2685 = vmax.f32 %v2010, %v2636
  %v2686 = vmax.f32 %v2011, %v2637
  %v2687 = vmax.f32 %v2012, %v2638
  %v2688 = vmax.f32 %v2013, %v2639
  %v2689 = vmax.f32 %v2014, %v2640
  %v2690 = vmax.f32 %v1340, %v2641
  %v2691 = vmax.f32 %v1341, %v2642
  %v2692 = vmax.f32 %v1342, %v2643
  %v2693 = vmax.f32 %v1343, %v2644
  %v2694 = vmax.f32 %v1344, %v2645
  %v2695 = vmax.f32 %v1345, %v2646
  %v2696 = vmax.f32 %v1346, %v2647
  %v2697 = vmax.f32 %v1347, %v2648
  %v2698 = vmax.f32 %v1348, %v2649
  %v2699 = vmax.f32 %v1349, %v2650
  %v2700 = vmax.f32 %v1350, %v2651
  %v2701 = vmax.f32 %v1351, %v2652
  %v2702 = vmax.f32 %v1352, %v2653
  %v2703 = vmax.f32 %v1353, %v2654
  %v2704 = vmax.f32 %v1354, %v2655
  %v2705 = vmax.f32 %v1355, %v2656
  %v2706 = vmax.f32 %v1356, %v2657
  %v2707 = vmax.f32 %v1357, %v2658
  %v2708 = vmax.f32 %v1358, %v2659
  %v2709 = vmax.f32 %v1359, %v2660
  %v2710 = vmax.f32 %v1360, %v2661
  %v2711 = vmax.f32 %v1361, %v2662
  %v2712 = vmax.f32 %v1362, %v2663
  %v2713 = vmax.f32 %v1363, %v2664
  %v2714 = vmax.f32 %v1364, %v2665
  %v2715 = vmax.f32 %v1365, %v2666
  %v2716 = vmax.f32 %v1366, %v2667
  %v2717 = vmax.f32 %v1367, %v2668
  %v2718 = vmax.f32 %v1368, %v2669
  %v2719 = vmax.f32 %v1369, %v2670
  %v2720 = vmax.f32 %v1370, %v2671
  %v2721 = vmax.f32 %v1371, %v2672
  %v2722 = vmax.f32 %v1372, %v2673
  %v2723 = vmax.f32 %v1373, %v2674
  %v2724 = vmax.f32 %v1374, %v2675
  %v2725 = vmax.f32 %v1375, %v2676
  %v2726 = vmax.f32 %v1376, %v2677
  %v2727 = vmax.f32 %v1377, %v2678
  %v2728 = vmax.f32 %v1378, %v2679
  %v2729 = vmax.f32 %v1379, %v2680
  %v2730 = vmax.f32 %v1380, %v2681
  %v2731 = vmax.f32 %v1381, %v2682
  %v2732 = vmax.f32 %v1382, %v2683
  %v2733 = vmax.f32 %v1383, %v2684
  %v2734 = vmax.f32 %v1384, %v2685
  %v2735 = vmax.f32 %v1385, %v2686
  %v2736 = vmax.f32 %v1386, %v2687
  %v2737 = vmax.f32 %v1387, %v2688
  %v2738 = vmax.f32 %v1388, %v2689
  %vm2739 = vcmask 48128
  %2740 = vst.msk [vmem:[%s7] sm:$0xff] %vm2739, %v2690
  %2741 = vst.msk [vmem:[%s7 + $0x8] sm:$0xff] %vm2739, %v2691
  %2742 = vst.msk [vmem:[%s7 + $0x10] sm:$0xff] %vm2739, %v2692
  %2743 = vst.msk [vmem:[%s7 + $0x18] sm:$0xff] %vm2739, %v2693
  %2744 = vst.msk [vmem:[%s7 + $0x20] sm:$0xff] %vm2739, %v2694
  %2745 = vst.msk [vmem:[%s7 + $0x28] sm:$0xff] %vm2739, %v2695
  %2746 = vst.msk [vmem:[%s7 + $0x30] sm:$0xff] %vm2739, %v2696
  %2747 = vst.msk [vmem:[%s7 + $0x38] sm:$0xff] %vm2739, %v2697
  %2748 = vst.msk [vmem:[%s7 + $0x40] sm:$0xff] %vm2739, %v2698
  %2749 = vst.msk [vmem:[%s7 + $0x48] sm:$0xff] %vm2739, %v2699
  %2750 = vst.msk [vmem:[%s7 + $0x50] sm:$0xff] %vm2739, %v2700
  %2751 = vst.msk [vmem:[%s7 + $0x58] sm:$0xff] %vm2739, %v2701
  %2752 = vst.msk [vmem:[%s7 + $0x60] sm:$0xff] %vm2739, %v2702
  %2753 = vst.msk [vmem:[%s7 + $0x68] sm:$0xff] %vm2739, %v2703
  %2754 = vst.msk [vmem:[%s7 + $0x70] sm:$0xff] %vm2739, %v2704
  %2755 = vst.msk [vmem:[%s7 + $0x78] sm:$0xff] %vm2739, %v2705
  %2756 = vst.msk [vmem:[%s7 + $0x80] sm:$0xff] %vm2739, %v2706
  %2757 = vst.msk [vmem:[%s7 + $0x88] sm:$0xff] %vm2739, %v2707
  %2758 = vst.msk [vmem:[%s7 + $0x90] sm:$0xff] %vm2739, %v2708
  %2759 = vst.msk [vmem:[%s7 + $0x98] sm:$0xff] %vm2739, %v2709
  %2760 = vst.msk [vmem:[%s7 + $0xa0] sm:$0xff] %vm2739, %v2710
  %2761 = vst.msk [vmem:[%s7 + $0xa8] sm:$0xff] %vm2739, %v2711
  %2762 = vst.msk [vmem:[%s7 + $0xb0] sm:$0xff] %vm2739, %v2712
  %2763 = vst.msk [vmem:[%s7 + $0xb8] sm:$0xff] %vm2739, %v2713
  %2764 = vst.msk [vmem:[%s7 + $0xc0] sm:$0xff] %vm2739, %v2714
  %2765 = vst.msk [vmem:[%s7 + $0xc8] sm:$0xff] %vm2739, %v2715
  %2766 = vst.msk [vmem:[%s7 + $0xd0] sm:$0xff] %vm2739, %v2716
  %2767 = vst.msk [vmem:[%s7 + $0xd8] sm:$0xff] %vm2739, %v2717
  %2768 = vst.msk [vmem:[%s7 + $0xe0] sm:$0xff] %vm2739, %v2718
  %2769 = vst.msk [vmem:[%s7 + $0xe8] sm:$0xff] %vm2739, %v2719
  %2770 = vst.msk [vmem:[%s7 + $0xf0] sm:$0xff] %vm2739, %v2720
  %2771 = vst.msk [vmem:[%s7 + $0xf8] sm:$0xff] %vm2739, %v2721
  %2772 = vst.msk [vmem:[%s7 + $0x100] sm:$0xff] %vm2739, %v2722
  %2773 = vst.msk [vmem:[%s7 + $0x108] sm:$0xff] %vm2739, %v2723
  %2774 = vst.msk [vmem:[%s7 + $0x110] sm:$0xff] %vm2739, %v2724
  %2775 = vst.msk [vmem:[%s7 + $0x118] sm:$0xff] %vm2739, %v2725
  %2776 = vst.msk [vmem:[%s7 + $0x120] sm:$0xff] %vm2739, %v2726
  %2777 = vst.msk [vmem:[%s7 + $0x128] sm:$0xff] %vm2739, %v2727
  %2778 = vst.msk [vmem:[%s7 + $0x130] sm:$0xff] %vm2739, %v2728
  %2779 = vst.msk [vmem:[%s7 + $0x138] sm:$0xff] %vm2739, %v2729
  %2780 = vst.msk [vmem:[%s7 + $0x140] sm:$0xff] %vm2739, %v2730
  %2781 = vst.msk [vmem:[%s7 + $0x148] sm:$0xff] %vm2739, %v2731
  %2782 = vst.msk [vmem:[%s7 + $0x150] sm:$0xff] %vm2739, %v2732
  %2783 = vst.msk [vmem:[%s7 + $0x158] sm:$0xff] %vm2739, %v2733
  %2784 = vst.msk [vmem:[%s7 + $0x160] sm:$0xff] %vm2739, %v2734
  %2785 = vst.msk [vmem:[%s7 + $0x168] sm:$0xff] %vm2739, %v2735
  %2786 = vst.msk [vmem:[%s7 + $0x170] sm:$0xff] %vm2739, %v2736
  %2787 = vst.msk [vmem:[%s7 + $0x178] sm:$0xff] %vm2739, %v2737
  %2788 = vst.msk [vmem:[%s7 + $0x180] sm:$0xff] %vm2739, %v2738
  // Predicated region
  $region30: #{_lambda_.3} parent=0 // pred_check
    _
  $region31: #{_lambda_.3} parent=0 // pred_check_branch
    %2790 = sbr.rel (0) target = $region33
  $region32: #{_lambda_.3} parent=0 // pred_region
    _
  $region33: #{_lambda_.3} parent=0 // pred_fallthru
    _
  // Predicated region
  $region34: #{_lambda_.3} parent=0 // pred_check
    _
  $region35: #{_lambda_.3} parent=0 // pred_check_branch
    %2792 = sbr.rel (0) target = $region37
  $region36: #{_lambda_.3} parent=0 // pred_region
    _
  $region37: #{_lambda_.3} parent=0 // pred_fallthru
    _

// kernel: _lambda_.4
$region0: #{_lambda_.4}
  #allocation0 [shape = 'u32[]', space=smem, size = 0x4, offset = 0x4, fixed_abs, tag = 'smem constant byte address 0x4 - core index']
  #allocation1 [shape = 'u32[144,128]{1,0:T(1,128)}', space=vmem, size = 0x12000, scoped, tag = 'internal scratch']
  %s0 = inlined_call_operand.vmem [shape: bf16[56,150], index: 0, kind: input, shape index: {}]
  %s1 = inlined_call_operand.vmem [shape: bf16[56,150], index: 1, kind: input, shape index: {}]
  %s2 = inlined_call_operand.vmem [shape: bf16[56,150], index: 2, kind: input, shape index: {}]
  %s3 = inlined_call_operand.vmem [shape: bf16[56,150], index: 3, kind: input, shape index: {}]
  %s4 = inlined_call_operand.vmem [shape: bf16[150,16], index: 4, kind: input, shape index: {}]
  %s5 = inlined_call_operand.vmem [shape: f32[1,16], index: 5, kind: input, shape index: {}]
  %s6 = inlined_call_operand.vmem [shape: f32[1,16], index: 6, kind: input, shape index: {}]
  %s7 = inlined_call_operand.vmem [shape: f32[56,16], index: 7, kind: output, shape index: {}]
  %s8 = sld [smem:[#allocation0]]
  $region38: #{_lambda_.4} parent=0
    _
  %s10 = ssub.s32 1, %s8
  %s11 = scalar_select 0, %s10, %s8
  // Predicated region
  $region2: #{_lambda_.4} parent=0 // pred_check
    _
  $region3: #{_lambda_.4} parent=0 // pred_check_branch
    %13 = sbr.rel (0) target = $region5
  $region4: #{_lambda_.4} parent=0 // pred_region
    _
  $region5: #{_lambda_.4} parent=0 // pred_fallthru
    _
  // Predicated region
  $region6: #{_lambda_.4} parent=0 // pred_check
    _
  $region7: #{_lambda_.4} parent=0 // pred_check_branch
    %15 = sbr.rel (0) target = $region9
  $region8: #{_lambda_.4} parent=0 // pred_region
    _
  $region9: #{_lambda_.4} parent=0 // pred_fallthru
    _
  // Predicated region
  $region10: #{_lambda_.4} parent=0 // pred_check
    _
  $region11: #{_lambda_.4} parent=0 // pred_check_branch
    %17 = sbr.rel (0) target = $region13
  $region12: #{_lambda_.4} parent=0 // pred_region
    _
  $region13: #{_lambda_.4} parent=0 // pred_fallthru
    _
  // Predicated region
  $region14: #{_lambda_.4} parent=0 // pred_check
    _
  $region15: #{_lambda_.4} parent=0 // pred_check_branch
    %19 = sbr.rel (0) target = $region17
  $region16: #{_lambda_.4} parent=0 // pred_region
    _
  $region17: #{_lambda_.4} parent=0 // pred_fallthru
    _
  // Predicated region
  $region18: #{_lambda_.4} parent=0 // pred_check
    _
  $region19: #{_lambda_.4} parent=0 // pred_check_branch
    %21 = sbr.rel (0) target = $region21
  $region20: #{_lambda_.4} parent=0 // pred_region
    _
  $region21: #{_lambda_.4} parent=0 // pred_fallthru
    _
  // Predicated region
  $region22: #{_lambda_.4} parent=0 // pred_check
    _
  $region23: #{_lambda_.4} parent=0 // pred_check_branch
    %23 = sbr.rel (0) target = $region25
  $region24: #{_lambda_.4} parent=0 // pred_region
    _
  $region25: #{_lambda_.4} parent=0 // pred_fallthru
    _
  // Predicated region
  $region26: #{_lambda_.4} parent=0 // pred_check
    _
  $region27: #{_lambda_.4} parent=0 // pred_check_branch
    %25 = sbr.rel (0) target = $region29
  $region28: #{_lambda_.4} parent=0 // pred_region
    _
  $region29: #{_lambda_.4} parent=0 // pred_fallthru
    _
  %v27 = vld [vmem:[%s4] sm:$0xf]
  %v28 = vld [vmem:[%s4 + $0x4] sm:$0xf]
  %v29 = vld [vmem:[%s4 + $0x8] sm:$0xf]
  %v30 = vld [vmem:[%s4 + $0xc] sm:$0xf]
  %v31 = vld [vmem:[%s4 + $0x10] sm:$0xf]
  %v32 = vld [vmem:[%s4 + $0x14] sm:$0xf]
  %v33 = vld [vmem:[%s4 + $0x18] sm:$0xf]
  %v34 = vld [vmem:[%s4 + $0x1c] sm:$0xf]
  %v35 = vld [vmem:[%s4 + $0x20] sm:$0xf]
  %v36 = vld [vmem:[%s4 + $0x24] sm:$0xf]
  %v37 = vld [vmem:[%s4 + $0x28] sm:$0xf]
  %v38 = vld [vmem:[%s4 + $0x2c] sm:$0xf]
  %v39 = vld [vmem:[%s4 + $0x30] sm:$0xf]
  %v40 = vld [vmem:[%s4 + $0x34] sm:$0xf]
  %v41 = vld [vmem:[%s4 + $0x38] sm:$0xf]
  %v42 = vld [vmem:[%s4 + $0x3c] sm:$0xf]
  %v43 = vld [vmem:[%s4 + $0x40] sm:$0xf]
  %v44 = vld [vmem:[%s4 + $0x44] sm:$0xf]
  %v45 = vld [vmem:[%s4 + $0x48] sm:$0x7]
  %v46 = vld [vmem:[%s5] sm:$0x1]
  %v47 = vld [vmem:[%s6] sm:$0x1]
  %v48 = vld [vmem:[%s0] sm:$0xff]
  %v49 = vld [vmem:[%s0 + $0x8] sm:$0xff]
  %v50 = vld [vmem:[%s0 + $0x10] sm:$0xff]
  %v51 = vld [vmem:[%s0 + $0x18] sm:$0xff]
  %v52 = vld [vmem:[%s0 + $0x20] sm:$0xff]
  %v53 = vld [vmem:[%s0 + $0x28] sm:$0xff]
  %v54 = vld [vmem:[%s0 + $0x30] sm:$0xff]
  %v62 = vunpack.c.l.b16 %v48
  %v63 = vunpack.c.h.b16 %v48
  %v64 = vunpack.c.l.b16 %v49
  %v65 = vunpack.c.h.b16 %v49
  %v66 = vunpack.c.l.b16 %v50
  %v67 = vunpack.c.h.b16 %v50
  %v68 = vunpack.c.l.b16 %v51
  %v69 = vunpack.c.h.b16 %v51
  %v70 = vunpack.c.l.b16 %v52
  %v71 = vunpack.c.h.b16 %v52
  %v72 = vunpack.c.l.b16 %v53
  %v73 = vunpack.c.h.b16 %v53
  %v74 = vunpack.c.l.b16 %v54
  %v75 = vunpack.c.h.b16 %v54
  %v76 = vpack.c.b16 %v64, %v62
  %v77 = vpack.c.b16 %v65, %v63
  %v78 = vpack.c.b16 %v68, %v66
  %v79 = vpack.c.b16 %v69, %v67
  %v80 = vpack.c.b16 %v72, %v70
  %v81 = vpack.c.b16 %v73, %v71
  %v82 = vpack.c.b16 %v74, %v74
  %v83 = vpack.c.b16 %v75, %v75
  %v107 = vunpack.c.l.b16 %v27
  %v108 = vunpack.c.l.b16 %v28
  %v109 = vunpack.c.l.b16 %v29
  %v110 = vunpack.c.l.b16 %v30
  %v111 = vunpack.c.l.b16 %v31
  %v112 = vunpack.c.l.b16 %v32
  %v113 = vunpack.c.l.b16 %v33
  %v114 = vunpack.c.l.b16 %v34
  %v115 = vunpack.c.l.b16 %v35
  %v116 = vunpack.c.l.b16 %v36
  %v117 = vunpack.c.l.b16 %v37
  %v118 = vunpack.c.l.b16 %v38
  %v119 = vunpack.c.l.b16 %v39
  %v120 = vunpack.c.l.b16 %v40
  %v121 = vunpack.c.l.b16 %v41
  %v122 = vunpack.c.l.b16 %v42
  %v123 = vunpack.c.l.b16 %v43
  %v124 = vunpack.c.l.b16 %v44
  %v125 = vunpack.c.l.b16 %v45
  %v126 = vpack.c.b16 %v108, %v107
  %v127 = vpack.c.b16 %v110, %v109
  %v128 = vpack.c.b16 %v112, %v111
  %v129 = vpack.c.b16 %v114, %v113
  %v130 = vpack.c.b16 %v116, %v115
  %v131 = vpack.c.b16 %v118, %v117
  %v132 = vpack.c.b16 %v120, %v119
  %v133 = vpack.c.b16 %v122, %v121
  %v134 = vpack.c.b16 %v124, %v123
  %v135 = vpack.c.b16 %v125, %v125
  %vm145 = vcmask 179200
  %v147 = vsel %vm145, %v77, 0
  %v150 = vsel %vm145, %v79, 0
  %v153 = vsel %vm145, %v81, 0
  %v156 = vsel %vm145, %v83, 0
  %vm158 = vcmask 1042432
  %v160 = vsel %vm158, %v135, 0
  %162 = vmatprep.subr.bf16.mxu0 0
  %163 = vmatpush1.bf16.msra.mxu0 %v126
  %164 = vmatprep.subr.bf16.mxu0 0
  %165 = vmatpush1.bf16.msra.mxu0 %v127
  %166 = vmatprep.subr.bf16.mxu0 0
  %167 = vmatpush1.bf16.msra.mxu0 %v128
  %168 = vmatprep.subr.bf16.mxu0 0
  %169 = vmatpush1.bf16.msra.mxu0 %v129
  %170 = vmatprep.subr.bf16.mxu0 0
  %171 = vmatpush1.bf16.msra.mxu0 %v130
  %172 = vmatprep.subr.bf16.mxu0 0
  %173 = vmatpush1.bf16.msra.mxu0 %v131
  %174 = vmatprep.subr.bf16.mxu0 0
  %175 = vmatpush1.bf16.msra.mxu0 %v132
  %176 = vmatprep.subr.bf16.mxu0 0
  %177 = vmatpush1.bf16.msra.mxu0 %v133
  %178 = vmatprep.subr.bf16.mxu0 0
  %179 = vmatpush1.bf16.msra.mxu0 %v134
  %180 = vmatprep.subr.bf16.mxu0 0
  %181 = vmatpush1.bf16.msra.mxu0 %v160
  %182 = vmatprep.subr.bf16.mxu0 0
  %183 = vmatpush1.bf16.msra.mxu0 0
  %184 = vmatprep.subr.bf16.mxu0 0
  %185 = vmatpush1.bf16.msra.mxu0 0
  %186 = vmatprep.subr.bf16.mxu0 0
  %187 = vmatpush1.bf16.msra.mxu0 0
  %188 = vmatprep.subr.bf16.mxu0 0
  %189 = vmatpush1.bf16.msra.mxu0 0
  %190 = vmatprep.subr.bf16.mxu0 0
  %191 = vmatpush1.bf16.msra.mxu0 0
  %192 = vmatprep.subr.bf16.mxu0 0
  %193 = vmatpush1.bf16.msra.mxu0 0
  %194 = vmatprep.mubr.bf16.mxu0 %v147
  %195 = vmatmul.mubr.bf16.gmra.mrb[0].mxu0 %v76
  %v196 = vpop.f32.mrb[0].mxu0
  %v197 = vadd.f32 0.0, %v196
  %v198 = vpop.f32.mrb[0].mxu0
  %v199 = vpop.f32.mrb[0].mxu0
  %v200 = vadd.f32 0.0, %v199
  %v201 = vpop.f32.mrb[0].mxu0
  %202 = vmatprep.mubr.bf16.mxu0 %v150
  %203 = vmatmul.mubr.bf16.gmra.mrb[0].mxu0 %v78
  %v204 = vpop.f32.mrb[0].mxu0
  %v205 = vadd.f32 0.0, %v204
  %v206 = vpop.f32.mrb[0].mxu0
  %v207 = vpop.f32.mrb[0].mxu0
  %v208 = vadd.f32 0.0, %v207
  %v209 = vpop.f32.mrb[0].mxu0
  %210 = vmatprep.mubr.bf16.mxu0 %v153
  %211 = vmatmul.mubr.bf16.gmra.mrb[0].mxu0 %v80
  %v212 = vpop.f32.mrb[0].mxu0
  %v213 = vadd.f32 0.0, %v212
  %v214 = vpop.f32.mrb[0].mxu0
  %v215 = vpop.f32.mrb[0].mxu0
  %v216 = vadd.f32 0.0, %v215
  %v217 = vpop.f32.mrb[0].mxu0
  %218 = vmatprep.mubr.bf16.mxu0 %v156
  %219 = vmatmul.mubr.bf16.gmra.mrb[0].mxu0 %v82
  %v220 = vpop.f32.mrb[0].mxu0
  %v221 = vadd.f32 0.0, %v220
  %v222 = vpop.f32.mrb[0].mxu0
  %v223 = vpop.f32.mrb[0].mxu0
  %v224 = vpop.f32.mrb[0].mxu0
  %225 = vdwg.mxu0
  %v227 = vlaneseq
  %v228 = vshrl.u32 %v227, 7
  %v229 = vsub.s32 0, %v228
  %v230 = vrot.slane %v46, %v229
  %v232 = vmul.f32 %v197, %v230
  %v233 = vmul.f32 %v200, %v230
  %v234 = vmul.f32 %v205, %v230
  %v235 = vmul.f32 %v208, %v230
  %v236 = vmul.f32 %v213, %v230
  %v237 = vmul.f32 %v216, %v230
  %v238 = vmul.f32 %v221, %v230
  %v240 = vlaneseq
  %v241 = vshrl.u32 %v240, 7
  %v242 = vsub.s32 0, %v241
  %v243 = vrot.slane %v47, %v242
  %v245 = vadd.f32 %v232, %v243
  %v246 = vadd.f32 %v233, %v243
  %v247 = vadd.f32 %v234, %v243
  %v248 = vadd.f32 %v235, %v243
  %v249 = vadd.f32 %v236, %v243
  %v250 = vadd.f32 %v237, %v243
  %v251 = vadd.f32 %v238, %v243
  %v252 = vmax.f32 %v245, 0.0
  %v253 = vmax.f32 %v246, 0.0
  %v254 = vmax.f32 %v247, 0.0
  %v255 = vmax.f32 %v248, 0.0
  %v256 = vmax.f32 %v249, 0.0
  %v257 = vmax.f32 %v250, 0.0
  %v258 = vmax.f32 %v251, 0.0
  %v259 = vld [vmem:[%s1] sm:$0xff]
  %v260 = vld [vmem:[%s1 + $0x8] sm:$0xff]
  %v261 = vld [vmem:[%s1 + $0x10] sm:$0xff]
  %v262 = vld [vmem:[%s1 + $0x18] sm:$0xff]
  %v263 = vld [vmem:[%s1 + $0x20] sm:$0xff]
  %v264 = vld [vmem:[%s1 + $0x28] sm:$0xff]
  %v265 = vld [vmem:[%s1 + $0x30] sm:$0xff]
  %v273 = vunpack.c.l.b16 %v259
  %v274 = vunpack.c.h.b16 %v259
  %v275 = vunpack.c.l.b16 %v260
  %v276 = vunpack.c.h.b16 %v260
  %v277 = vunpack.c.l.b16 %v261
  %v278 = vunpack.c.h.b16 %v261
  %v279 = vunpack.c.l.b16 %v262
  %v280 = vunpack.c.h.b16 %v262
  %v281 = vunpack.c.l.b16 %v263
  %v282 = vunpack.c.h.b16 %v263
  %v283 = vunpack.c.l.b16 %v264
  %v284 = vunpack.c.h.b16 %v264
  %v285 = vunpack.c.l.b16 %v265
  %v286 = vunpack.c.h.b16 %v265
  %v287 = vpack.c.b16 %v275, %v273
  %v288 = vpack.c.b16 %v276, %v274
  %v289 = vpack.c.b16 %v279, %v277
  %v290 = vpack.c.b16 %v280, %v278
  %v291 = vpack.c.b16 %v283, %v281
  %v292 = vpack.c.b16 %v284, %v282
  %v293 = vpack.c.b16 %v285, %v285
  %v294 = vpack.c.b16 %v286, %v286
  %v300 = vsel %vm145, %v288, 0
  %v303 = vsel %vm145, %v290, 0
  %v306 = vsel %vm145, %v292, 0
  %v309 = vsel %vm145, %v294, 0
  %311 = vmatprep.subr.bf16.mxu0 0
  %312 = vmatpush1.bf16.msra.mxu0 %v126
  %313 = vmatprep.subr.bf16.mxu0 0
  %314 = vmatpush1.bf16.msra.mxu0 %v127
  %315 = vmatprep.subr.bf16.mxu0 0
  %316 = vmatpush1.bf16.msra.mxu0 %v128
  %317 = vmatprep.subr.bf16.mxu0 0
  %318 = vmatpush1.bf16.msra.mxu0 %v129
  %319 = vmatprep.subr.bf16.mxu0 0
  %320 = vmatpush1.bf16.msra.mxu0 %v130
  %321 = vmatprep.subr.bf16.mxu0 0
  %322 = vmatpush1.bf16.msra.mxu0 %v131
  %323 = vmatprep.subr.bf16.mxu0 0
  %324 = vmatpush1.bf16.msra.mxu0 %v132
  %325 = vmatprep.subr.bf16.mxu0 0
  %326 = vmatpush1.bf16.msra.mxu0 %v133
  %327 = vmatprep.subr.bf16.mxu0 0
  %328 = vmatpush1.bf16.msra.mxu0 %v134
  %329 = vmatprep.subr.bf16.mxu0 0
  %330 = vmatpush1.bf16.msra.mxu0 %v160
  %331 = vmatprep.subr.bf16.mxu0 0
  %332 = vmatpush1.bf16.msra.mxu0 0
  %333 = vmatprep.subr.bf16.mxu0 0
  %334 = vmatpush1.bf16.msra.mxu0 0
  %335 = vmatprep.subr.bf16.mxu0 0
  %336 = vmatpush1.bf16.msra.mxu0 0
  %337 = vmatprep.subr.bf16.mxu0 0
  %338 = vmatpush1.bf16.msra.mxu0 0
  %339 = vmatprep.subr.bf16.mxu0 0
  %340 = vmatpush1.bf16.msra.mxu0 0
  %341 = vmatprep.subr.bf16.mxu0 0
  %342 = vmatpush1.bf16.msra.mxu0 0
  %343 = vmatprep.mubr.bf16.mxu0 %v300
  %344 = vmatmul.mubr.bf16.gmra.mrb[0].mxu0 %v287
  %v345 = vpop.f32.mrb[0].mxu0
  %v346 = vadd.f32 0.0, %v345
  %v347 = vpop.f32.mrb[0].mxu0
  %v348 = vpop.f32.mrb[0].mxu0
  %v349 = vadd.f32 0.0, %v348
  %v350 = vpop.f32.mrb[0].mxu0
  %351 = vmatprep.mubr.bf16.mxu0 %v303
  %352 = vmatmul.mubr.bf16.gmra.mrb[0].mxu0 %v289
  %v353 = vpop.f32.mrb[0].mxu0
  %v354 = vadd.f32 0.0, %v353
  %v355 = vpop.f32.mrb[0].mxu0
  %v356 = vpop.f32.mrb[0].mxu0
  %v357 = vadd.f32 0.0, %v356
  %v358 = vpop.f32.mrb[0].mxu0
  %359 = vmatprep.mubr.bf16.mxu0 %v306
  %360 = vmatmul.mubr.bf16.gmra.mrb[0].mxu0 %v291
  %v361 = vpop.f32.mrb[0].mxu0
  %v362 = vadd.f32 0.0, %v361
  %v363 = vpop.f32.mrb[0].mxu0
  %v364 = vpop.f32.mrb[0].mxu0
  %v365 = vadd.f32 0.0, %v364
  %v366 = vpop.f32.mrb[0].mxu0
  %367 = vmatprep.mubr.bf16.mxu0 %v309
  %368 = vmatmul.mubr.bf16.gmra.mrb[0].mxu0 %v293
  %v369 = vpop.f32.mrb[0].mxu0
  %v370 = vadd.f32 0.0, %v369
  %v371 = vpop.f32.mrb[0].mxu0
  %v372 = vpop.f32.mrb[0].mxu0
  %v373 = vpop.f32.mrb[0].mxu0
  %374 = vdwg.mxu0
  %v375 = vmul.f32 %v346, %v230
  %v376 = vmul.f32 %v349, %v230
  %v377 = vmul.f32 %v354, %v230
  %v378 = vmul.f32 %v357, %v230
  %v379 = vmul.f32 %v362, %v230
  %v380 = vmul.f32 %v365, %v230
  %v381 = vmul.f32 %v370, %v230
  %v382 = vadd.f32 %v375, %v243
  %v383 = vadd.f32 %v376, %v243
  %v384 = vadd.f32 %v377, %v243
  %v385 = vadd.f32 %v378, %v243
  %v386 = vadd.f32 %v379, %v243
  %v387 = vadd.f32 %v380, %v243
  %v388 = vadd.f32 %v381, %v243
  %v389 = vmax.f32 %v382, 0.0
  %v390 = vmax.f32 %v383, 0.0
  %v391 = vmax.f32 %v384, 0.0
  %v392 = vmax.f32 %v385, 0.0
  %v393 = vmax.f32 %v386, 0.0
  %v394 = vmax.f32 %v387, 0.0
  %v395 = vmax.f32 %v388, 0.0
  %v396 = vmax.f32 %v252, %v389
  %v397 = vmax.f32 %v253, %v390
  %v398 = vmax.f32 %v254, %v391
  %v399 = vmax.f32 %v255, %v392
  %v400 = vmax.f32 %v256, %v393
  %v401 = vmax.f32 %v257, %v394
  %v402 = vmax.f32 %v258, %v395
  %v403 = vld [vmem:[%s2] sm:$0xff]
  %v404 = vld [vmem:[%s2 + $0x8] sm:$0xff]
  %v405 = vld [vmem:[%s2 + $0x10] sm:$0xff]
  %v406 = vld [vmem:[%s2 + $0x18] sm:$0xff]
  %v407 = vld [vmem:[%s2 + $0x20] sm:$0xff]
  %v408 = vld [vmem:[%s2 + $0x28] sm:$0xff]
  %v409 = vld [vmem:[%s2 + $0x30] sm:$0xff]
  %v417 = vunpack.c.l.b16 %v403
  %v418 = vunpack.c.h.b16 %v403
  %v419 = vunpack.c.l.b16 %v404
  %v420 = vunpack.c.h.b16 %v404
  %v421 = vunpack.c.l.b16 %v405
  %v422 = vunpack.c.h.b16 %v405
  %v423 = vunpack.c.l.b16 %v406
  %v424 = vunpack.c.h.b16 %v406
  %v425 = vunpack.c.l.b16 %v407
  %v426 = vunpack.c.h.b16 %v407
  %v427 = vunpack.c.l.b16 %v408
  %v428 = vunpack.c.h.b16 %v408
  %v429 = vunpack.c.l.b16 %v409
  %v430 = vunpack.c.h.b16 %v409
  %v431 = vpack.c.b16 %v419, %v417
  %v432 = vpack.c.b16 %v420, %v418
  %v433 = vpack.c.b16 %v423, %v421
  %v434 = vpack.c.b16 %v424, %v422
  %v435 = vpack.c.b16 %v427, %v425
  %v436 = vpack.c.b16 %v428, %v426
  %v437 = vpack.c.b16 %v429, %v429
  %v438 = vpack.c.b16 %v430, %v430
  %v444 = vsel %vm145, %v432, 0
  %v447 = vsel %vm145, %v434, 0
  %v450 = vsel %vm145, %v436, 0
  %v453 = vsel %vm145, %v438, 0
  %455 = vmatprep.subr.bf16.mxu0 0
  %456 = vmatpush1.bf16.msra.mxu0 %v126
  %457 = vmatprep.subr.bf16.mxu0 0
  %458 = vmatpush1.bf16.msra.mxu0 %v127
  %459 = vmatprep.subr.bf16.mxu0 0
  %460 = vmatpush1.bf16.msra.mxu0 %v128
  %461 = vmatprep.subr.bf16.mxu0 0
  %462 = vmatpush1.bf16.msra.mxu0 %v129
  %463 = vmatprep.subr.bf16.mxu0 0
  %464 = vmatpush1.bf16.msra.mxu0 %v130
  %465 = vmatprep.subr.bf16.mxu0 0
  %466 = vmatpush1.bf16.msra.mxu0 %v131
  %467 = vmatprep.subr.bf16.mxu0 0
  %468 = vmatpush1.bf16.msra.mxu0 %v132
  %469 = vmatprep.subr.bf16.mxu0 0
  %470 = vmatpush1.bf16.msra.mxu0 %v133
  %471 = vmatprep.subr.bf16.mxu0 0
  %472 = vmatpush1.bf16.msra.mxu0 %v134
  %473 = vmatprep.subr.bf16.mxu0 0
  %474 = vmatpush1.bf16.msra.mxu0 %v160
  %475 = vmatprep.subr.bf16.mxu0 0
  %476 = vmatpush1.bf16.msra.mxu0 0
  %477 = vmatprep.subr.bf16.mxu0 0
  %478 = vmatpush1.bf16.msra.mxu0 0
  %479 = vmatprep.subr.bf16.mxu0 0
  %480 = vmatpush1.bf16.msra.mxu0 0
  %481 = vmatprep.subr.bf16.mxu0 0
  %482 = vmatpush1.bf16.msra.mxu0 0
  %483 = vmatprep.subr.bf16.mxu0 0
  %484 = vmatpush1.bf16.msra.mxu0 0
  %485 = vmatprep.subr.bf16.mxu0 0
  %486 = vmatpush1.bf16.msra.mxu0 0
  %487 = vmatprep.mubr.bf16.mxu0 %v444
  %488 = vmatmul.mubr.bf16.gmra.mrb[0].mxu0 %v431
  %v489 = vpop.f32.mrb[0].mxu0
  %v490 = vadd.f32 0.0, %v489
  %v491 = vpop.f32.mrb[0].mxu0
  %v492 = vpop.f32.mrb[0].mxu0
  %v493 = vadd.f32 0.0, %v492
  %v494 = vpop.f32.mrb[0].mxu0
  %495 = vmatprep.mubr.bf16.mxu0 %v447
  %496 = vmatmul.mubr.bf16.gmra.mrb[0].mxu0 %v433
  %v497 = vpop.f32.mrb[0].mxu0
  %v498 = vadd.f32 0.0, %v497
  %v499 = vpop.f32.mrb[0].mxu0
  %v500 = vpop.f32.mrb[0].mxu0
  %v501 = vadd.f32 0.0, %v500
  %v502 = vpop.f32.mrb[0].mxu0
  %503 = vmatprep.mubr.bf16.mxu0 %v450
  %504 = vmatmul.mubr.bf16.gmra.mrb[0].mxu0 %v435
  %v505 = vpop.f32.mrb[0].mxu0
  %v506 = vadd.f32 0.0, %v505
  %v507 = vpop.f32.mrb[0].mxu0
  %v508 = vpop.f32.mrb[0].mxu0
  %v509 = vadd.f32 0.0, %v508
  %v510 = vpop.f32.mrb[0].mxu0
  %511 = vmatprep.mubr.bf16.mxu0 %v453
  %512 = vmatmul.mubr.bf16.gmra.mrb[0].mxu0 %v437
  %v513 = vpop.f32.mrb[0].mxu0
  %v514 = vadd.f32 0.0, %v513
  %v515 = vpop.f32.mrb[0].mxu0
  %v516 = vpop.f32.mrb[0].mxu0
  %v517 = vpop.f32.mrb[0].mxu0
  %518 = vdwg.mxu0
  %v519 = vmul.f32 %v490, %v230
  %v520 = vmul.f32 %v493, %v230
  %v521 = vmul.f32 %v498, %v230
  %v522 = vmul.f32 %v501, %v230
  %v523 = vmul.f32 %v506, %v230
  %v524 = vmul.f32 %v509, %v230
  %v525 = vmul.f32 %v514, %v230
  %v526 = vadd.f32 %v519, %v243
  %v527 = vadd.f32 %v520, %v243
  %v528 = vadd.f32 %v521, %v243
  %v529 = vadd.f32 %v522, %v243
  %v530 = vadd.f32 %v523, %v243
  %v531 = vadd.f32 %v524, %v243
  %v532 = vadd.f32 %v525, %v243
  %v533 = vmax.f32 %v526, 0.0
  %v534 = vmax.f32 %v527, 0.0
  %v535 = vmax.f32 %v528, 0.0
  %v536 = vmax.f32 %v529, 0.0
  %v537 = vmax.f32 %v530, 0.0
  %v538 = vmax.f32 %v531, 0.0
  %v539 = vmax.f32 %v532, 0.0
  %v540 = vld [vmem:[%s3] sm:$0xff]
  %v541 = vld [vmem:[%s3 + $0x8] sm:$0xff]
  %v542 = vld [vmem:[%s3 + $0x10] sm:$0xff]
  %v543 = vld [vmem:[%s3 + $0x18] sm:$0xff]
  %v544 = vld [vmem:[%s3 + $0x20] sm:$0xff]
  %v545 = vld [vmem:[%s3 + $0x28] sm:$0xff]
  %v546 = vld [vmem:[%s3 + $0x30] sm:$0xff]
  %v554 = vunpack.c.l.b16 %v540
  %v555 = vunpack.c.h.b16 %v540
  %v556 = vunpack.c.l.b16 %v541
  %v557 = vunpack.c.h.b16 %v541
  %v558 = vunpack.c.l.b16 %v542
  %v559 = vunpack.c.h.b16 %v542
  %v560 = vunpack.c.l.b16 %v543
  %v561 = vunpack.c.h.b16 %v543
  %v562 = vunpack.c.l.b16 %v544
  %v563 = vunpack.c.h.b16 %v544
  %v564 = vunpack.c.l.b16 %v545
  %v565 = vunpack.c.h.b16 %v545
  %v566 = vunpack.c.l.b16 %v546
  %v567 = vunpack.c.h.b16 %v546
  %v568 = vpack.c.b16 %v556, %v554
  %v569 = vpack.c.b16 %v557, %v555
  %v570 = vpack.c.b16 %v560, %v558
  %v571 = vpack.c.b16 %v561, %v559
  %v572 = vpack.c.b16 %v564, %v562
  %v573 = vpack.c.b16 %v565, %v563
  %v574 = vpack.c.b16 %v566, %v566
  %v575 = vpack.c.b16 %v567, %v567
  %v581 = vsel %vm145, %v569, 0
  %v584 = vsel %vm145, %v571, 0
  %v587 = vsel %vm145, %v573, 0
  %v590 = vsel %vm145, %v575, 0
  %592 = vmatprep.subr.bf16.mxu0 0
  %593 = vmatpush1.bf16.msra.mxu0 %v126
  %594 = vmatprep.subr.bf16.mxu0 0
  %595 = vmatpush1.bf16.msra.mxu0 %v127
  %596 = vmatprep.subr.bf16.mxu0 0
  %597 = vmatpush1.bf16.msra.mxu0 %v128
  %598 = vmatprep.subr.bf16.mxu0 0
  %599 = vmatpush1.bf16.msra.mxu0 %v129
  %600 = vmatprep.subr.bf16.mxu0 0
  %601 = vmatpush1.bf16.msra.mxu0 %v130
  %602 = vmatprep.subr.bf16.mxu0 0
  %603 = vmatpush1.bf16.msra.mxu0 %v131
  %604 = vmatprep.subr.bf16.mxu0 0
  %605 = vmatpush1.bf16.msra.mxu0 %v132
  %606 = vmatprep.subr.bf16.mxu0 0
  %607 = vmatpush1.bf16.msra.mxu0 %v133
  %608 = vmatprep.subr.bf16.mxu0 0
  %609 = vmatpush1.bf16.msra.mxu0 %v134
  %610 = vmatprep.subr.bf16.mxu0 0
  %611 = vmatpush1.bf16.msra.mxu0 %v160
  %612 = vmatprep.subr.bf16.mxu0 0
  %613 = vmatpush1.bf16.msra.mxu0 0
  %614 = vmatprep.subr.bf16.mxu0 0
  %615 = vmatpush1.bf16.msra.mxu0 0
  %616 = vmatprep.subr.bf16.mxu0 0
  %617 = vmatpush1.bf16.msra.mxu0 0
  %618 = vmatprep.subr.bf16.mxu0 0
  %619 = vmatpush1.bf16.msra.mxu0 0
  %620 = vmatprep.subr.bf16.mxu0 0
  %621 = vmatpush1.bf16.msra.mxu0 0
  %622 = vmatprep.subr.bf16.mxu0 0
  %623 = vmatpush1.bf16.msra.mxu0 0
  %624 = vmatprep.mubr.bf16.mxu0 %v581
  %625 = vmatmul.mubr.bf16.gmra.mrb[0].mxu0 %v568
  %v626 = vpop.f32.mrb[0].mxu0
  %v627 = vadd.f32 0.0, %v626
  %v628 = vpop.f32.mrb[0].mxu0
  %v629 = vpop.f32.mrb[0].mxu0
  %v630 = vadd.f32 0.0, %v629
  %v631 = vpop.f32.mrb[0].mxu0
  %632 = vmatprep.mubr.bf16.mxu0 %v584
  %633 = vmatmul.mubr.bf16.gmra.mrb[0].mxu0 %v570
  %v634 = vpop.f32.mrb[0].mxu0
  %v635 = vadd.f32 0.0, %v634
  %v636 = vpop.f32.mrb[0].mxu0
  %v637 = vpop.f32.mrb[0].mxu0
  %v638 = vadd.f32 0.0, %v637
  %v639 = vpop.f32.mrb[0].mxu0
  %640 = vmatprep.mubr.bf16.mxu0 %v587
  %641 = vmatmul.mubr.bf16.gmra.mrb[0].mxu0 %v572
  %v642 = vpop.f32.mrb[0].mxu0
  %v643 = vadd.f32 0.0, %v642
  %v644 = vpop.f32.mrb[0].mxu0
  %v645 = vpop.f32.mrb[0].mxu0
  %v646 = vadd.f32 0.0, %v645
  %v647 = vpop.f32.mrb[0].mxu0
  %648 = vmatprep.mubr.bf16.mxu0 %v590
  %649 = vmatmul.mubr.bf16.gmra.mrb[0].mxu0 %v574
  %v650 = vpop.f32.mrb[0].mxu0
  %v651 = vadd.f32 0.0, %v650
  %v652 = vpop.f32.mrb[0].mxu0
  %v653 = vpop.f32.mrb[0].mxu0
  %v654 = vpop.f32.mrb[0].mxu0
  %655 = vdwg.mxu0
  %v656 = vmul.f32 %v627, %v230
  %v657 = vmul.f32 %v630, %v230
  %v658 = vmul.f32 %v635, %v230
  %v659 = vmul.f32 %v638, %v230
  %v660 = vmul.f32 %v643, %v230
  %v661 = vmul.f32 %v646, %v230
  %v662 = vmul.f32 %v651, %v230
  %v663 = vadd.f32 %v656, %v243
  %v664 = vadd.f32 %v657, %v243
  %v665 = vadd.f32 %v658, %v243
  %v666 = vadd.f32 %v659, %v243
  %v667 = vadd.f32 %v660, %v243
  %v668 = vadd.f32 %v661, %v243
  %v669 = vadd.f32 %v662, %v243
  %v670 = vmax.f32 %v663, 0.0
  %v671 = vmax.f32 %v664, 0.0
  %v672 = vmax.f32 %v665, 0.0
  %v673 = vmax.f32 %v666, 0.0
  %v674 = vmax.f32 %v667, 0.0
  %v675 = vmax.f32 %v668, 0.0
  %v676 = vmax.f32 %v669, 0.0
  %v677 = vmax.f32 %v533, %v670
  %v678 = vmax.f32 %v534, %v671
  %v679 = vmax.f32 %v535, %v672
  %v680 = vmax.f32 %v536, %v673
  %v681 = vmax.f32 %v537, %v674
  %v682 = vmax.f32 %v538, %v675
  %v683 = vmax.f32 %v539, %v676
  %v684 = vmax.f32 %v396, %v677
  %v685 = vmax.f32 %v397, %v678
  %v686 = vmax.f32 %v398, %v679
  %v687 = vmax.f32 %v399, %v680
  %v688 = vmax.f32 %v400, %v681
  %v689 = vmax.f32 %v401, %v682
  %v690 = vmax.f32 %v402, %v683
  %vm691 = vcmask 130048
  %692 = vst.msk [vmem:[%s7] sm:$0xff] %vm691, %v684
  %693 = vst.msk [vmem:[%s7 + $0x8] sm:$0xff] %vm691, %v685
  %694 = vst.msk [vmem:[%s7 + $0x10] sm:$0xff] %vm691, %v686
  %695 = vst.msk [vmem:[%s7 + $0x18] sm:$0xff] %vm691, %v687
  %696 = vst.msk [vmem:[%s7 + $0x20] sm:$0xff] %vm691, %v688
  %697 = vst.msk [vmem:[%s7 + $0x28] sm:$0xff] %vm691, %v689
  %698 = vst.msk [vmem:[%s7 + $0x30] sm:$0xff] %vm691, %v690
  // Predicated region
  $region30: #{_lambda_.4} parent=0 // pred_check
    _
  $region31: #{_lambda_.4} parent=0 // pred_check_branch
    %700 = sbr.rel (0) target = $region33
  $region32: #{_lambda_.4} parent=0 // pred_region
    _
  $region33: #{_lambda_.4} parent=0 // pred_fallthru
    _
  // Predicated region
  $region34: #{_lambda_.4} parent=0 // pred_check
    _
  $region35: #{_lambda_.4} parent=0 // pred_check_branch
    %702 = sbr.rel (0) target = $region37
  $region36: #{_lambda_.4} parent=0 // pred_region
    _
  $region37: #{_lambda_.4} parent=0 // pred_fallthru
    _

// kernel: _lambda_.5
$region0: #{_lambda_.5}
  #allocation0 [shape = 'u32[]', space=smem, size = 0x4, offset = 0x4, fixed_abs, tag = 'smem constant byte address 0x4 - core index']
  #allocation1 [shape = 'u32[144,128]{1,0:T(1,128)}', space=vmem, size = 0x12000, scoped, tag = 'internal scratch']
  %s0 = inlined_call_operand.vmem [shape: bf16[8,400], index: 0, kind: input, shape index: {}]
  %s1 = inlined_call_operand.vmem [shape: bf16[400,500], index: 1, kind: input, shape index: {}]
  %s2 = inlined_call_operand.vmem [shape: f32[1,500], index: 2, kind: input, shape index: {}]
  %s3 = inlined_call_operand.vmem [shape: bf16[500,300], index: 3, kind: input, shape index: {}]
  %s4 = inlined_call_operand.vmem [shape: f32[1,300], index: 4, kind: input, shape index: {}]
  %s5 = inlined_call_operand.vmem [shape: bf16[300,100], index: 5, kind: input, shape index: {}]
  %s6 = inlined_call_operand.vmem [shape: f32[1,100], index: 6, kind: input, shape index: {}]
  %s7 = inlined_call_operand.vmem [shape: f32[8,100], index: 7, kind: output, shape index: {}]
  %s8 = sld [smem:[#allocation0]]
  $region38: #{_lambda_.5} parent=0
    _
  %s10 = ssub.s32 1, %s8
  %s11 = scalar_select 0, %s10, %s8
  // Predicated region
  $region2: #{_lambda_.5} parent=0 // pred_check
    _
  $region3: #{_lambda_.5} parent=0 // pred_check_branch
    %13 = sbr.rel (0) target = $region5
  $region4: #{_lambda_.5} parent=0 // pred_region
    _
  $region5: #{_lambda_.5} parent=0 // pred_fallthru
    _
  // Predicated region
  $region6: #{_lambda_.5} parent=0 // pred_check
    _
  $region7: #{_lambda_.5} parent=0 // pred_check_branch
    %15 = sbr.rel (0) target = $region9
  $region8: #{_lambda_.5} parent=0 // pred_region
    _
  $region9: #{_lambda_.5} parent=0 // pred_fallthru
    _
  // Predicated region
  $region10: #{_lambda_.5} parent=0 // pred_check
    _
  $region11: #{_lambda_.5} parent=0 // pred_check_branch
    %17 = sbr.rel (0) target = $region13
  $region12: #{_lambda_.5} parent=0 // pred_region
    _
  $region13: #{_lambda_.5} parent=0 // pred_fallthru
    _
  // Predicated region
  $region14: #{_lambda_.5} parent=0 // pred_check
    _
  $region15: #{_lambda_.5} parent=0 // pred_check_branch
    %19 = sbr.rel (0) target = $region17
  $region16: #{_lambda_.5} parent=0 // pred_region
    _
  $region17: #{_lambda_.5} parent=0 // pred_fallthru
    _
  // Predicated region
  $region18: #{_lambda_.5} parent=0 // pred_check
    _
  $region19: #{_lambda_.5} parent=0 // pred_check_branch
    %21 = sbr.rel (0) target = $region21
  $region20: #{_lambda_.5} parent=0 // pred_region
    _
  $region21: #{_lambda_.5} parent=0 // pred_fallthru
    _
  // Predicated region
  $region22: #{_lambda_.5} parent=0 // pred_check
    _
  $region23: #{_lambda_.5} parent=0 // pred_check_branch
    %23 = sbr.rel (0) target = $region25
  $region24: #{_lambda_.5} parent=0 // pred_region
    _
  $region25: #{_lambda_.5} parent=0 // pred_fallthru
    _
  // Predicated region
  $region26: #{_lambda_.5} parent=0 // pred_check
    _
  $region27: #{_lambda_.5} parent=0 // pred_check_branch
    %25 = sbr.rel (0) target = $region29
  $region28: #{_lambda_.5} parent=0 // pred_region
    _
  $region29: #{_lambda_.5} parent=0 // pred_fallthru
    _
  %v27 = vld [vmem:[%s0] sm:$0xff]
  %v28 = vld [vmem:[%s0 + $0x8] sm:$0xff]
  %v29 = vld [vmem:[%s1] sm:$0xff]
  %v30 = vld [vmem:[%s1 + $0x8] sm:$0xff]
  %v31 = vld [vmem:[%s1 + $0x10] sm:$0xff]
  %v32 = vld [vmem:[%s1 + $0x18] sm:$0xff]
  %v33 = vld [vmem:[%s1 + $0x20] sm:$0xff]
  %v34 = vld [vmem:[%s1 + $0x28] sm:$0xff]
  %v35 = vld [vmem:[%s1 + $0x30] sm:$0xff]
  %v36 = vld [vmem:[%s1 + $0x38] sm:$0xff]
  %v37 = vld [vmem:[%s1 + $0x40] sm:$0xff]
  %v38 = vld [vmem:[%s1 + $0x48] sm:$0xff]
  %v39 = vld [vmem:[%s1 + $0x50] sm:$0xff]
  %v40 = vld [vmem:[%s1 + $0x58] sm:$0xff]
  %v41 = vld [vmem:[%s1 + $0x60] sm:$0xff]
  %v42 = vld [vmem:[%s1 + $0x68] sm:$0xff]
  %v43 = vld [vmem:[%s1 + $0x70] sm:$0xff]
  %v44 = vld [vmem:[%s1 + $0x78] sm:$0xff]
  %v45 = vld [vmem:[%s1 + $0x80] sm:$0xff]
  %v46 = vld [vmem:[%s1 + $0x88] sm:$0xff]
  %v47 = vld [vmem:[%s1 + $0x90] sm:$0xff]
  %v48 = vld [vmem:[%s1 + $0x98] sm:$0xff]
  %v49 = vld [vmem:[%s1 + $0xa0] sm:$0xff]
  %v50 = vld [vmem:[%s1 + $0xa8] sm:$0xff]
  %v51 = vld [vmem:[%s1 + $0xb0] sm:$0xff]
  %v52 = vld [vmem:[%s1 + $0xb8] sm:$0xff]
  %v53 = vld [vmem:[%s1 + $0xc0] sm:$0xff]
  %v54 = vld [vmem:[%s1 + $0xc8] sm:$0xff]
  %v55 = vld [vmem:[%s1 + $0xd0] sm:$0xff]
  %v56 = vld [vmem:[%s1 + $0xd8] sm:$0xff]
  %v57 = vld [vmem:[%s1 + $0xe0] sm:$0xff]
  %v58 = vld [vmem:[%s1 + $0xe8] sm:$0xff]
  %v59 = vld [vmem:[%s1 + $0xf0] sm:$0xff]
  %v60 = vld [vmem:[%s1 + $0xf8] sm:$0xff]
  %v61 = vld [vmem:[%s1 + $0x100] sm:$0xff]
  %v62 = vld [vmem:[%s1 + $0x108] sm:$0xff]
  %v63 = vld [vmem:[%s1 + $0x110] sm:$0xff]
  %v64 = vld [vmem:[%s1 + $0x118] sm:$0xff]
  %v65 = vld [vmem:[%s1 + $0x120] sm:$0xff]
  %v66 = vld [vmem:[%s1 + $0x128] sm:$0xff]
  %v67 = vld [vmem:[%s1 + $0x130] sm:$0xff]
  %v68 = vld [vmem:[%s1 + $0x138] sm:$0xff]
  %v69 = vld [vmem:[%s1 + $0x140] sm:$0xff]
  %v70 = vld [vmem:[%s1 + $0x148] sm:$0xff]
  %v71 = vld [vmem:[%s1 + $0x150] sm:$0xff]
  %v72 = vld [vmem:[%s1 + $0x158] sm:$0xff]
  %v73 = vld [vmem:[%s1 + $0x160] sm:$0xff]
  %v74 = vld [vmem:[%s1 + $0x168] sm:$0xff]
  %v75 = vld [vmem:[%s1 + $0x170] sm:$0xff]
  %v76 = vld [vmem:[%s1 + $0x178] sm:$0xff]
  %v77 = vld [vmem:[%s1 + $0x180] sm:$0xff]
  %v78 = vld [vmem:[%s1 + $0x188] sm:$0xff]
  %v79 = vld [vmem:[%s1 + $0x190] sm:$0xff]
  %v80 = vld [vmem:[%s1 + $0x198] sm:$0xff]
  %v81 = vld [vmem:[%s1 + $0x1a0] sm:$0xff]
  %v82 = vld [vmem:[%s1 + $0x1a8] sm:$0xff]
  %v83 = vld [vmem:[%s1 + $0x1b0] sm:$0xff]
  %v84 = vld [vmem:[%s1 + $0x1b8] sm:$0xff]
  %v85 = vld [vmem:[%s1 + $0x1c0] sm:$0xff]
  %v86 = vld [vmem:[%s1 + $0x1c8] sm:$0xff]
  %v87 = vld [vmem:[%s1 + $0x1d0] sm:$0xff]
  %v88 = vld [vmem:[%s1 + $0x1d8] sm:$0xff]
  %v89 = vld [vmem:[%s1 + $0x1e0] sm:$0xff]
  %v90 = vld [vmem:[%s1 + $0x1e8] sm:$0xff]
  %v91 = vld [vmem:[%s1 + $0x1f0] sm:$0xff]
  %v92 = vld [vmem:[%s1 + $0x1f8] sm:$0xff]
  %v93 = vld [vmem:[%s1 + $0x200] sm:$0xff]
  %v94 = vld [vmem:[%s1 + $0x208] sm:$0xff]
  %v95 = vld [vmem:[%s1 + $0x210] sm:$0xff]
  %v96 = vld [vmem:[%s1 + $0x218] sm:$0xff]
  %v97 = vld [vmem:[%s1 + $0x220] sm:$0xff]
  %v98 = vld [vmem:[%s1 + $0x228] sm:$0xff]
  %v99 = vld [vmem:[%s1 + $0x230] sm:$0xff]
  %v100 = vld [vmem:[%s1 + $0x238] sm:$0xff]
  %v101 = vld [vmem:[%s1 + $0x240] sm:$0xff]
  %v102 = vld [vmem:[%s1 + $0x248] sm:$0xff]
  %v103 = vld [vmem:[%s1 + $0x250] sm:$0xff]
  %v104 = vld [vmem:[%s1 + $0x258] sm:$0xff]
  %v105 = vld [vmem:[%s1 + $0x260] sm:$0xff]
  %v106 = vld [vmem:[%s1 + $0x268] sm:$0xff]
  %v107 = vld [vmem:[%s1 + $0x270] sm:$0xff]
  %v108 = vld [vmem:[%s1 + $0x278] sm:$0xff]
  %v109 = vld [vmem:[%s1 + $0x280] sm:$0xff]
  %v110 = vld [vmem:[%s1 + $0x288] sm:$0xff]
  %v111 = vld [vmem:[%s1 + $0x290] sm:$0xff]
  %v112 = vld [vmem:[%s1 + $0x298] sm:$0xff]
  %v113 = vld [vmem:[%s1 + $0x2a0] sm:$0xff]
  %v114 = vld [vmem:[%s1 + $0x2a8] sm:$0xff]
  %v115 = vld [vmem:[%s1 + $0x2b0] sm:$0xff]
  %v116 = vld [vmem:[%s1 + $0x2b8] sm:$0xff]
  %v117 = vld [vmem:[%s1 + $0x2c0] sm:$0xff]
  %v118 = vld [vmem:[%s1 + $0x2c8] sm:$0xff]
  %v119 = vld [vmem:[%s1 + $0x2d0] sm:$0xff]
  %v120 = vld [vmem:[%s1 + $0x2d8] sm:$0xff]
  %v121 = vld [vmem:[%s1 + $0x2e0] sm:$0xff]
  %v122 = vld [vmem:[%s1 + $0x2e8] sm:$0xff]
  %v123 = vld [vmem:[%s1 + $0x2f0] sm:$0xff]
  %v124 = vld [vmem:[%s1 + $0x2f8] sm:$0xff]
  %v125 = vld [vmem:[%s1 + $0x300] sm:$0xff]
  %v126 = vld [vmem:[%s1 + $0x308] sm:$0xff]
  %v127 = vld [vmem:[%s1 + $0x310] sm:$0xff]
  %v128 = vld [vmem:[%s1 + $0x318] sm:$0xff]
  %v129 = vld [vmem:[%s2] sm:$0xf]
  %v131 = vlaneseq
  %v132 = vshrl.u32 %v131, 7
  %v133 = vsub.s32 0, %v132
  %v134 = vrot.slane %v129, %v133
  %v135 = vlaneseq
  %v136 = vshrl.u32 %v135, 7
  %v137 = vsub.s32 1, %v136
  %v138 = vrot.slane %v129, %v137
  %v139 = vlaneseq
  %v140 = vshrl.u32 %v139, 7
  %v141 = vsub.s32 2, %v140
  %v142 = vrot.slane %v129, %v141
  %v143 = vlaneseq
  %v144 = vshrl.u32 %v143, 7
  %v145 = vsub.s32 3, %v144
  %v146 = vrot.slane %v129, %v145
  %v153 = vunpack.c.l.b16 %v27
  %v154 = vunpack.c.h.b16 %v27
  %v155 = vunpack.c.l.b16 %v28
  %v156 = vunpack.c.h.b16 %v28
  %v157 = vpack.c.b16 %v153, %v153
  %v158 = vpack.c.b16 %v154, %v154
  %v159 = vpack.c.b16 %v155, %v155
  %v160 = vpack.c.b16 %v156, %v156
  %v264 = vunpack.c.l.b16 %v29
  %v265 = vunpack.c.h.b16 %v29
  %v266 = vunpack.c.l.b16 %v30
  %v267 = vunpack.c.h.b16 %v30
  %v268 = vunpack.c.l.b16 %v31
  %v269 = vunpack.c.h.b16 %v31
  %v270 = vunpack.c.l.b16 %v32
  %v271 = vunpack.c.h.b16 %v32
  %v272 = vunpack.c.l.b16 %v33
  %v273 = vunpack.c.h.b16 %v33
  %v274 = vunpack.c.l.b16 %v34
  %v275 = vunpack.c.h.b16 %v34
  %v276 = vunpack.c.l.b16 %v35
  %v277 = vunpack.c.h.b16 %v35
  %v278 = vunpack.c.l.b16 %v36
  %v279 = vunpack.c.h.b16 %v36
  %v280 = vunpack.c.l.b16 %v37
  %v281 = vunpack.c.h.b16 %v37
  %v282 = vunpack.c.l.b16 %v38
  %v283 = vunpack.c.h.b16 %v38
  %v284 = vunpack.c.l.b16 %v39
  %v285 = vunpack.c.h.b16 %v39
  %v286 = vunpack.c.l.b16 %v40
  %v287 = vunpack.c.h.b16 %v40
  %v288 = vunpack.c.l.b16 %v41
  %v289 = vunpack.c.h.b16 %v41
  %v290 = vunpack.c.l.b16 %v42
  %v291 = vunpack.c.h.b16 %v42
  %v292 = vunpack.c.l.b16 %v43
  %v293 = vunpack.c.h.b16 %v43
  %v294 = vunpack.c.l.b16 %v44
  %v295 = vunpack.c.h.b16 %v44
  %v296 = vunpack.c.l.b16 %v45
  %v297 = vunpack.c.h.b16 %v45
  %v298 = vunpack.c.l.b16 %v46
  %v299 = vunpack.c.h.b16 %v46
  %v300 = vunpack.c.l.b16 %v47
  %v301 = vunpack.c.h.b16 %v47
  %v302 = vunpack.c.l.b16 %v48
  %v303 = vunpack.c.h.b16 %v48
  %v304 = vunpack.c.l.b16 %v49
  %v305 = vunpack.c.h.b16 %v49
  %v306 = vunpack.c.l.b16 %v50
  %v307 = vunpack.c.h.b16 %v50
  %v308 = vunpack.c.l.b16 %v51
  %v309 = vunpack.c.h.b16 %v51
  %v310 = vunpack.c.l.b16 %v52
  %v311 = vunpack.c.h.b16 %v52
  %v312 = vunpack.c.l.b16 %v53
  %v313 = vunpack.c.h.b16 %v53
  %v314 = vunpack.c.l.b16 %v54
  %v315 = vunpack.c.h.b16 %v54
  %v316 = vunpack.c.l.b16 %v55
  %v317 = vunpack.c.h.b16 %v55
  %v318 = vunpack.c.l.b16 %v56
  %v319 = vunpack.c.h.b16 %v56
  %v320 = vunpack.c.l.b16 %v57
  %v321 = vunpack.c.h.b16 %v57
  %v322 = vunpack.c.l.b16 %v58
  %v323 = vunpack.c.h.b16 %v58
  %v324 = vunpack.c.l.b16 %v59
  %v325 = vunpack.c.h.b16 %v59
  %v326 = vunpack.c.l.b16 %v60
  %v327 = vunpack.c.h.b16 %v60
  %v328 = vunpack.c.l.b16 %v61
  %v329 = vunpack.c.h.b16 %v61
  %v330 = vunpack.c.l.b16 %v62
  %v331 = vunpack.c.h.b16 %v62
  %v332 = vunpack.c.l.b16 %v63
  %v333 = vunpack.c.h.b16 %v63
  %v334 = vunpack.c.l.b16 %v64
  %v335 = vunpack.c.h.b16 %v64
  %v336 = vunpack.c.l.b16 %v65
  %v337 = vunpack.c.h.b16 %v65
  %v338 = vunpack.c.l.b16 %v66
  %v339 = vunpack.c.h.b16 %v66
  %v340 = vunpack.c.l.b16 %v67
  %v341 = vunpack.c.h.b16 %v67
  %v342 = vunpack.c.l.b16 %v68
  %v343 = vunpack.c.h.b16 %v68
  %v344 = vunpack.c.l.b16 %v69
  %v345 = vunpack.c.h.b16 %v69
  %v346 = vunpack.c.l.b16 %v70
  %v347 = vunpack.c.h.b16 %v70
  %v348 = vunpack.c.l.b16 %v71
  %v349 = vunpack.c.h.b16 %v71
  %v350 = vunpack.c.l.b16 %v72
  %v351 = vunpack.c.h.b16 %v72
  %v352 = vunpack.c.l.b16 %v73
  %v353 = vunpack.c.h.b16 %v73
  %v354 = vunpack.c.l.b16 %v74
  %v355 = vunpack.c.h.b16 %v74
  %v356 = vunpack.c.l.b16 %v75
  %v357 = vunpack.c.h.b16 %v75
  %v358 = vunpack.c.l.b16 %v76
  %v359 = vunpack.c.h.b16 %v76
  %v360 = vunpack.c.l.b16 %v77
  %v361 = vunpack.c.h.b16 %v77
  %v362 = vunpack.c.l.b16 %v78
  %v363 = vunpack.c.h.b16 %v78
  %v364 = vunpack.c.l.b16 %v79
  %v365 = vunpack.c.h.b16 %v79
  %v366 = vunpack.c.l.b16 %v80
  %v367 = vunpack.c.h.b16 %v80
  %v368 = vunpack.c.l.b16 %v81
  %v369 = vunpack.c.h.b16 %v81
  %v370 = vunpack.c.l.b16 %v82
  %v371 = vunpack.c.h.b16 %v82
  %v372 = vunpack.c.l.b16 %v83
  %v373 = vunpack.c.h.b16 %v83
  %v374 = vunpack.c.l.b16 %v84
  %v375 = vunpack.c.h.b16 %v84
  %v376 = vunpack.c.l.b16 %v85
  %v377 = vunpack.c.h.b16 %v85
  %v378 = vunpack.c.l.b16 %v86
  %v379 = vunpack.c.h.b16 %v86
  %v380 = vunpack.c.l.b16 %v87
  %v381 = vunpack.c.h.b16 %v87
  %v382 = vunpack.c.l.b16 %v88
  %v383 = vunpack.c.h.b16 %v88
  %v384 = vunpack.c.l.b16 %v89
  %v385 = vunpack.c.h.b16 %v89
  %v386 = vunpack.c.l.b16 %v90
  %v387 = vunpack.c.h.b16 %v90
  %v388 = vunpack.c.l.b16 %v91
  %v389 = vunpack.c.h.b16 %v91
  %v390 = vunpack.c.l.b16 %v92
  %v391 = vunpack.c.h.b16 %v92
  %v392 = vunpack.c.l.b16 %v93
  %v393 = vunpack.c.h.b16 %v93
  %v394 = vunpack.c.l.b16 %v94
  %v395 = vunpack.c.h.b16 %v94
  %v396 = vunpack.c.l.b16 %v95
  %v397 = vunpack.c.h.b16 %v95
  %v398 = vunpack.c.l.b16 %v96
  %v399 = vunpack.c.h.b16 %v96
  %v400 = vunpack.c.l.b16 %v97
  %v401 = vunpack.c.h.b16 %v97
  %v402 = vunpack.c.l.b16 %v98
  %v403 = vunpack.c.h.b16 %v98
  %v404 = vunpack.c.l.b16 %v99
  %v405 = vunpack.c.h.b16 %v99
  %v406 = vunpack.c.l.b16 %v100
  %v407 = vunpack.c.h.b16 %v100
  %v408 = vunpack.c.l.b16 %v101
  %v409 = vunpack.c.h.b16 %v101
  %v410 = vunpack.c.l.b16 %v102
  %v411 = vunpack.c.h.b16 %v102
  %v412 = vunpack.c.l.b16 %v103
  %v413 = vunpack.c.h.b16 %v103
  %v414 = vunpack.c.l.b16 %v104
  %v415 = vunpack.c.h.b16 %v104
  %v416 = vunpack.c.l.b16 %v105
  %v417 = vunpack.c.h.b16 %v105
  %v418 = vunpack.c.l.b16 %v106
  %v419 = vunpack.c.h.b16 %v106
  %v420 = vunpack.c.l.b16 %v107
  %v421 = vunpack.c.h.b16 %v107
  %v422 = vunpack.c.l.b16 %v108
  %v423 = vunpack.c.h.b16 %v108
  %v424 = vunpack.c.l.b16 %v109
  %v425 = vunpack.c.h.b16 %v109
  %v426 = vunpack.c.l.b16 %v110
  %v427 = vunpack.c.h.b16 %v110
  %v428 = vunpack.c.l.b16 %v111
  %v429 = vunpack.c.h.b16 %v111
  %v430 = vunpack.c.l.b16 %v112
  %v431 = vunpack.c.h.b16 %v112
  %v432 = vunpack.c.l.b16 %v113
  %v433 = vunpack.c.h.b16 %v113
  %v434 = vunpack.c.l.b16 %v114
  %v435 = vunpack.c.h.b16 %v114
  %v436 = vunpack.c.l.b16 %v115
  %v437 = vunpack.c.h.b16 %v115
  %v438 = vunpack.c.l.b16 %v116
  %v439 = vunpack.c.h.b16 %v116
  %v440 = vunpack.c.l.b16 %v117
  %v441 = vunpack.c.h.b16 %v117
  %v442 = vunpack.c.l.b16 %v118
  %v443 = vunpack.c.h.b16 %v118
  %v444 = vunpack.c.l.b16 %v119
  %v445 = vunpack.c.h.b16 %v119
  %v446 = vunpack.c.l.b16 %v120
  %v447 = vunpack.c.h.b16 %v120
  %v448 = vunpack.c.l.b16 %v121
  %v449 = vunpack.c.h.b16 %v121
  %v450 = vunpack.c.l.b16 %v122
  %v451 = vunpack.c.h.b16 %v122
  %v452 = vunpack.c.l.b16 %v123
  %v453 = vunpack.c.h.b16 %v123
  %v454 = vunpack.c.l.b16 %v124
  %v455 = vunpack.c.h.b16 %v124
  %v456 = vunpack.c.l.b16 %v125
  %v457 = vunpack.c.h.b16 %v125
  %v458 = vunpack.c.l.b16 %v126
  %v459 = vunpack.c.h.b16 %v126
  %v460 = vunpack.c.l.b16 %v127
  %v461 = vunpack.c.h.b16 %v127
  %v462 = vunpack.c.l.b16 %v128
  %v463 = vunpack.c.h.b16 %v128
  %v464 = vpack.c.b16 %v268, %v264
  %v465 = vpack.c.b16 %v269, %v265
  %v466 = vpack.c.b16 %v270, %v266
  %v467 = vpack.c.b16 %v271, %v267
  %v468 = vpack.c.b16 %v276, %v272
  %v469 = vpack.c.b16 %v277, %v273
  %v470 = vpack.c.b16 %v278, %v274
  %v471 = vpack.c.b16 %v279, %v275
  %v472 = vpack.c.b16 %v284, %v280
  %v473 = vpack.c.b16 %v285, %v281
  %v474 = vpack.c.b16 %v286, %v282
  %v475 = vpack.c.b16 %v287, %v283
  %v476 = vpack.c.b16 %v292, %v288
  %v477 = vpack.c.b16 %v293, %v289
  %v478 = vpack.c.b16 %v294, %v290
  %v479 = vpack.c.b16 %v295, %v291
  %v480 = vpack.c.b16 %v300, %v296
  %v481 = vpack.c.b16 %v301, %v297
  %v482 = vpack.c.b16 %v302, %v298
  %v483 = vpack.c.b16 %v303, %v299
  %v484 = vpack.c.b16 %v308, %v304
  %v485 = vpack.c.b16 %v309, %v305
  %v486 = vpack.c.b16 %v310, %v306
  %v487 = vpack.c.b16 %v311, %v307
  %v488 = vpack.c.b16 %v316, %v312
  %v489 = vpack.c.b16 %v317, %v313
  %v490 = vpack.c.b16 %v318, %v314
  %v491 = vpack.c.b16 %v319, %v315
  %v492 = vpack.c.b16 %v324, %v320
  %v493 = vpack.c.b16 %v325, %v321
  %v494 = vpack.c.b16 %v326, %v322
  %v495 = vpack.c.b16 %v327, %v323
  %v496 = vpack.c.b16 %v332, %v328
  %v497 = vpack.c.b16 %v333, %v329
  %v498 = vpack.c.b16 %v334, %v330
  %v499 = vpack.c.b16 %v335, %v331
  %v500 = vpack.c.b16 %v340, %v336
  %v501 = vpack.c.b16 %v341, %v337
  %v502 = vpack.c.b16 %v342, %v338
  %v503 = vpack.c.b16 %v343, %v339
  %v504 = vpack.c.b16 %v348, %v344
  %v505 = vpack.c.b16 %v349, %v345
  %v506 = vpack.c.b16 %v350, %v346
  %v507 = vpack.c.b16 %v351, %v347
  %v508 = vpack.c.b16 %v356, %v352
  %v509 = vpack.c.b16 %v357, %v353
  %v510 = vpack.c.b16 %v358, %v354
  %v511 = vpack.c.b16 %v359, %v355
  %v512 = vpack.c.b16 %v364, %v360
  %v513 = vpack.c.b16 %v365, %v361
  %v514 = vpack.c.b16 %v366, %v362
  %v515 = vpack.c.b16 %v367, %v363
  %v516 = vpack.c.b16 %v372, %v368
  %v517 = vpack.c.b16 %v373, %v369
  %v518 = vpack.c.b16 %v374, %v370
  %v519 = vpack.c.b16 %v375, %v371
  %v520 = vpack.c.b16 %v380, %v376
  %v521 = vpack.c.b16 %v381, %v377
  %v522 = vpack.c.b16 %v382, %v378
  %v523 = vpack.c.b16 %v383, %v379
  %v524 = vpack.c.b16 %v388, %v384
  %v525 = vpack.c.b16 %v389, %v385
  %v526 = vpack.c.b16 %v390, %v386
  %v527 = vpack.c.b16 %v391, %v387
  %v528 = vpack.c.b16 %v396, %v392
  %v529 = vpack.c.b16 %v397, %v393
  %v530 = vpack.c.b16 %v398, %v394
  %v531 = vpack.c.b16 %v399, %v395
  %v532 = vpack.c.b16 %v404, %v400
  %v533 = vpack.c.b16 %v405, %v401
  %v534 = vpack.c.b16 %v406, %v402
  %v535 = vpack.c.b16 %v407, %v403
  %v536 = vpack.c.b16 %v412, %v408
  %v537 = vpack.c.b16 %v413, %v409
  %v538 = vpack.c.b16 %v414, %v410
  %v539 = vpack.c.b16 %v415, %v411
  %v540 = vpack.c.b16 %v420, %v416
  %v541 = vpack.c.b16 %v421, %v417
  %v542 = vpack.c.b16 %v422, %v418
  %v543 = vpack.c.b16 %v423, %v419
  %v544 = vpack.c.b16 %v428, %v424
  %v545 = vpack.c.b16 %v429, %v425
  %v546 = vpack.c.b16 %v430, %v426
  %v547 = vpack.c.b16 %v431, %v427
  %v548 = vpack.c.b16 %v436, %v432
  %v549 = vpack.c.b16 %v437, %v433
  %v550 = vpack.c.b16 %v438, %v434
  %v551 = vpack.c.b16 %v439, %v435
  %v552 = vpack.c.b16 %v444, %v440
  %v553 = vpack.c.b16 %v445, %v441
  %v554 = vpack.c.b16 %v446, %v442
  %v555 = vpack.c.b16 %v447, %v443
  %v556 = vpack.c.b16 %v452, %v448
  %v557 = vpack.c.b16 %v453, %v449
  %v558 = vpack.c.b16 %v454, %v450
  %v559 = vpack.c.b16 %v455, %v451
  %v560 = vpack.c.b16 %v460, %v456
  %v561 = vpack.c.b16 %v461, %v457
  %v562 = vpack.c.b16 %v462, %v458
  %v563 = vpack.c.b16 %v463, %v459
  %vm664 = vcmask 130048
  %v666 = vsel %vm664, %v160, 0
  %668 = vmatprep.subr.bf16.mxu0 %v465
  %669 = vmatpush1.bf16.msra.mxu0 %v464
  %670 = vmatprep.subr.bf16.mxu0 %v469
  %671 = vmatpush1.bf16.msra.mxu0 %v468
  %672 = vmatprep.subr.bf16.mxu0 %v473
  %673 = vmatpush1.bf16.msra.mxu0 %v472
  %674 = vmatprep.subr.bf16.mxu0 %v477
  %675 = vmatpush1.bf16.msra.mxu0 %v476
  %676 = vmatprep.subr.bf16.mxu0 %v481
  %677 = vmatpush1.bf16.msra.mxu0 %v480
  %678 = vmatprep.subr.bf16.mxu0 %v485
  %679 = vmatpush1.bf16.msra.mxu0 %v484
  %680 = vmatprep.subr.bf16.mxu0 %v489
  %681 = vmatpush1.bf16.msra.mxu0 %v488
  %682 = vmatprep.subr.bf16.mxu0 %v493
  %683 = vmatpush1.bf16.msra.mxu0 %v492
  %684 = vmatprep.subr.bf16.mxu0 %v497
  %685 = vmatpush1.bf16.msra.mxu0 %v496
  %686 = vmatprep.subr.bf16.mxu0 %v501
  %687 = vmatpush1.bf16.msra.mxu0 %v500
  %688 = vmatprep.subr.bf16.mxu0 %v505
  %689 = vmatpush1.bf16.msra.mxu0 %v504
  %690 = vmatprep.subr.bf16.mxu0 %v509
  %691 = vmatpush1.bf16.msra.mxu0 %v508
  %692 = vmatprep.subr.bf16.mxu0 %v513
  %693 = vmatpush1.bf16.msra.mxu0 %v512
  %694 = vmatprep.subr.bf16.mxu0 %v517
  %695 = vmatpush1.bf16.msra.mxu0 %v516
  %696 = vmatprep.subr.bf16.mxu0 %v521
  %697 = vmatpush1.bf16.msra.mxu0 %v520
  %698 = vmatprep.subr.bf16.mxu0 %v525
  %699 = vmatpush1.bf16.msra.mxu0 %v524
  %700 = vmatprep.mubr.bf16.mxu0 %v158
  %701 = vmatmul.mubr.bf16.gmra.mrb[0].mxu0 %v157
  %v702 = vpop.f32.mrb[0].mxu0
  %v703 = vadd.f32 %v134, %v702
  %v704 = vpop.f32.mrb[0].mxu0
  %v705 = vadd.f32 %v138, %v704
  %v706 = vpop.f32.mrb[0].mxu0
  %v707 = vpop.f32.mrb[0].mxu0
  %708 = vdwg.mxu0
  %709 = vmatprep.subr.bf16.mxu0 %v529
  %710 = vmatpush1.bf16.msra.mxu0 %v528
  %711 = vmatprep.subr.bf16.mxu0 %v533
  %712 = vmatpush1.bf16.msra.mxu0 %v532
  %713 = vmatprep.subr.bf16.mxu0 %v537
  %714 = vmatpush1.bf16.msra.mxu0 %v536
  %715 = vmatprep.subr.bf16.mxu0 %v541
  %716 = vmatpush1.bf16.msra.mxu0 %v540
  %717 = vmatprep.subr.bf16.mxu0 %v545
  %718 = vmatpush1.bf16.msra.mxu0 %v544
  %719 = vmatprep.subr.bf16.mxu0 %v549
  %720 = vmatpush1.bf16.msra.mxu0 %v548
  %721 = vmatprep.subr.bf16.mxu0 %v553
  %722 = vmatpush1.bf16.msra.mxu0 %v552
  %723 = vmatprep.subr.bf16.mxu0 %v557
  %724 = vmatpush1.bf16.msra.mxu0 %v556
  %725 = vmatprep.subr.bf16.mxu0 %v561
  %726 = vmatpush1.bf16.msra.mxu0 %v560
  %727 = vmatprep.subr.bf16.mxu0 0
  %728 = vmatpush1.bf16.msra.mxu0 0
  %729 = vmatprep.subr.bf16.mxu0 0
  %730 = vmatpush1.bf16.msra.mxu0 0
  %731 = vmatprep.subr.bf16.mxu0 0
  %732 = vmatpush1.bf16.msra.mxu0 0
  %733 = vmatprep.subr.bf16.mxu0 0
  %734 = vmatpush1.bf16.msra.mxu0 0
  %735 = vmatprep.subr.bf16.mxu0 0
  %736 = vmatpush1.bf16.msra.mxu0 0
  %737 = vmatprep.subr.bf16.mxu0 0
  %738 = vmatpush1.bf16.msra.mxu0 0
  %739 = vmatprep.subr.bf16.mxu0 0
  %740 = vmatpush1.bf16.msra.mxu0 0
  %741 = vmatprep.mubr.bf16.mxu0 %v666
  %742 = vmatmul.mubr.bf16.gmra.mrb[0].mxu0 %v159
  %v743 = vpop.f32.mrb[0].mxu0
  %v744 = vadd.f32 %v703, %v743
  %v745 = vpop.f32.mrb[0].mxu0
  %v746 = vadd.f32 %v705, %v745
  %v747 = vpop.f32.mrb[0].mxu0
  %v748 = vpop.f32.mrb[0].mxu0
  %749 = vdwg.mxu0
  %750 = vmatprep.subr.bf16.mxu0 %v467
  %751 = vmatpush1.bf16.msra.mxu0 %v466
  %752 = vmatprep.subr.bf16.mxu0 %v471
  %753 = vmatpush1.bf16.msra.mxu0 %v470
  %754 = vmatprep.subr.bf16.mxu0 %v475
  %755 = vmatpush1.bf16.msra.mxu0 %v474
  %756 = vmatprep.subr.bf16.mxu0 %v479
  %757 = vmatpush1.bf16.msra.mxu0 %v478
  %758 = vmatprep.subr.bf16.mxu0 %v483
  %759 = vmatpush1.bf16.msra.mxu0 %v482
  %760 = vmatprep.subr.bf16.mxu0 %v487
  %761 = vmatpush1.bf16.msra.mxu0 %v486
  %762 = vmatprep.subr.bf16.mxu0 %v491
  %763 = vmatpush1.bf16.msra.mxu0 %v490
  %764 = vmatprep.subr.bf16.mxu0 %v495
  %765 = vmatpush1.bf16.msra.mxu0 %v494
  %766 = vmatprep.subr.bf16.mxu0 %v499
  %767 = vmatpush1.bf16.msra.mxu0 %v498
  %768 = vmatprep.subr.bf16.mxu0 %v503
  %769 = vmatpush1.bf16.msra.mxu0 %v502
  %770 = vmatprep.subr.bf16.mxu0 %v507
  %771 = vmatpush1.bf16.msra.mxu0 %v506
  %772 = vmatprep.subr.bf16.mxu0 %v511
  %773 = vmatpush1.bf16.msra.mxu0 %v510
  %774 = vmatprep.subr.bf16.mxu0 %v515
  %775 = vmatpush1.bf16.msra.mxu0 %v514
  %776 = vmatprep.subr.bf16.mxu0 %v519
  %777 = vmatpush1.bf16.msra.mxu0 %v518
  %778 = vmatprep.subr.bf16.mxu0 %v523
  %779 = vmatpush1.bf16.msra.mxu0 %v522
  %780 = vmatprep.subr.bf16.mxu0 %v527
  %781 = vmatpush1.bf16.msra.mxu0 %v526
  %782 = vmatprep.mubr.bf16.mxu0 %v158
  %783 = vmatmul.mubr.bf16.gmra.mrb[0].mxu0 %v157
  %v784 = vpop.f32.mrb[0].mxu0
  %v785 = vadd.f32 %v142, %v784
  %v786 = vpop.f32.mrb[0].mxu0
  %v787 = vadd.f32 %v146, %v786
  %v788 = vpop.f32.mrb[0].mxu0
  %v789 = vpop.f32.mrb[0].mxu0
  %790 = vdwg.mxu0
  %791 = vmatprep.subr.bf16.mxu0 %v531
  %792 = vmatpush1.bf16.msra.mxu0 %v530
  %793 = vmatprep.subr.bf16.mxu0 %v535
  %794 = vmatpush1.bf16.msra.mxu0 %v534
  %795 = vmatprep.subr.bf16.mxu0 %v539
  %796 = vmatpush1.bf16.msra.mxu0 %v538
  %797 = vmatprep.subr.bf16.mxu0 %v543
  %798 = vmatpush1.bf16.msra.mxu0 %v542
  %799 = vmatprep.subr.bf16.mxu0 %v547
  %800 = vmatpush1.bf16.msra.mxu0 %v546
  %801 = vmatprep.subr.bf16.mxu0 %v551
  %802 = vmatpush1.bf16.msra.mxu0 %v550
  %803 = vmatprep.subr.bf16.mxu0 %v555
  %804 = vmatpush1.bf16.msra.mxu0 %v554
  %805 = vmatprep.subr.bf16.mxu0 %v559
  %806 = vmatpush1.bf16.msra.mxu0 %v558
  %807 = vmatprep.subr.bf16.mxu0 %v563
  %808 = vmatpush1.bf16.msra.mxu0 %v562
  %809 = vmatprep.subr.bf16.mxu0 0
  %810 = vmatpush1.bf16.msra.mxu0 0
  %811 = vmatprep.subr.bf16.mxu0 0
  %812 = vmatpush1.bf16.msra.mxu0 0
  %813 = vmatprep.subr.bf16.mxu0 0
  %814 = vmatpush1.bf16.msra.mxu0 0
  %815 = vmatprep.subr.bf16.mxu0 0
  %816 = vmatpush1.bf16.msra.mxu0 0
  %817 = vmatprep.subr.bf16.mxu0 0
  %818 = vmatpush1.bf16.msra.mxu0 0
  %819 = vmatprep.subr.bf16.mxu0 0
  %820 = vmatpush1.bf16.msra.mxu0 0
  %821 = vmatprep.subr.bf16.mxu0 0
  %822 = vmatpush1.bf16.msra.mxu0 0
  %823 = vmatprep.mubr.bf16.mxu0 %v666
  %824 = vmatmul.mubr.bf16.gmra.mrb[0].mxu0 %v159
  %v825 = vpop.f32.mrb[0].mxu0
  %v826 = vadd.f32 %v785, %v825
  %v827 = vpop.f32.mrb[0].mxu0
  %v828 = vadd.f32 %v787, %v827
  %v829 = vpop.f32.mrb[0].mxu0
  %v830 = vpop.f32.mrb[0].mxu0
  %831 = vdwg.mxu0
  %v832 = vmax.f32 %v744, 0.0
  %v833 = vmax.f32 %v746, 0.0
  %v834 = vmax.f32 %v826, 0.0
  %v835 = vmax.f32 %v828, 0.0
  %v836 = vpack.c.bf16 %v832, %v832
  %v837 = vpack.c.bf16 %v833, %v833
  %v838 = vpack.c.bf16 %v834, %v834
  %v839 = vpack.c.bf16 %v835, %v835
  %v840 = vld [vmem:[%s3] sm:$0xff]
  %v841 = vld [vmem:[%s3 + $0x8] sm:$0xf]
  %v842 = vld [vmem:[%s3 + $0xc] sm:$0xff]
  %v843 = vld [vmem:[%s3 + $0x14] sm:$0xf]
  %v844 = vld [vmem:[%s3 + $0x18] sm:$0xff]
  %v845 = vld [vmem:[%s3 + $0x20] sm:$0xf]
  %v846 = vld [vmem:[%s3 + $0x24] sm:$0xff]
  %v847 = vld [vmem:[%s3 + $0x2c] sm:$0xf]
  %v848 = vld [vmem:[%s3 + $0x30] sm:$0xff]
  %v849 = vld [vmem:[%s3 + $0x38] sm:$0xf]
  %v850 = vld [vmem:[%s3 + $0x3c] sm:$0xff]
  %v851 = vld [vmem:[%s3 + $0x44] sm:$0xf]
  %v852 = vld [vmem:[%s3 + $0x48] sm:$0xff]
  %v853 = vld [vmem:[%s3 + $0x50] sm:$0xf]
  %v854 = vld [vmem:[%s3 + $0x54] sm:$0xff]
  %v855 = vld [vmem:[%s3 + $0x5c] sm:$0xf]
  %v856 = vld [vmem:[%s3 + $0x60] sm:$0xff]
  %v857 = vld [vmem:[%s3 + $0x68] sm:$0xf]
  %v858 = vld [vmem:[%s3 + $0x6c] sm:$0xff]
  %v859 = vld [vmem:[%s3 + $0x74] sm:$0xf]
  %v860 = vld [vmem:[%s3 + $0x78] sm:$0xff]
  %v861 = vld [vmem:[%s3 + $0x80] sm:$0xf]
  %v862 = vld [vmem:[%s3 + $0x84] sm:$0xff]
  %v863 = vld [vmem:[%s3 + $0x8c] sm:$0xf]
  %v864 = vld [vmem:[%s3 + $0x90] sm:$0xff]
  %v865 = vld [vmem:[%s3 + $0x98] sm:$0xf]
  %v866 = vld [vmem:[%s3 + $0x9c] sm:$0xff]
  %v867 = vld [vmem:[%s3 + $0xa4] sm:$0xf]
  %v868 = vld [vmem:[%s3 + $0xa8] sm:$0xff]
  %v869 = vld [vmem:[%s3 + $0xb0] sm:$0xf]
  %v870 = vld [vmem:[%s3 + $0xb4] sm:$0xff]
  %v871 = vld [vmem:[%s3 + $0xbc] sm:$0xf]
  %v872 = vld [vmem:[%s3 + $0xc0] sm:$0xff]
  %v873 = vld [vmem:[%s3 + $0xc8] sm:$0xf]
  %v874 = vld [vmem:[%s3 + $0xcc] sm:$0xff]
  %v875 = vld [vmem:[%s3 + $0xd4] sm:$0xf]
  %v876 = vld [vmem:[%s3 + $0xd8] sm:$0xff]
  %v877 = vld [vmem:[%s3 + $0xe0] sm:$0xf]
  %v878 = vld [vmem:[%s3 + $0xe4] sm:$0xff]
  %v879 = vld [vmem:[%s3 + $0xec] sm:$0xf]
  %v880 = vld [vmem:[%s3 + $0xf0] sm:$0xff]
  %v881 = vld [vmem:[%s3 + $0xf8] sm:$0xf]
  %v882 = vld [vmem:[%s3 + $0xfc] sm:$0xff]
  %v883 = vld [vmem:[%s3 + $0x104] sm:$0xf]
  %v884 = vld [vmem:[%s3 + $0x108] sm:$0xff]
  %v885 = vld [vmem:[%s3 + $0x110] sm:$0xf]
  %v886 = vld [vmem:[%s3 + $0x114] sm:$0xff]
  %v887 = vld [vmem:[%s3 + $0x11c] sm:$0xf]
  %v888 = vld [vmem:[%s3 + $0x120] sm:$0xff]
  %v889 = vld [vmem:[%s3 + $0x128] sm:$0xf]
  %v890 = vld [vmem:[%s3 + $0x12c] sm:$0xff]
  %v891 = vld [vmem:[%s3 + $0x134] sm:$0xf]
  %v892 = vld [vmem:[%s3 + $0x138] sm:$0xff]
  %v893 = vld [vmem:[%s3 + $0x140] sm:$0xf]
  %v894 = vld [vmem:[%s3 + $0x144] sm:$0xff]
  %v895 = vld [vmem:[%s3 + $0x14c] sm:$0xf]
  %v896 = vld [vmem:[%s3 + $0x150] sm:$0xff]
  %v897 = vld [vmem:[%s3 + $0x158] sm:$0xf]
  %v898 = vld [vmem:[%s3 + $0x15c] sm:$0xff]
  %v899 = vld [vmem:[%s3 + $0x164] sm:$0xf]
  %v900 = vld [vmem:[%s3 + $0x168] sm:$0xff]
  %v901 = vld [vmem:[%s3 + $0x170] sm:$0xf]
  %v902 = vld [vmem:[%s3 + $0x174] sm:$0xff]
  %v903 = vld [vmem:[%s3 + $0x17c] sm:$0xf]
  %v904 = vld [vmem:[%s3 + $0x180] sm:$0xff]
  %v905 = vld [vmem:[%s3 + $0x188] sm:$0xf]
  %v906 = vld [vmem:[%s3 + $0x18c] sm:$0xff]
  %v907 = vld [vmem:[%s3 + $0x194] sm:$0xf]
  %v908 = vld [vmem:[%s3 + $0x198] sm:$0xff]
  %v909 = vld [vmem:[%s3 + $0x1a0] sm:$0xf]
  %v910 = vld [vmem:[%s3 + $0x1a4] sm:$0xff]
  %v911 = vld [vmem:[%s3 + $0x1ac] sm:$0xf]
  %v912 = vld [vmem:[%s3 + $0x1b0] sm:$0xff]
  %v913 = vld [vmem:[%s3 + $0x1b8] sm:$0xf]
  %v914 = vld [vmem:[%s3 + $0x1bc] sm:$0xff]
  %v915 = vld [vmem:[%s3 + $0x1c4] sm:$0xf]
  %v916 = vld [vmem:[%s3 + $0x1c8] sm:$0xff]
  %v917 = vld [vmem:[%s3 + $0x1d0] sm:$0xf]
  %v918 = vld [vmem:[%s3 + $0x1d4] sm:$0xff]
  %v919 = vld [vmem:[%s3 + $0x1dc] sm:$0xf]
  %v920 = vld [vmem:[%s3 + $0x1e0] sm:$0xff]
  %v921 = vld [vmem:[%s3 + $0x1e8] sm:$0xf]
  %v922 = vld [vmem:[%s3 + $0x1ec] sm:$0xff]
  %v923 = vld [vmem:[%s3 + $0x1f4] sm:$0xf]
  %v924 = vld [vmem:[%s3 + $0x1f8] sm:$0xff]
  %v925 = vld [vmem:[%s3 + $0x200] sm:$0xf]
  %v926 = vld [vmem:[%s3 + $0x204] sm:$0xff]
  %v927 = vld [vmem:[%s3 + $0x20c] sm:$0xf]
  %v928 = vld [vmem:[%s3 + $0x210] sm:$0xff]
  %v929 = vld [vmem:[%s3 + $0x218] sm:$0xf]
  %v930 = vld [vmem:[%s3 + $0x21c] sm:$0xff]
  %v931 = vld [vmem:[%s3 + $0x224] sm:$0xf]
  %v932 = vld [vmem:[%s3 + $0x228] sm:$0xff]
  %v933 = vld [vmem:[%s3 + $0x230] sm:$0xf]
  %v934 = vld [vmem:[%s3 + $0x234] sm:$0xff]
  %v935 = vld [vmem:[%s3 + $0x23c] sm:$0xf]
  %v936 = vld [vmem:[%s3 + $0x240] sm:$0xff]
  %v937 = vld [vmem:[%s3 + $0x248] sm:$0xf]
  %v938 = vld [vmem:[%s3 + $0x24c] sm:$0xff]
  %v939 = vld [vmem:[%s3 + $0x254] sm:$0xf]
  %v940 = vld [vmem:[%s3 + $0x258] sm:$0xff]
  %v941 = vld [vmem:[%s3 + $0x260] sm:$0xf]
  %v942 = vld [vmem:[%s3 + $0x264] sm:$0xff]
  %v943 = vld [vmem:[%s3 + $0x26c] sm:$0xf]
  %v944 = vld [vmem:[%s3 + $0x270] sm:$0xff]
  %v945 = vld [vmem:[%s3 + $0x278] sm:$0xf]
  %v946 = vld [vmem:[%s3 + $0x27c] sm:$0xff]
  %v947 = vld [vmem:[%s3 + $0x284] sm:$0xf]
  %v948 = vld [vmem:[%s3 + $0x288] sm:$0xff]
  %v949 = vld [vmem:[%s3 + $0x290] sm:$0xf]
  %v950 = vld [vmem:[%s3 + $0x294] sm:$0xff]
  %v951 = vld [vmem:[%s3 + $0x29c] sm:$0xf]
  %v952 = vld [vmem:[%s3 + $0x2a0] sm:$0xff]
  %v953 = vld [vmem:[%s3 + $0x2a8] sm:$0xf]
  %v954 = vld [vmem:[%s3 + $0x2ac] sm:$0xff]
  %v955 = vld [vmem:[%s3 + $0x2b4] sm:$0xf]
  %v956 = vld [vmem:[%s3 + $0x2b8] sm:$0xff]
  %v957 = vld [vmem:[%s3 + $0x2c0] sm:$0xf]
  %v958 = vld [vmem:[%s3 + $0x2c4] sm:$0xff]
  %v959 = vld [vmem:[%s3 + $0x2cc] sm:$0xf]
  %v960 = vld [vmem:[%s3 + $0x2d0] sm:$0xff]
  %v961 = vld [vmem:[%s3 + $0x2d8] sm:$0xf]
  %v962 = vld [vmem:[%s3 + $0x2dc] sm:$0xff]
  %v963 = vld [vmem:[%s3 + $0x2e4] sm:$0xf]
  %v964 = vld [vmem:[%s3 + $0x2e8] sm:$0x33]
  %v965 = vld [vmem:[%s3 + $0x2f0] sm:$0x3]
  %v966 = vld [vmem:[%s4] sm:$0x7]
  %v968 = vlaneseq
  %v969 = vshrl.u32 %v968, 7
  %v970 = vsub.s32 0, %v969
  %v971 = vrot.slane %v966, %v970
  %v972 = vlaneseq
  %v973 = vshrl.u32 %v972, 7
  %v974 = vsub.s32 1, %v973
  %v975 = vrot.slane %v966, %v974
  %v976 = vlaneseq
  %v977 = vshrl.u32 %v976, 7
  %v978 = vsub.s32 2, %v977
  %v979 = vrot.slane %v966, %v978
  %v1109 = vunpack.c.l.b16 %v840
  %v1110 = vunpack.c.h.b16 %v840
  %v1111 = vunpack.c.l.b16 %v841
  %v1112 = vunpack.c.l.b16 %v842
  %v1113 = vunpack.c.h.b16 %v842
  %v1114 = vunpack.c.l.b16 %v843
  %v1115 = vunpack.c.l.b16 %v844
  %v1116 = vunpack.c.h.b16 %v844
  %v1117 = vunpack.c.l.b16 %v845
  %v1118 = vunpack.c.l.b16 %v846
  %v1119 = vunpack.c.h.b16 %v846
  %v1120 = vunpack.c.l.b16 %v847
  %v1121 = vunpack.c.l.b16 %v848
  %v1122 = vunpack.c.h.b16 %v848
  %v1123 = vunpack.c.l.b16 %v849
  %v1124 = vunpack.c.l.b16 %v850
  %v1125 = vunpack.c.h.b16 %v850
  %v1126 = vunpack.c.l.b16 %v851
  %v1127 = vunpack.c.l.b16 %v852
  %v1128 = vunpack.c.h.b16 %v852
  %v1129 = vunpack.c.l.b16 %v853
  %v1130 = vunpack.c.l.b16 %v854
  %v1131 = vunpack.c.h.b16 %v854
  %v1132 = vunpack.c.l.b16 %v855
  %v1133 = vunpack.c.l.b16 %v856
  %v1134 = vunpack.c.h.b16 %v856
  %v1135 = vunpack.c.l.b16 %v857
  %v1136 = vunpack.c.l.b16 %v858
  %v1137 = vunpack.c.h.b16 %v858
  %v1138 = vunpack.c.l.b16 %v859
  %v1139 = vunpack.c.l.b16 %v860
  %v1140 = vunpack.c.h.b16 %v860
  %v1141 = vunpack.c.l.b16 %v861
  %v1142 = vunpack.c.l.b16 %v862
  %v1143 = vunpack.c.h.b16 %v862
  %v1144 = vunpack.c.l.b16 %v863
  %v1145 = vunpack.c.l.b16 %v864
  %v1146 = vunpack.c.h.b16 %v864
  %v1147 = vunpack.c.l.b16 %v865
  %v1148 = vunpack.c.l.b16 %v866
  %v1149 = vunpack.c.h.b16 %v866
  %v1150 = vunpack.c.l.b16 %v867
  %v1151 = vunpack.c.l.b16 %v868
  %v1152 = vunpack.c.h.b16 %v868
  %v1153 = vunpack.c.l.b16 %v869
  %v1154 = vunpack.c.l.b16 %v870
  %v1155 = vunpack.c.h.b16 %v870
  %v1156 = vunpack.c.l.b16 %v871
  %v1157 = vunpack.c.l.b16 %v872
  %v1158 = vunpack.c.h.b16 %v872
  %v1159 = vunpack.c.l.b16 %v873
  %v1160 = vunpack.c.l.b16 %v874
  %v1161 = vunpack.c.h.b16 %v874
  %v1162 = vunpack.c.l.b16 %v875
  %v1163 = vunpack.c.l.b16 %v876
  %v1164 = vunpack.c.h.b16 %v876
  %v1165 = vunpack.c.l.b16 %v877
  %v1166 = vunpack.c.l.b16 %v878
  %v1167 = vunpack.c.h.b16 %v878
  %v1168 = vunpack.c.l.b16 %v879
  %v1169 = vunpack.c.l.b16 %v880
  %v1170 = vunpack.c.h.b16 %v880
  %v1171 = vunpack.c.l.b16 %v881
  %v1172 = vunpack.c.l.b16 %v882
  %v1173 = vunpack.c.h.b16 %v882
  %v1174 = vunpack.c.l.b16 %v883
  %v1175 = vunpack.c.l.b16 %v884
  %v1176 = vunpack.c.h.b16 %v884
  %v1177 = vunpack.c.l.b16 %v885
  %v1178 = vunpack.c.l.b16 %v886
  %v1179 = vunpack.c.h.b16 %v886
  %v1180 = vunpack.c.l.b16 %v887
  %v1181 = vunpack.c.l.b16 %v888
  %v1182 = vunpack.c.h.b16 %v888
  %v1183 = vunpack.c.l.b16 %v889
  %v1184 = vunpack.c.l.b16 %v890
  %v1185 = vunpack.c.h.b16 %v890
  %v1186 = vunpack.c.l.b16 %v891
  %v1187 = vunpack.c.l.b16 %v892
  %v1188 = vunpack.c.h.b16 %v892
  %v1189 = vunpack.c.l.b16 %v893
  %v1190 = vunpack.c.l.b16 %v894
  %v1191 = vunpack.c.h.b16 %v894
  %v1192 = vunpack.c.l.b16 %v895
  %v1193 = vunpack.c.l.b16 %v896
  %v1194 = vunpack.c.h.b16 %v896
  %v1195 = vunpack.c.l.b16 %v897
  %v1196 = vunpack.c.l.b16 %v898
  %v1197 = vunpack.c.h.b16 %v898
  %v1198 = vunpack.c.l.b16 %v899
  %v1199 = vunpack.c.l.b16 %v900
  %v1200 = vunpack.c.h.b16 %v900
  %v1201 = vunpack.c.l.b16 %v901
  %v1202 = vunpack.c.l.b16 %v902
  %v1203 = vunpack.c.h.b16 %v902
  %v1204 = vunpack.c.l.b16 %v903
  %v1205 = vunpack.c.l.b16 %v904
  %v1206 = vunpack.c.h.b16 %v904
  %v1207 = vunpack.c.l.b16 %v905
  %v1208 = vunpack.c.l.b16 %v906
  %v1209 = vunpack.c.h.b16 %v906
  %v1210 = vunpack.c.l.b16 %v907
  %v1211 = vunpack.c.l.b16 %v908
  %v1212 = vunpack.c.h.b16 %v908
  %v1213 = vunpack.c.l.b16 %v909
  %v1214 = vunpack.c.l.b16 %v910
  %v1215 = vunpack.c.h.b16 %v910
  %v1216 = vunpack.c.l.b16 %v911
  %v1217 = vunpack.c.l.b16 %v912
  %v1218 = vunpack.c.h.b16 %v912
  %v1219 = vunpack.c.l.b16 %v913
  %v1220 = vunpack.c.l.b16 %v914
  %v1221 = vunpack.c.h.b16 %v914
  %v1222 = vunpack.c.l.b16 %v915
  %v1223 = vunpack.c.l.b16 %v916
  %v1224 = vunpack.c.h.b16 %v916
  %v1225 = vunpack.c.l.b16 %v917
  %v1226 = vunpack.c.l.b16 %v918
  %v1227 = vunpack.c.h.b16 %v918
  %v1228 = vunpack.c.l.b16 %v919
  %v1229 = vunpack.c.l.b16 %v920
  %v1230 = vunpack.c.h.b16 %v920
  %v1231 = vunpack.c.l.b16 %v921
  %v1232 = vunpack.c.l.b16 %v922
  %v1233 = vunpack.c.h.b16 %v922
  %v1234 = vunpack.c.l.b16 %v923
  %v1235 = vunpack.c.l.b16 %v924
  %v1236 = vunpack.c.h.b16 %v924
  %v1237 = vunpack.c.l.b16 %v925
  %v1238 = vunpack.c.l.b16 %v926
  %v1239 = vunpack.c.h.b16 %v926
  %v1240 = vunpack.c.l.b16 %v927
  %v1241 = vunpack.c.l.b16 %v928
  %v1242 = vunpack.c.h.b16 %v928
  %v1243 = vunpack.c.l.b16 %v929
  %v1244 = vunpack.c.l.b16 %v930
  %v1245 = vunpack.c.h.b16 %v930
  %v1246 = vunpack.c.l.b16 %v931
  %v1247 = vunpack.c.l.b16 %v932
  %v1248 = vunpack.c.h.b16 %v932
  %v1249 = vunpack.c.l.b16 %v933
  %v1250 = vunpack.c.l.b16 %v934
  %v1251 = vunpack.c.h.b16 %v934
  %v1252 = vunpack.c.l.b16 %v935
  %v1253 = vunpack.c.l.b16 %v936
  %v1254 = vunpack.c.h.b16 %v936
  %v1255 = vunpack.c.l.b16 %v937
  %v1256 = vunpack.c.l.b16 %v938
  %v1257 = vunpack.c.h.b16 %v938
  %v1258 = vunpack.c.l.b16 %v939
  %v1259 = vunpack.c.l.b16 %v940
  %v1260 = vunpack.c.h.b16 %v940
  %v1261 = vunpack.c.l.b16 %v941
  %v1262 = vunpack.c.l.b16 %v942
  %v1263 = vunpack.c.h.b16 %v942
  %v1264 = vunpack.c.l.b16 %v943
  %v1265 = vunpack.c.l.b16 %v944
  %v1266 = vunpack.c.h.b16 %v944
  %v1267 = vunpack.c.l.b16 %v945
  %v1268 = vunpack.c.l.b16 %v946
  %v1269 = vunpack.c.h.b16 %v946
  %v1270 = vunpack.c.l.b16 %v947
  %v1271 = vunpack.c.l.b16 %v948
  %v1272 = vunpack.c.h.b16 %v948
  %v1273 = vunpack.c.l.b16 %v949
  %v1274 = vunpack.c.l.b16 %v950
  %v1275 = vunpack.c.h.b16 %v950
  %v1276 = vunpack.c.l.b16 %v951
  %v1277 = vunpack.c.l.b16 %v952
  %v1278 = vunpack.c.h.b16 %v952
  %v1279 = vunpack.c.l.b16 %v953
  %v1280 = vunpack.c.l.b16 %v954
  %v1281 = vunpack.c.h.b16 %v954
  %v1282 = vunpack.c.l.b16 %v955
  %v1283 = vunpack.c.l.b16 %v956
  %v1284 = vunpack.c.h.b16 %v956
  %v1285 = vunpack.c.l.b16 %v957
  %v1286 = vunpack.c.l.b16 %v958
  %v1287 = vunpack.c.h.b16 %v958
  %v1288 = vunpack.c.l.b16 %v959
  %v1289 = vunpack.c.l.b16 %v960
  %v1290 = vunpack.c.h.b16 %v960
  %v1291 = vunpack.c.l.b16 %v961
  %v1292 = vunpack.c.l.b16 %v962
  %v1293 = vunpack.c.h.b16 %v962
  %v1294 = vunpack.c.l.b16 %v963
  %v1295 = vunpack.c.l.b16 %v964
  %v1296 = vunpack.c.h.b16 %v964
  %v1297 = vunpack.c.l.b16 %v965
  %v1298 = vpack.c.b16 %v1112, %v1109
  %v1299 = vpack.c.b16 %v1113, %v1110
  %v1300 = vpack.c.b16 %v1114, %v1111
  %v1301 = vpack.c.b16 %v1118, %v1115
  %v1302 = vpack.c.b16 %v1119, %v1116
  %v1303 = vpack.c.b16 %v1120, %v1117
  %v1304 = vpack.c.b16 %v1124, %v1121
  %v1305 = vpack.c.b16 %v1125, %v1122
  %v1306 = vpack.c.b16 %v1126, %v1123
  %v1307 = vpack.c.b16 %v1130, %v1127
  %v1308 = vpack.c.b16 %v1131, %v1128
  %v1309 = vpack.c.b16 %v1132, %v1129
  %v1310 = vpack.c.b16 %v1136, %v1133
  %v1311 = vpack.c.b16 %v1137, %v1134
  %v1312 = vpack.c.b16 %v1138, %v1135
  %v1313 = vpack.c.b16 %v1142, %v1139
  %v1314 = vpack.c.b16 %v1143, %v1140
  %v1315 = vpack.c.b16 %v1144, %v1141
  %v1316 = vpack.c.b16 %v1148, %v1145
  %v1317 = vpack.c.b16 %v1149, %v1146
  %v1318 = vpack.c.b16 %v1150, %v1147
  %v1319 = vpack.c.b16 %v1154, %v1151
  %v1320 = vpack.c.b16 %v1155, %v1152
  %v1321 = vpack.c.b16 %v1156, %v1153
  %v1322 = vpack.c.b16 %v1160, %v1157
  %v1323 = vpack.c.b16 %v1161, %v1158
  %v1324 = vpack.c.b16 %v1162, %v1159
  %v1325 = vpack.c.b16 %v1166, %v1163
  %v1326 = vpack.c.b16 %v1167, %v1164
  %v1327 = vpack.c.b16 %v1168, %v1165
  %v1328 = vpack.c.b16 %v1172, %v1169
  %v1329 = vpack.c.b16 %v1173, %v1170
  %v1330 = vpack.c.b16 %v1174, %v1171
  %v1331 = vpack.c.b16 %v1178, %v1175
  %v1332 = vpack.c.b16 %v1179, %v1176
  %v1333 = vpack.c.b16 %v1180, %v1177
  %v1334 = vpack.c.b16 %v1184, %v1181
  %v1335 = vpack.c.b16 %v1185, %v1182
  %v1336 = vpack.c.b16 %v1186, %v1183
  %v1337 = vpack.c.b16 %v1190, %v1187
  %v1338 = vpack.c.b16 %v1191, %v1188
  %v1339 = vpack.c.b16 %v1192, %v1189
  %v1340 = vpack.c.b16 %v1196, %v1193
  %v1341 = vpack.c.b16 %v1197, %v1194
  %v1342 = vpack.c.b16 %v1198, %v1195
  %v1343 = vpack.c.b16 %v1202, %v1199
  %v1344 = vpack.c.b16 %v1203, %v1200
  %v1345 = vpack.c.b16 %v1204, %v1201
  %v1346 = vpack.c.b16 %v1208, %v1205
  %v1347 = vpack.c.b16 %v1209, %v1206
  %v1348 = vpack.c.b16 %v1210, %v1207
  %v1349 = vpack.c.b16 %v1214, %v1211
  %v1350 = vpack.c.b16 %v1215, %v1212
  %v1351 = vpack.c.b16 %v1216, %v1213
  %v1352 = vpack.c.b16 %v1220, %v1217
  %v1353 = vpack.c.b16 %v1221, %v1218
  %v1354 = vpack.c.b16 %v1222, %v1219
  %v1355 = vpack.c.b16 %v1226, %v1223
  %v1356 = vpack.c.b16 %v1227, %v1224
  %v1357 = vpack.c.b16 %v1228, %v1225
  %v1358 = vpack.c.b16 %v1232, %v1229
  %v1359 = vpack.c.b16 %v1233, %v1230
  %v1360 = vpack.c.b16 %v1234, %v1231
  %v1361 = vpack.c.b16 %v1238, %v1235
  %v1362 = vpack.c.b16 %v1239, %v1236
  %v1363 = vpack.c.b16 %v1240, %v1237
  %v1364 = vpack.c.b16 %v1244, %v1241
  %v1365 = vpack.c.b16 %v1245, %v1242
  %v1366 = vpack.c.b16 %v1246, %v1243
  %v1367 = vpack.c.b16 %v1250, %v1247
  %v1368 = vpack.c.b16 %v1251, %v1248
  %v1369 = vpack.c.b16 %v1252, %v1249
  %v1370 = vpack.c.b16 %v1256, %v1253
  %v1371 = vpack.c.b16 %v1257, %v1254
  %v1372 = vpack.c.b16 %v1258, %v1255
  %v1373 = vpack.c.b16 %v1262, %v1259
  %v1374 = vpack.c.b16 %v1263, %v1260
  %v1375 = vpack.c.b16 %v1264, %v1261
  %v1376 = vpack.c.b16 %v1268, %v1265
  %v1377 = vpack.c.b16 %v1269, %v1266
  %v1378 = vpack.c.b16 %v1270, %v1267
  %v1379 = vpack.c.b16 %v1274, %v1271
  %v1380 = vpack.c.b16 %v1275, %v1272
  %v1381 = vpack.c.b16 %v1276, %v1273
  %v1382 = vpack.c.b16 %v1280, %v1277
  %v1383 = vpack.c.b16 %v1281, %v1278
  %v1384 = vpack.c.b16 %v1282, %v1279
  %v1385 = vpack.c.b16 %v1286, %v1283
  %v1386 = vpack.c.b16 %v1287, %v1284
  %v1387 = vpack.c.b16 %v1288, %v1285
  %v1388 = vpack.c.b16 %v1292, %v1289
  %v1389 = vpack.c.b16 %v1293, %v1290
  %v1390 = vpack.c.b16 %v1294, %v1291
  %v1391 = vpack.c.b16 %v1295, %v1295
  %v1392 = vpack.c.b16 %v1296, %v1296
  %v1393 = vpack.c.b16 %v1297, %v1297
  %vm1487 = vcmask 949248
  %v1489 = vsel %vm1487, %v839, 0
  %vm1491 = vcmask 1041408
  %v1493 = vsel %vm1491, %v1391, 0
  %v1496 = vsel %vm1491, %v1392, 0
  %v1499 = vsel %vm1491, %v1393, 0
  %1501 = vmatprep.subr.bf16.mxu0 %v1299
  %1502 = vmatpush1.bf16.msra.mxu0 %v1298
  %1503 = vmatprep.subr.bf16.mxu0 %v1302
  %1504 = vmatpush1.bf16.msra.mxu0 %v1301
  %1505 = vmatprep.subr.bf16.mxu0 %v1305
  %1506 = vmatpush1.bf16.msra.mxu0 %v1304
  %1507 = vmatprep.subr.bf16.mxu0 %v1308
  %1508 = vmatpush1.bf16.msra.mxu0 %v1307
  %1509 = vmatprep.subr.bf16.mxu0 %v1311
  %1510 = vmatpush1.bf16.msra.mxu0 %v1310
  %1511 = vmatprep.subr.bf16.mxu0 %v1314
  %1512 = vmatpush1.bf16.msra.mxu0 %v1313
  %1513 = vmatprep.subr.bf16.mxu0 %v1317
  %1514 = vmatpush1.bf16.msra.mxu0 %v1316
  %1515 = vmatprep.subr.bf16.mxu0 %v1320
  %1516 = vmatpush1.bf16.msra.mxu0 %v1319
  %1517 = vmatprep.subr.bf16.mxu0 %v1323
  %1518 = vmatpush1.bf16.msra.mxu0 %v1322
  %1519 = vmatprep.subr.bf16.mxu0 %v1326
  %1520 = vmatpush1.bf16.msra.mxu0 %v1325
  %1521 = vmatprep.subr.bf16.mxu0 %v1329
  %1522 = vmatpush1.bf16.msra.mxu0 %v1328
  %1523 = vmatprep.subr.bf16.mxu0 %v1332
  %1524 = vmatpush1.bf16.msra.mxu0 %v1331
  %1525 = vmatprep.subr.bf16.mxu0 %v1335
  %1526 = vmatpush1.bf16.msra.mxu0 %v1334
  %1527 = vmatprep.subr.bf16.mxu0 %v1338
  %1528 = vmatpush1.bf16.msra.mxu0 %v1337
  %1529 = vmatprep.subr.bf16.mxu0 %v1341
  %1530 = vmatpush1.bf16.msra.mxu0 %v1340
  %1531 = vmatprep.subr.bf16.mxu0 %v1344
  %1532 = vmatpush1.bf16.msra.mxu0 %v1343
  %1533 = vmatprep.mubr.bf16.mxu0 %v837
  %1534 = vmatmul.mubr.bf16.gmra.mrb[0].mxu0 %v836
  %v1535 = vpop.f32.mrb[0].mxu0
  %v1536 = vadd.f32 %v971, %v1535
  %v1537 = vpop.f32.mrb[0].mxu0
  %v1538 = vadd.f32 %v975, %v1537
  %v1539 = vpop.f32.mrb[0].mxu0
  %v1540 = vpop.f32.mrb[0].mxu0
  %1541 = vdwg.mxu0
  %1542 = vmatprep.subr.bf16.mxu0 %v1347
  %1543 = vmatpush1.bf16.msra.mxu0 %v1346
  %1544 = vmatprep.subr.bf16.mxu0 %v1350
  %1545 = vmatpush1.bf16.msra.mxu0 %v1349
  %1546 = vmatprep.subr.bf16.mxu0 %v1353
  %1547 = vmatpush1.bf16.msra.mxu0 %v1352
  %1548 = vmatprep.subr.bf16.mxu0 %v1356
  %1549 = vmatpush1.bf16.msra.mxu0 %v1355
  %1550 = vmatprep.subr.bf16.mxu0 %v1359
  %1551 = vmatpush1.bf16.msra.mxu0 %v1358
  %1552 = vmatprep.subr.bf16.mxu0 %v1362
  %1553 = vmatpush1.bf16.msra.mxu0 %v1361
  %1554 = vmatprep.subr.bf16.mxu0 %v1365
  %1555 = vmatpush1.bf16.msra.mxu0 %v1364
  %1556 = vmatprep.subr.bf16.mxu0 %v1368
  %1557 = vmatpush1.bf16.msra.mxu0 %v1367
  %1558 = vmatprep.subr.bf16.mxu0 %v1371
  %1559 = vmatpush1.bf16.msra.mxu0 %v1370
  %1560 = vmatprep.subr.bf16.mxu0 %v1374
  %1561 = vmatpush1.bf16.msra.mxu0 %v1373
  %1562 = vmatprep.subr.bf16.mxu0 %v1377
  %1563 = vmatpush1.bf16.msra.mxu0 %v1376
  %1564 = vmatprep.subr.bf16.mxu0 %v1380
  %1565 = vmatpush1.bf16.msra.mxu0 %v1379
  %1566 = vmatprep.subr.bf16.mxu0 %v1383
  %1567 = vmatpush1.bf16.msra.mxu0 %v1382
  %1568 = vmatprep.subr.bf16.mxu0 %v1386
  %1569 = vmatpush1.bf16.msra.mxu0 %v1385
  %1570 = vmatprep.subr.bf16.mxu0 %v1389
  %1571 = vmatpush1.bf16.msra.mxu0 %v1388
  %1572 = vmatprep.subr.bf16.mxu0 %v1496
  %1573 = vmatpush1.bf16.msra.mxu0 %v1493
  %1574 = vmatprep.mubr.bf16.mxu0 %v1489
  %1575 = vmatmul.mubr.bf16.gmra.mrb[0].mxu0 %v838
  %v1576 = vpop.f32.mrb[0].mxu0
  %v1577 = vadd.f32 %v1536, %v1576
  %v1578 = vpop.f32.mrb[0].mxu0
  %v1579 = vadd.f32 %v1538, %v1578
  %v1580 = vpop.f32.mrb[0].mxu0
  %v1581 = vpop.f32.mrb[0].mxu0
  %1582 = vdwg.mxu0
  %1583 = vmatprep.subr.bf16.mxu0 0
  %1584 = vmatpush1.bf16.msra.mxu0 %v1300
  %1585 = vmatprep.subr.bf16.mxu0 0
  %1586 = vmatpush1.bf16.msra.mxu0 %v1303
  %1587 = vmatprep.subr.bf16.mxu0 0
  %1588 = vmatpush1.bf16.msra.mxu0 %v1306
  %1589 = vmatprep.subr.bf16.mxu0 0
  %1590 = vmatpush1.bf16.msra.mxu0 %v1309
  %1591 = vmatprep.subr.bf16.mxu0 0
  %1592 = vmatpush1.bf16.msra.mxu0 %v1312
  %1593 = vmatprep.subr.bf16.mxu0 0
  %1594 = vmatpush1.bf16.msra.mxu0 %v1315
  %1595 = vmatprep.subr.bf16.mxu0 0
  %1596 = vmatpush1.bf16.msra.mxu0 %v1318
  %1597 = vmatprep.subr.bf16.mxu0 0
  %1598 = vmatpush1.bf16.msra.mxu0 %v1321
  %1599 = vmatprep.subr.bf16.mxu0 0
  %1600 = vmatpush1.bf16.msra.mxu0 %v1324
  %1601 = vmatprep.subr.bf16.mxu0 0
  %1602 = vmatpush1.bf16.msra.mxu0 %v1327
  %1603 = vmatprep.subr.bf16.mxu0 0
  %1604 = vmatpush1.bf16.msra.mxu0 %v1330
  %1605 = vmatprep.subr.bf16.mxu0 0
  %1606 = vmatpush1.bf16.msra.mxu0 %v1333
  %1607 = vmatprep.subr.bf16.mxu0 0
  %1608 = vmatpush1.bf16.msra.mxu0 %v1336
  %1609 = vmatprep.subr.bf16.mxu0 0
  %1610 = vmatpush1.bf16.msra.mxu0 %v1339
  %1611 = vmatprep.subr.bf16.mxu0 0
  %1612 = vmatpush1.bf16.msra.mxu0 %v1342
  %1613 = vmatprep.subr.bf16.mxu0 0
  %1614 = vmatpush1.bf16.msra.mxu0 %v1345
  %1615 = vmatprep.mubr.bf16.mxu0 %v837
  %1616 = vmatmul.mubr.bf16.gmra.mrb[0].mxu0 %v836
  %v1617 = vpop.f32.mrb[0].mxu0
  %v1618 = vadd.f32 %v979, %v1617
  %v1619 = vpop.f32.mrb[0].mxu0
  %v1620 = vpop.f32.mrb[0].mxu0
  %v1621 = vpop.f32.mrb[0].mxu0
  %1622 = vdwg.mxu0
  %1623 = vmatprep.subr.bf16.mxu0 0
  %1624 = vmatpush1.bf16.msra.mxu0 %v1348
  %1625 = vmatprep.subr.bf16.mxu0 0
  %1626 = vmatpush1.bf16.msra.mxu0 %v1351
  %1627 = vmatprep.subr.bf16.mxu0 0
  %1628 = vmatpush1.bf16.msra.mxu0 %v1354
  %1629 = vmatprep.subr.bf16.mxu0 0
  %1630 = vmatpush1.bf16.msra.mxu0 %v1357
  %1631 = vmatprep.subr.bf16.mxu0 0
  %1632 = vmatpush1.bf16.msra.mxu0 %v1360
  %1633 = vmatprep.subr.bf16.mxu0 0
  %1634 = vmatpush1.bf16.msra.mxu0 %v1363
  %1635 = vmatprep.subr.bf16.mxu0 0
  %1636 = vmatpush1.bf16.msra.mxu0 %v1366
  %1637 = vmatprep.subr.bf16.mxu0 0
  %1638 = vmatpush1.bf16.msra.mxu0 %v1369
  %1639 = vmatprep.subr.bf16.mxu0 0
  %1640 = vmatpush1.bf16.msra.mxu0 %v1372
  %1641 = vmatprep.subr.bf16.mxu0 0
  %1642 = vmatpush1.bf16.msra.mxu0 %v1375
  %1643 = vmatprep.subr.bf16.mxu0 0
  %1644 = vmatpush1.bf16.msra.mxu0 %v1378
  %1645 = vmatprep.subr.bf16.mxu0 0
  %1646 = vmatpush1.bf16.msra.mxu0 %v1381
  %1647 = vmatprep.subr.bf16.mxu0 0
  %1648 = vmatpush1.bf16.msra.mxu0 %v1384
  %1649 = vmatprep.subr.bf16.mxu0 0
  %1650 = vmatpush1.bf16.msra.mxu0 %v1387
  %1651 = vmatprep.subr.bf16.mxu0 0
  %1652 = vmatpush1.bf16.msra.mxu0 %v1390
  %1653 = vmatprep.subr.bf16.mxu0 0
  %1654 = vmatpush1.bf16.msra.mxu0 %v1499
  %1655 = vmatprep.mubr.bf16.mxu0 %v1489
  %1656 = vmatmul.mubr.bf16.gmra.mrb[0].mxu0 %v838
  %v1657 = vpop.f32.mrb[0].mxu0
  %v1658 = vadd.f32 %v1618, %v1657
  %v1659 = vpop.f32.mrb[0].mxu0
  %v1660 = vpop.f32.mrb[0].mxu0
  %v1661 = vpop.f32.mrb[0].mxu0
  %1662 = vdwg.mxu0
  %v1663 = vmax.f32 %v1577, 0.0
  %v1664 = vmax.f32 %v1579, 0.0
  %v1665 = vmax.f32 %v1658, 0.0
  %v1666 = vpack.c.bf16 %v1663, %v1663
  %v1667 = vpack.c.bf16 %v1664, %v1664
  %v1668 = vpack.c.bf16 %v1665, %v1665
  %v1669 = vld [vmem:[%s5] sm:$0xf]
  %v1670 = vld [vmem:[%s5 + $0x4] sm:$0xf]
  %v1671 = vld [vmem:[%s5 + $0x8] sm:$0xf]
  %v1672 = vld [vmem:[%s5 + $0xc] sm:$0xf]
  %v1673 = vld [vmem:[%s5 + $0x10] sm:$0xf]
  %v1674 = vld [vmem:[%s5 + $0x14] sm:$0xf]
  %v1675 = vld [vmem:[%s5 + $0x18] sm:$0xf]
  %v1676 = vld [vmem:[%s5 + $0x1c] sm:$0xf]
  %v1677 = vld [vmem:[%s5 + $0x20] sm:$0xf]
  %v1678 = vld [vmem:[%s5 + $0x24] sm:$0xf]
  %v1679 = vld [vmem:[%s5 + $0x28] sm:$0xf]
  %v1680 = vld [vmem:[%s5 + $0x2c] sm:$0xf]
  %v1681 = vld [vmem:[%s5 + $0x30] sm:$0xf]
  %v1682 = vld [vmem:[%s5 + $0x34] sm:$0xf]
  %v1683 = vld [vmem:[%s5 + $0x38] sm:$0xf]
  %v1684 = vld [vmem:[%s5 + $0x3c] sm:$0xf]
  %v1685 = vld [vmem:[%s5 + $0x40] sm:$0xf]
  %v1686 = vld [vmem:[%s5 + $0x44] sm:$0xf]
  %v1687 = vld [vmem:[%s5 + $0x48] sm:$0xf]
  %v1688 = vld [vmem:[%s5 + $0x4c] sm:$0xf]
  %v1689 = vld [vmem:[%s5 + $0x50] sm:$0xf]
  %v1690 = vld [vmem:[%s5 + $0x54] sm:$0xf]
  %v1691 = vld [vmem:[%s5 + $0x58] sm:$0xf]
  %v1692 = vld [vmem:[%s5 + $0x5c] sm:$0xf]
  %v1693 = vld [vmem:[%s5 + $0x60] sm:$0xf]
  %v1694 = vld [vmem:[%s5 + $0x64] sm:$0xf]
  %v1695 = vld [vmem:[%s5 + $0x68] sm:$0xf]
  %v1696 = vld [vmem:[%s5 + $0x6c] sm:$0xf]
  %v1697 = vld [vmem:[%s5 + $0x70] sm:$0xf]
  %v1698 = vld [vmem:[%s5 + $0x74] sm:$0xf]
  %v1699 = vld [vmem:[%s5 + $0x78] sm:$0xf]
  %v1700 = vld [vmem:[%s5 + $0x7c] sm:$0xf]
  %v1701 = vld [vmem:[%s5 + $0x80] sm:$0xf]
  %v1702 = vld [vmem:[%s5 + $0x84] sm:$0xf]
  %v1703 = vld [vmem:[%s5 + $0x88] sm:$0xf]
  %v1704 = vld [vmem:[%s5 + $0x8c] sm:$0xf]
  %v1705 = vld [vmem:[%s5 + $0x90] sm:$0xf]
  %v1706 = vld [vmem:[%s5 + $0x94] sm:$0x3]
  %v1707 = vld [vmem:[%s6] sm:$0x1]
  %v1709 = vlaneseq
  %v1710 = vshrl.u32 %v1709, 7
  %v1711 = vsub.s32 0, %v1710
  %v1712 = vrot.slane %v1707, %v1711
  %v1752 = vunpack.c.l.b16 %v1669
  %v1753 = vunpack.c.l.b16 %v1670
  %v1754 = vunpack.c.l.b16 %v1671
  %v1755 = vunpack.c.l.b16 %v1672
  %v1756 = vunpack.c.l.b16 %v1673
  %v1757 = vunpack.c.l.b16 %v1674
  %v1758 = vunpack.c.l.b16 %v1675
  %v1759 = vunpack.c.l.b16 %v1676
  %v1760 = vunpack.c.l.b16 %v1677
  %v1761 = vunpack.c.l.b16 %v1678
  %v1762 = vunpack.c.l.b16 %v1679
  %v1763 = vunpack.c.l.b16 %v1680
  %v1764 = vunpack.c.l.b16 %v1681
  %v1765 = vunpack.c.l.b16 %v1682
  %v1766 = vunpack.c.l.b16 %v1683
  %v1767 = vunpack.c.l.b16 %v1684
  %v1768 = vunpack.c.l.b16 %v1685
  %v1769 = vunpack.c.l.b16 %v1686
  %v1770 = vunpack.c.l.b16 %v1687
  %v1771 = vunpack.c.l.b16 %v1688
  %v1772 = vunpack.c.l.b16 %v1689
  %v1773 = vunpack.c.l.b16 %v1690
  %v1774 = vunpack.c.l.b16 %v1691
  %v1775 = vunpack.c.l.b16 %v1692
  %v1776 = vunpack.c.l.b16 %v1693
  %v1777 = vunpack.c.l.b16 %v1694
  %v1778 = vunpack.c.l.b16 %v1695
  %v1779 = vunpack.c.l.b16 %v1696
  %v1780 = vunpack.c.l.b16 %v1697
  %v1781 = vunpack.c.l.b16 %v1698
  %v1782 = vunpack.c.l.b16 %v1699
  %v1783 = vunpack.c.l.b16 %v1700
  %v1784 = vunpack.c.l.b16 %v1701
  %v1785 = vunpack.c.l.b16 %v1702
  %v1786 = vunpack.c.l.b16 %v1703
  %v1787 = vunpack.c.l.b16 %v1704
  %v1788 = vunpack.c.l.b16 %v1705
  %v1789 = vunpack.c.l.b16 %v1706
  %v1790 = vpack.c.b16 %v1753, %v1752
  %v1791 = vpack.c.b16 %v1755, %v1754
  %v1792 = vpack.c.b16 %v1757, %v1756
  %v1793 = vpack.c.b16 %v1759, %v1758
  %v1794 = vpack.c.b16 %v1761, %v1760
  %v1795 = vpack.c.b16 %v1763, %v1762
  %v1796 = vpack.c.b16 %v1765, %v1764
  %v1797 = vpack.c.b16 %v1767, %v1766
  %v1798 = vpack.c.b16 %v1769, %v1768
  %v1799 = vpack.c.b16 %v1771, %v1770
  %v1800 = vpack.c.b16 %v1773, %v1772
  %v1801 = vpack.c.b16 %v1775, %v1774
  %v1802 = vpack.c.b16 %v1777, %v1776
  %v1803 = vpack.c.b16 %v1779, %v1778
  %v1804 = vpack.c.b16 %v1781, %v1780
  %v1805 = vpack.c.b16 %v1783, %v1782
  %v1806 = vpack.c.b16 %v1785, %v1784
  %v1807 = vpack.c.b16 %v1787, %v1786
  %v1808 = vpack.c.b16 %v1789, %v1788
  %vm1827 = vcmask 359424
  %v1829 = vsel %vm1827, %v1668, 0
  %vm1831 = vcmask 1045504
  %v1833 = vsel %vm1831, %v1808, 0
  %1835 = vmatprep.subr.bf16.mxu0 0
  %1836 = vmatpush1.bf16.msra.mxu0 %v1790
  %1837 = vmatprep.subr.bf16.mxu0 0
  %1838 = vmatpush1.bf16.msra.mxu0 %v1791
  %1839 = vmatprep.subr.bf16.mxu0 0
  %1840 = vmatpush1.bf16.msra.mxu0 %v1792
  %1841 = vmatprep.subr.bf16.mxu0 0
  %1842 = vmatpush1.bf16.msra.mxu0 %v1793
  %1843 = vmatprep.subr.bf16.mxu0 0
  %1844 = vmatpush1.bf16.msra.mxu0 %v1794
  %1845 = vmatprep.subr.bf16.mxu0 0
  %1846 = vmatpush1.bf16.msra.mxu0 %v1795
  %1847 = vmatprep.subr.bf16.mxu0 0
  %1848 = vmatpush1.bf16.msra.mxu0 %v1796
  %1849 = vmatprep.subr.bf16.mxu0 0
  %1850 = vmatpush1.bf16.msra.mxu0 %v1797
  %1851 = vmatprep.subr.bf16.mxu0 0
  %1852 = vmatpush1.bf16.msra.mxu0 %v1798
  %1853 = vmatprep.subr.bf16.mxu0 0
  %1854 = vmatpush1.bf16.msra.mxu0 %v1799
  %1855 = vmatprep.subr.bf16.mxu0 0
  %1856 = vmatpush1.bf16.msra.mxu0 %v1800
  %1857 = vmatprep.subr.bf16.mxu0 0
  %1858 = vmatpush1.bf16.msra.mxu0 %v1801
  %1859 = vmatprep.subr.bf16.mxu0 0
  %1860 = vmatpush1.bf16.msra.mxu0 %v1802
  %1861 = vmatprep.subr.bf16.mxu0 0
  %1862 = vmatpush1.bf16.msra.mxu0 %v1803
  %1863 = vmatprep.subr.bf16.mxu0 0
  %1864 = vmatpush1.bf16.msra.mxu0 %v1804
  %1865 = vmatprep.subr.bf16.mxu0 0
  %1866 = vmatpush1.bf16.msra.mxu0 %v1805
  %1867 = vmatprep.mubr.bf16.mxu0 %v1667
  %1868 = vmatmul.mubr.bf16.gmra.mrb[0].mxu0 %v1666
  %v1869 = vpop.f32.mrb[0].mxu0
  %v1870 = vadd.f32 %v1712, %v1869
  %v1871 = vpop.f32.mrb[0].mxu0
  %v1872 = vpop.f32.mrb[0].mxu0
  %v1873 = vpop.f32.mrb[0].mxu0
  %1874 = vdwg.mxu0
  %1875 = vmatprep.subr.bf16.mxu0 0
  %1876 = vmatpush1.bf16.msra.mxu0 %v1806
  %1877 = vmatprep.subr.bf16.mxu0 0
  %1878 = vmatpush1.bf16.msra.mxu0 %v1807
  %1879 = vmatprep.subr.bf16.mxu0 0
  %1880 = vmatpush1.bf16.msra.mxu0 %v1833
  %1881 = vmatprep.subr.bf16.mxu0 0
  %1882 = vmatpush1.bf16.msra.mxu0 0
  %1883 = vmatprep.subr.bf16.mxu0 0
  %1884 = vmatpush1.bf16.msra.mxu0 0
  %1885 = vmatprep.subr.bf16.mxu0 0
  %1886 = vmatpush1.bf16.msra.mxu0 0
  %1887 = vmatprep.subr.bf16.mxu0 0
  %1888 = vmatpush1.bf16.msra.mxu0 0
  %1889 = vmatprep.subr.bf16.mxu0 0
  %1890 = vmatpush1.bf16.msra.mxu0 0
  %1891 = vmatprep.subr.bf16.mxu0 0
  %1892 = vmatpush1.bf16.msra.mxu0 0
  %1893 = vmatprep.subr.bf16.mxu0 0
  %1894 = vmatpush1.bf16.msra.mxu0 0
  %1895 = vmatprep.subr.bf16.mxu0 0
  %1896 = vmatpush1.bf16.msra.mxu0 0
  %1897 = vmatprep.subr.bf16.mxu0 0
  %1898 = vmatpush1.bf16.msra.mxu0 0
  %1899 = vmatprep.subr.bf16.mxu0 0
  %1900 = vmatpush1.bf16.msra.mxu0 0
  %1901 = vmatprep.subr.bf16.mxu0 0
  %1902 = vmatpush1.bf16.msra.mxu0 0
  %1903 = vmatprep.subr.bf16.mxu0 0
  %1904 = vmatpush1.bf16.msra.mxu0 0
  %1905 = vmatprep.subr.bf16.mxu0 0
  %1906 = vmatpush1.bf16.msra.mxu0 0
  %1907 = vmatprep.mubr.bf16.mxu0 0
  %1908 = vmatmul.mubr.bf16.gmra.mrb[0].mxu0 %v1829
  %v1909 = vpop.f32.mrb[0].mxu0
  %v1910 = vadd.f32 %v1870, %v1909
  %v1911 = vpop.f32.mrb[0].mxu0
  %v1912 = vpop.f32.mrb[0].mxu0
  %v1913 = vpop.f32.mrb[0].mxu0
  %1914 = vdwg.mxu0
  %vm1915 = vcmask 818176
  %1916 = vst.msk [vmem:[%s7] sm:$0xff] %vm1915, %v1910
  // Predicated region
  $region30: #{_lambda_.5} parent=0 // pred_check
    _
  $region31: #{_lambda_.5} parent=0 // pred_check_branch
    %1918 = sbr.rel (0) target = $region33
  $region32: #{_lambda_.5} parent=0 // pred_region
    _
  $region33: #{_lambda_.5} parent=0 // pred_fallthru
    _
  // Predicated region
  $region34: #{_lambda_.5} parent=0 // pred_check
    _
  $region35: #{_lambda_.5} parent=0 // pred_check_branch
    %1920 = sbr.rel (0) target = $region37
  $region36: #{_lambda_.5} parent=0 // pred_region
    _
  $region37: #{_lambda_.5} parent=0 // pred_fallthru
    _

</llo_original>
